<compile_context>
chip_gen: v6e
topology: v6e:2x2x1
jax: 0.10.0
libtpu: 0.0.40
codegen_flags: <defaults>
</compile_context>

<pallas_src>
import functools
import math

import jax
import jax.numpy as jnp
import numpy as np
from jax.experimental import pallas as pl
from jax.experimental.pallas import tpu as pltpu


# ----------------------------- padding helpers -----------------------------

def _round_up(x, m):
    return ((x + m - 1) // m) * m


def _pad2(a, rows, cols):
    a = np.asarray(a, np.float64)
    out = np.zeros((rows, cols), np.float32)
    out[: a.shape[0], : a.shape[1]] = a
    return out


# ----------------------------- fused whole-model kernel -----------------------------

def _thnn_ab_kernel(
    emb_ref,
    hm_ref, ht_ref, a1_ref, invfe_ref, invne_ref, slog_ref, invcnt_ref, logdeg_ref,
    w1cat_ref, b1cat_ref, w1b_ref, b1b_ref, w1q_ref, b1q_ref,
    w2cat_ref, b2cat_ref, w2b_ref, b2b_ref, w2q_ref, b2q_ref,
    wc_ref, bc_ref,
    o_ref,
    *, rp, hp, dp,
):
    f32 = jnp.float32
    hm = hm_ref[...]            # (N, E)  incidence
    ht = ht_ref[...]            # (E, N)  incidence^T
    a1 = a1_ref[...]            # (N, E)  Hm * deg_i^(1/|e|) / (|e|-1)!
    invfe = invfe_ref[...]      # (E, 1)  1/(|e|-1)!
    invne = invne_ref[...]      # (E, 1)  1/|e|
    slog = slog_ref[...]        # (E, 1)  sum over members j of log(deg_j)/|e|
    inv_cnt = invcnt_ref[...]   # (N, 1)  1/deg_i  (0 for isolated / padded nodes)
    logdeg = logdeg_ref[...]    # (N, 1)  log(deg_i)
    has_edge = (inv_cnt > 0.0).astype(f32)

    def layer(emb, wcat, bcat, w2b, b2b, wq, bq):
        # --- p / p2 first stages as ONE 256-lane matmul (ones-column folded into biases) ---
        comb = jnp.dot(emb, wcat, preferred_element_type=f32) + bcat      # (N, RP+HP)
        emb_new = comb[:, :rp]                                            # (N, RP)  p-network
        h = jnp.maximum(comb[:, rp:], 0.0)                                # (N, HP)
        emb_new2 = jnp.dot(h, w2b, preferred_element_type=f32) + b2b      # (N, DP)  p2-network

        iszero = emb_new == 0.0
        z = iszero.astype(f32)                                            # (N, RP)
        neg = (emb_new < 0.0).astype(f32)                                 # (N, RP)
        logabs = jnp.log(jnp.where(iszero, 1.0, jnp.abs(emb_new)))        # 0 at zeros
        zlogdeg = logdeg * z                                              # (N, RP)

        # --- ONE wide (E,N)x(N,DP+4RP) matmul: whole per-edge aggregation group ---
        ehat = jnp.dot(ht, jnp.concatenate([emb_new2, z, neg, logabs, zlogdeg], axis=1),
                       preferred_element_type=f32)                        # (E, DP+4RP)
        relu_sum2 = jnp.maximum(ehat[:, :dp], 0.0)                        # relu of member p2 sums
        zcnt = ehat[:, dp:dp + rp]                                        # # zero members
        negcnt = ehat[:, dp + rp:dp + 2 * rp]                             # # negative members
        logp = (ehat[:, dp + 2 * rp:dp + 3 * rp] + slog
                - invne * ehat[:, dp + 3 * rp:dp + 4 * rp])               # log-prod, nonzero members
        parity = negcnt - 2.0 * jnp.floor(0.5 * negcnt)
        psigned = (1.0 - 2.0 * parity) * jnp.exp(logp)                    # signed product

        # own factor nonzero -> no other member may be zero; own factor zero -> only zero
        b0 = jnp.where(zcnt < 0.5, psigned, 0.0) * invfe                  # (E, RP)
        b1 = jnp.where((zcnt > 0.5) & (zcnt < 1.5), psigned, 0.0)         # (E, RP)

        # --- ONE (N,E)x(E,DP+RP) matmul scatters edge sums + masked products to nodes ---
        nacc = jnp.dot(hm, jnp.concatenate([relu_sum2, b0], axis=1),
                       preferred_element_type=f32)                        # (N, DP+RP)
        edge_term = nacc[:, :dp]
        t0 = nacc[:, dp:]
        t1 = jnp.dot(a1, b1, preferred_element_type=f32)                  # own-zero branch
        safe = jnp.where(iszero, 1.0, emb_new)
        # divide-out of the own factor; exact zeros handled by the b0/b1 split.
        weighted = jnp.where(iszero, t1, t0 * pl.reciprocal(safe, approx=False))
        q_term = jnp.dot(weighted, wq, preferred_element_type=f32)        # (N, DP)
        return jnp.maximum(inv_cnt * (q_term + edge_term) + has_edge * bq, 0.0)

    x1 = layer(emb_ref[...], w1cat_ref[...], b1cat_ref[...], w1b_ref[...], b1b_ref[...],
               w1q_ref[...], b1q_ref[...])
    # Inter-layer F.relu is a no-op (x1 >= 0); dropout = identity (inference).
    x2 = layer(x1, w2cat_ref[...], b2cat_ref[...], w2b_ref[...], b2b_ref[...],
               w2q_ref[...], b2q_ref[...])
    o_ref[...] = jnp.dot(x2, wc_ref[...], preferred_element_type=f32) + bc_ref[...]


def thnn_ab_pallas(emb_p, graph, params):
    m1, m2 = params["model1"], params["model2"]
    hp = m1["Wp2b"].shape[0]
    dp = m1["Wp2b"].shape[1]
    rp = m1["Wcat"].shape[1] - hp
    args = [emb_p,
            graph["Hm"], graph["Ht"], graph["A1"], graph["invfact"], graph["inv_ne"],
            graph["slog"], graph["inv_cnt"], graph["logdeg"],
            m1["Wcat"], m1["bcat"], m1["Wp2b"], m1["bp2b"], m1["WqT"], m1["bq"],
            m2["Wcat"], m2["bcat"], m2["Wp2b"], m2["bp2b"], m2["WqT"], m2["bq"],
            params["Wc"], params["bc"]]
    n_p = emb_p.shape[0]
    e_p = graph["Hm"].shape[1]
    c_p = params["Wc"].shape[1]

    # VMEM budget from the actual padded footprint (inputs + output + main temporaries),
    # with margin, capped below the v7x 64 MiB per-TC physical VMEM.
    in_bytes = sum(int(np.prod(a.shape)) * 4 for a in args)
    tmp_bytes = 4 * (2 * (n_p + e_p) * (dp + 4 * rp) + 8 * e_p * rp
                     + (n_p + e_p) * (dp + rp) + 8 * n_p * rp + 4 * n_p * dp)
    vmem_limit = int(min(max(4 * (in_bytes + n_p * c_p * 4 + tmp_bytes), 16 << 20), 60 << 20))

    return pl.pallas_call(
        functools.partial(_thnn_ab_kernel, rp=rp, hp=hp, dp=dp),
        out_shape=jax.ShapeDtypeStruct((n_p, c_p), jnp.float32),
        in_specs=[pl.BlockSpec(memory_space=pltpu.MemorySpace.VMEM)] * len(args),
        out_specs=pl.BlockSpec(memory_space=pltpu.MemorySpace.VMEM),
        compiler_params=pltpu.CompilerParams(vmem_limit_bytes=vmem_limit),
    )(*args)


# ----------------------------- host-side precompute -----------------------------

def build_graph(H_np, n_pad, e_pad):
    """Graph-structural constants (padded, f32). Only 3 dense N x E arrays."""
    H = np.asarray(H_np, np.float64)
    deg = H.sum(axis=1)                                       # node degrees |N(i)|
    ne = H.sum(axis=0)                                        # edge orders  |e|
    inv_ne = np.where(ne > 0, 1.0 / np.maximum(ne, 1.0), 0.0)
    logdeg = np.where(deg > 0, np.log(np.maximum(deg, 1.0)), 0.0)
    scale = np.power(deg[:, None], inv_ne[None, :])           # deg_i ^ (1/|e|)
    invfact = np.array(
        [1.0 / math.factorial(int(k) - 1) if k >= 1 else 0.0 for k in ne], np.float64)
    A1 = H * scale * invfact[None, :]                         # Hm * deg^(1/|e|) / (|e|-1)!
    slog = (inv_ne * (H.T @ logdeg))[:, None]                 # (E,1) sum of member scale-logs
    inv_cnt = np.where(deg > 0, 1.0 / np.maximum(deg, 1.0), 0.0)[:, None]
    return {
        "Hm": jnp.asarray(_pad2(H, n_pad, e_pad)),
        "Ht": jnp.asarray(_pad2(H.T, e_pad, n_pad)),
        "A1": jnp.asarray(_pad2(A1, n_pad, e_pad)),
        "invfact": jnp.asarray(_pad2(invfact[:, None], e_pad, 1)),
        "inv_ne": jnp.asarray(_pad2(inv_ne[:, None], e_pad, 1)),
        "slog": jnp.asarray(_pad2(slog, e_pad, 1)),
        "inv_cnt": jnp.asarray(_pad2(inv_cnt, n_pad, 1)),
        "logdeg": jnp.asarray(_pad2(logdeg[:, None], n_pad, 1)),
    }


def init_layer_params(key, featdim, hiddendim, outputdim, rank):
    k = jax.random.split(key, 6)
    std_p = math.sqrt(1.0 / (featdim + 1))      # matches nn.init.normal_ on p_network
    return {
        "Wp":   std_p * jax.random.normal(k[0], (featdim + 1, rank), jnp.float32),
        "bp":   jnp.zeros((1, rank), jnp.float32),
        "WqT":  0.1 * jax.random.normal(k[1], (rank, outputdim), jnp.float32),
        "bq":   0.01 * jax.random.normal(k[2], (1, outputdim), jnp.float32),
        "Wp2a": 0.1 * jax.random.normal(k[3], (featdim + 1, hiddendim), jnp.float32),
        "bp2a": jnp.zeros((1, hiddendim), jnp.float32),
        "Wp2b": 0.1 * jax.random.normal(k[4], (hiddendim, outputdim), jnp.float32),
        "bp2b": 0.01 * jax.random.normal(k[5], (1, outputdim), jnp.float32),
    }


def prepare_layer_params(raw, featdim, kp, rp, hp, dp):
    """Fold the ones-row into the biases, concat [Wp | Wp2a], zero-pad to TPU-friendly sizes."""
    wp = np.asarray(raw["Wp"], np.float64)
    bp = np.asarray(raw["bp"], np.float64) + wp[featdim:featdim + 1, :]
    w2a = np.asarray(raw["Wp2a"], np.float64)
    b2a = np.asarray(raw["bp2a"], np.float64) + w2a[featdim:featdim + 1, :]
    wcat = np.zeros((kp, rp + hp), np.float32)
    wcat[:featdim, :wp.shape[1]] = wp[:featdim, :]
    wcat[:featdim, rp:rp + w2a.shape[1]] = w2a[:featdim, :]
    bcat = np.zeros((1, rp + hp), np.float32)
    bcat[0, :bp.shape[1]] = bp[0]
    bcat[0, rp:rp + b2a.shape[1]] = b2a[0]
    return {
        "Wcat": jnp.asarray(wcat),
        "bcat": jnp.asarray(bcat),
        "Wp2b": jnp.asarray(_pad2(np.asarray(raw["Wp2b"]), hp, dp)),
        "bp2b": jnp.asarray(_pad2(np.asarray(raw["bp2b"]), 1, dp)),
        "WqT":  jnp.asarray(_pad2(np.asarray(raw["WqT"]), rp, dp)),
        "bq":   jnp.asarray(_pad2(np.asarray(raw["bq"]), 1, dp)),
    }


# ----------------------------- forward -----------------------------

@jax.jit
def thnn_ab_forward(emb, graph, params):
    mean = jnp.mean(emb)
    std = jnp.std(emb, ddof=1)                  # torch.std is unbiased
    embn = (emb - mean) / std
    n, f = emb.shape
    n_p = graph["Hm"].shape[0]
    k_p = params["model1"]["Wcat"].shape[0]
    emb_p = jnp.pad(embn.astype(jnp.float32), ((0, n_p - n), (0, k_p - f)))
    return thnn_ab_pallas(emb_p, graph, params)


# ----------------------------- numpy reference -----------------------------

def reference_layer(emb, H, p, rank):
    N, _ = H.shape
    emb_aug = np.concatenate([emb, np.ones((N, 1), np.float32)], axis=1)
    emb_new = emb_aug @ p["Wp"] + p["bp"]
    h = np.maximum(emb_aug @ p["Wp2a"] + p["bp2a"], 0.0)
    emb_new2 = h @ p["Wp2b"] + p["bp2b"]
    deg = H.sum(1)
    out_rows = []
    for i in range(N):
        rows1, rows2 = [], []
        for e in np.where(H[i] > 0)[0]:
            nodes_e = np.where(H[:, e] > 0)[0]
            nn = len(nodes_e)
            edge_emb = np.ones(rank, np.float32)
            edge_emb2 = np.zeros(emb_new2.shape[1], np.float32)
            for j in nodes_e:
                if j != i:
                    edge_emb = edge_emb * ((deg[j] ** (1.0 / nn)) * emb_new[j])
                edge_emb2 = edge_emb2 + emb_new2[j]
            rows1.append((1.0 / math.factorial(nn - 1)) * (deg[i] ** (1.0 / nn)) * edge_emb)
            rows2.append(edge_emb2)
        rows1, rows2 = np.stack(rows1), np.stack(rows2)
        q_out = rows1 @ p["WqT"] + p["bq"]
        out_rows.append((q_out + np.maximum(rows2, 0.0)).mean(0))
    return np.maximum(np.stack(out_rows), 0.0)


def reference_forward(emb, H, params, rank):
    emb = (emb - emb.mean()) / emb.std(ddof=1)
    x = reference_layer(emb.astype(np.float32), H, params["model1"], rank)
    x = np.maximum(x, 0.0)
    x = reference_layer(x.astype(np.float32), H, params["model2"], rank)
    return x @ params["Wc"] + params["bc"]


# ----------------------------- main -----------------------------

if __name__ == "__main__":
    featdim, hiddendim, outputdim, n_class, rank = 16, 32, 32, 4, 20
    n_nodes = 10
    edges = [[0, 1, 2], [2, 3, 4], [4, 5], [5, 6, 7, 8], [8, 9, 0], [1, 3, 6, 9]]
    n_edges = len(edges)
    H_np = np.zeros((n_nodes, n_edges), np.float32)
    for e, members in enumerate(edges):
        for v in members:
            H_np[v, e] = 1.0

    # padded sizes (lane-dense feature dims, sublane-aligned node dim)
    NP = _round_up(n_nodes, 8)
    EP = _round_up(n_edges, 128)
    KP1 = _round_up(featdim, 128)
    RP = _round_up(rank, 128)
    HP = _round_up(hiddendim, 128)
    DP = _round_up(hiddendim, 128)     # layer output dim == hiddendim in THNN_ab
    CP = _round_up(n_class, 128)

    graph = build_graph(H_np, NP, EP)

    key = jax.random.PRNGKey(0)
    k_emb, k1, k2, kc = jax.random.split(key, 4)
    embedding = jax.random.normal(k_emb, (n_nodes, featdim), jnp.float32)
    raw_params = {
        "model1": init_layer_params(k1, featdim, hiddendim, hiddendim, rank),
        "model2": init_layer_params(k2, outputdim, hiddendim, hiddendim, rank),
        "Wc": 0.1 * jax.random.normal(kc, (hiddendim, n_class), jnp.float32),
        "bc": jnp.zeros((1, n_class), jnp.float32),
    }
    params_pal = {
        "model1": prepare_layer_params(raw_params["model1"], featdim, KP1, RP, HP, DP),
        "model2": prepare_layer_params(raw_params["model2"], outputdim, DP, RP, HP, DP),
        "Wc": jnp.asarray(_pad2(np.asarray(raw_params["Wc"]), DP, CP)),
        "bc": jnp.asarray(_pad2(np.asarray(raw_params["bc"]), 1, CP)),
    }

    out_full = jax.block_until_ready(thnn_ab_forward(embedding, graph, params_pal))
    out = np.asarray(out_full)[:n_nodes, :n_class]

    np_raw = jax.tree_util.tree_map(np.asarray, raw_params)
    ref = reference_forward(np.asarray(embedding), H_np, np_raw, rank)

    assert out.shape == (n_nodes, n_class), out.shape
    max_err = float(np.max(np.abs(out - ref)))
    assert np.allclose(out, ref, rtol=5e-3, atol=5e-3), f"max err {max_err}"
    print("KERNEL_OK")
</pallas_src>

<mosaic_0001>
module attributes {stable_mosaic.version = 11 : i64} {
  func.func @_thnn_ab_kernel(%arg0: memref<16x128xf32, #tpu.memory_space<vmem>>, %arg1: memref<16x128xf32, #tpu.memory_space<vmem>>, %arg2: memref<128x16xf32, #tpu.memory_space<vmem>>, %arg3: memref<16x128xf32, #tpu.memory_space<vmem>>, %arg4: memref<128x1xf32, #tpu.memory_space<vmem>>, %arg5: memref<128x1xf32, #tpu.memory_space<vmem>>, %arg6: memref<128x1xf32, #tpu.memory_space<vmem>>, %arg7: memref<16x1xf32, #tpu.memory_space<vmem>>, %arg8: memref<16x1xf32, #tpu.memory_space<vmem>>, %arg9: memref<128x256xf32, #tpu.memory_space<vmem>>, %arg10: memref<1x256xf32, #tpu.memory_space<vmem>>, %arg11: memref<128x128xf32, #tpu.memory_space<vmem>>, %arg12: memref<1x128xf32, #tpu.memory_space<vmem>>, %arg13: memref<128x128xf32, #tpu.memory_space<vmem>>, %arg14: memref<1x128xf32, #tpu.memory_space<vmem>>, %arg15: memref<128x256xf32, #tpu.memory_space<vmem>>, %arg16: memref<1x256xf32, #tpu.memory_space<vmem>>, %arg17: memref<128x128xf32, #tpu.memory_space<vmem>>, %arg18: memref<1x128xf32, #tpu.memory_space<vmem>>, %arg19: memref<128x128xf32, #tpu.memory_space<vmem>>, %arg20: memref<1x128xf32, #tpu.memory_space<vmem>>, %arg21: memref<128x128xf32, #tpu.memory_space<vmem>>, %arg22: memref<1x128xf32, #tpu.memory_space<vmem>>, %arg23: memref<16x128xf32, #tpu.memory_space<vmem>>) attributes {dimension_semantics = [], scalar_prefetch = 0 : i64, scratch_operands = 0 : i64, tpu.core_type = #tpu.core_type<tc>} {
    %c0 = arith.constant 0 : index
    %c0_0 = arith.constant 0 : index
    %0 = vector.load %arg1[%c0, %c0_0] : memref<16x128xf32, #tpu.memory_space<vmem>>, vector<16x128xf32>
    %c0_1 = arith.constant 0 : index
    %c0_2 = arith.constant 0 : index
    %1 = vector.load %arg2[%c0_1, %c0_2] : memref<128x16xf32, #tpu.memory_space<vmem>>, vector<128x16xf32>
    %c0_3 = arith.constant 0 : index
    %c0_4 = arith.constant 0 : index
    %2 = vector.load %arg3[%c0_3, %c0_4] : memref<16x128xf32, #tpu.memory_space<vmem>>, vector<16x128xf32>
    %c0_5 = arith.constant 0 : index
    %c0_6 = arith.constant 0 : index
    %3 = vector.load %arg4[%c0_5, %c0_6] : memref<128x1xf32, #tpu.memory_space<vmem>>, vector<128x1xf32>
    %c0_7 = arith.constant 0 : index
    %c0_8 = arith.constant 0 : index
    %4 = vector.load %arg5[%c0_7, %c0_8] : memref<128x1xf32, #tpu.memory_space<vmem>>, vector<128x1xf32>
    %c0_9 = arith.constant 0 : index
    %c0_10 = arith.constant 0 : index
    %5 = vector.load %arg6[%c0_9, %c0_10] : memref<128x1xf32, #tpu.memory_space<vmem>>, vector<128x1xf32>
    %c0_11 = arith.constant 0 : index
    %c0_12 = arith.constant 0 : index
    %6 = vector.load %arg7[%c0_11, %c0_12] : memref<16x1xf32, #tpu.memory_space<vmem>>, vector<16x1xf32>
    %c0_13 = arith.constant 0 : index
    %c0_14 = arith.constant 0 : index
    %7 = vector.load %arg8[%c0_13, %c0_14] : memref<16x1xf32, #tpu.memory_space<vmem>>, vector<16x1xf32>
    %cst = arith.constant 0.000000e+00 : f32
    %8 = vector.broadcast %cst : f32 to vector<16x1xf32>
    %9 = arith.cmpf ogt, %6, %8 : vector<16x1xf32>
    %10 = arith.extui %9 : vector<16x1xi1> to vector<16x1xi32>
    %11 = arith.sitofp %10 : vector<16x1xi32> to vector<16x1xf32>
    %c0_15 = arith.constant 0 : index
    %c0_16 = arith.constant 0 : index
    %12 = vector.load %arg0[%c0_15, %c0_16] : memref<16x128xf32, #tpu.memory_space<vmem>>, vector<16x128xf32>
    %c0_17 = arith.constant 0 : index
    %c0_18 = arith.constant 0 : index
    %13 = vector.load %arg9[%c0_17, %c0_18] : memref<128x256xf32, #tpu.memory_space<vmem>>, vector<128x256xf32>
    %c0_19 = arith.constant 0 : index
    %c0_20 = arith.constant 0 : index
    %14 = vector.load %arg10[%c0_19, %c0_20] : memref<1x256xf32, #tpu.memory_space<vmem>>, vector<1x256xf32>
    %c0_21 = arith.constant 0 : index
    %c0_22 = arith.constant 0 : index
    %15 = vector.load %arg11[%c0_21, %c0_22] : memref<128x128xf32, #tpu.memory_space<vmem>>, vector<128x128xf32>
    %c0_23 = arith.constant 0 : index
    %c0_24 = arith.constant 0 : index
    %16 = vector.load %arg12[%c0_23, %c0_24] : memref<1x128xf32, #tpu.memory_space<vmem>>, vector<1x128xf32>
    %c0_25 = arith.constant 0 : index
    %c0_26 = arith.constant 0 : index
    %17 = vector.load %arg13[%c0_25, %c0_26] : memref<128x128xf32, #tpu.memory_space<vmem>>, vector<128x128xf32>
    %c0_27 = arith.constant 0 : index
    %c0_28 = arith.constant 0 : index
    %18 = vector.load %arg14[%c0_27, %c0_28] : memref<1x128xf32, #tpu.memory_space<vmem>>, vector<1x128xf32>
    %cst_29 = arith.constant dense<0.000000e+00> : vector<16x256xf32>
    %19 = tpu.matmul %12, %13, %cst_29 {dimension_numbers = #tpu.dot_dimension_numbers<[1], [0], [0], [1], [0, 0, 1, 1], [], []>} : vector<16x128xf32>, vector<128x256xf32>, vector<16x256xf32> -> vector<16x256xf32>
    %20 = vector.broadcast %14 : vector<1x256xf32> to vector<16x256xf32>
    %21 = arith.addf %19, %20 : vector<16x256xf32>
    %22 = vector.extract_strided_slice %21 {offsets = [0, 0], sizes = [16, 128], strides = [1, 1]} : vector<16x256xf32> to vector<16x128xf32>
    %23 = vector.extract_strided_slice %21 {offsets = [0, 128], sizes = [16, 128], strides = [1, 1]} : vector<16x256xf32> to vector<16x128xf32>
    %cst_30 = arith.constant 0.000000e+00 : f32
    %24 = vector.broadcast %cst_30 : f32 to vector<16x128xf32>
    %25 = arith.maximumf %23, %24 : vector<16x128xf32>
    %cst_31 = arith.constant dense<0.000000e+00> : vector<16x128xf32>
    %26 = tpu.matmul %25, %15, %cst_31 {dimension_numbers = #tpu.dot_dimension_numbers<[1], [0], [0], [1], [0, 0, 1, 1], [], []>} : vector<16x128xf32>, vector<128x128xf32>, vector<16x128xf32> -> vector<16x128xf32>
    %27 = vector.broadcast %16 : vector<1x128xf32> to vector<16x128xf32>
    %28 = arith.addf %26, %27 : vector<16x128xf32>
    %cst_32 = arith.constant 0.000000e+00 : f32
    %29 = vector.broadcast %cst_32 : f32 to vector<16x128xf32>
    %30 = arith.cmpf oeq, %22, %29 : vector<16x128xf32>
    %31 = arith.extui %30 : vector<16x128xi1> to vector<16x128xi32>
    %32 = arith.sitofp %31 : vector<16x128xi32> to vector<16x128xf32>
    %cst_33 = arith.constant 0.000000e+00 : f32
    %33 = vector.broadcast %cst_33 : f32 to vector<16x128xf32>
    %34 = arith.cmpf olt, %22, %33 : vector<16x128xf32>
    %35 = arith.extui %34 : vector<16x128xi1> to vector<16x128xi32>
    %36 = arith.sitofp %35 : vector<16x128xi32> to vector<16x128xf32>
    %37 = math.absf %22 : vector<16x128xf32>
    %cst_34 = arith.constant 1.000000e+00 : f32
    %38 = vector.broadcast %cst_34 : f32 to vector<16x128xf32>
    %39 = arith.select %30, %38, %37 : vector<16x128xi1>, vector<16x128xf32>
    %40 = math.log %39 : vector<16x128xf32>
    %41 = vector.broadcast %7 : vector<16x1xf32> to vector<16x128xf32>
    %42 = arith.mulf %41, %32 : vector<16x128xf32>
    %43 = tpu.concatenate %28, %32, %36, %40, %42 in 1 : vector<16x128xf32>, vector<16x128xf32>, vector<16x128xf32>, vector<16x128xf32>, vector<16x128xf32> -> vector<16x640xf32>
    %cst_35 = arith.constant dense<0.000000e+00> : vector<128x640xf32>
    %44 = tpu.matmul %1, %43, %cst_35 {dimension_numbers = #tpu.dot_dimension_numbers<[1], [0], [0], [1], [0, 0, 1, 1], [], []>} : vector<128x16xf32>, vector<16x640xf32>, vector<128x640xf32> -> vector<128x640xf32>
    %45 = vector.extract_strided_slice %44 {offsets = [0, 0], sizes = [128, 128], strides = [1, 1]} : vector<128x640xf32> to vector<128x128xf32>
    %cst_36 = arith.constant 0.000000e+00 : f32
    %46 = vector.broadcast %cst_36 : f32 to vector<128x128xf32>
    %47 = arith.maximumf %45, %46 : vector<128x128xf32>
    %48 = vector.extract_strided_slice %44 {offsets = [0, 128], sizes = [128, 128], strides = [1, 1]} : vector<128x640xf32> to vector<128x128xf32>
    %49 = vector.extract_strided_slice %44 {offsets = [0, 256], sizes = [128, 128], strides = [1, 1]} : vector<128x640xf32> to vector<128x128xf32>
    %50 = vector.extract_strided_slice %44 {offsets = [0, 384], sizes = [128, 128], strides = [1, 1]} : vector<128x640xf32> to vector<128x128xf32>
    %51 = vector.broadcast %5 : vector<128x1xf32> to vector<128x128xf32>
    %52 = arith.addf %50, %51 : vector<128x128xf32>
    %53 = vector.extract_strided_slice %44 {offsets = [0, 512], sizes = [128, 128], strides = [1, 1]} : vector<128x640xf32> to vector<128x128xf32>
    %54 = vector.broadcast %4 : vector<128x1xf32> to vector<128x128xf32>
    %55 = arith.mulf %54, %53 : vector<128x128xf32>
    %56 = arith.subf %52, %55 : vector<128x128xf32>
    %cst_37 = arith.constant 5.000000e-01 : f32
    %57 = vector.broadcast %cst_37 : f32 to vector<128x128xf32>
    %58 = arith.mulf %57, %49 : vector<128x128xf32>
    %59 = math.floor %58 : vector<128x128xf32>
    %cst_38 = arith.constant 2.000000e+00 : f32
    %60 = vector.broadcast %cst_38 : f32 to vector<128x128xf32>
    %61 = arith.mulf %60, %59 : vector<128x128xf32>
    %62 = arith.subf %49, %61 : vector<128x128xf32>
    %cst_39 = arith.constant 2.000000e+00 : f32
    %63 = vector.broadcast %cst_39 : f32 to vector<128x128xf32>
    %64 = arith.mulf %63, %62 : vector<128x128xf32>
    %cst_40 = arith.constant 1.000000e+00 : f32
    %65 = vector.broadcast %cst_40 : f32 to vector<128x128xf32>
    %66 = arith.subf %65, %64 : vector<128x128xf32>
    %67 = math.exp %56 : vector<128x128xf32>
    %68 = arith.mulf %66, %67 : vector<128x128xf32>
    %cst_41 = arith.constant 5.000000e-01 : f32
    %69 = vector.broadcast %cst_41 : f32 to vector<128x128xf32>
    %70 = arith.cmpf olt, %48, %69 : vector<128x128xf32>
    %cst_42 = arith.constant 0.000000e+00 : f32
    %71 = vector.broadcast %cst_42 : f32 to vector<128x128xf32>
    %72 = arith.select %70, %68, %71 : vector<128x128xi1>, vector<128x128xf32>
    %73 = vector.broadcast %3 : vector<128x1xf32> to vector<128x128xf32>
    %74 = arith.mulf %72, %73 : vector<128x128xf32>
    %cst_43 = arith.constant 5.000000e-01 : f32
    %75 = vector.broadcast %cst_43 : f32 to vector<128x128xf32>
    %76 = arith.cmpf ogt, %48, %75 : vector<128x128xf32>
    %cst_44 = arith.constant 1.500000e+00 : f32
    %77 = vector.broadcast %cst_44 : f32 to vector<128x128xf32>
    %78 = arith.cmpf olt, %48, %77 : vector<128x128xf32>
    %79 = arith.andi %76, %78 : vector<128x128xi1>
    %cst_45 = arith.constant 0.000000e+00 : f32
    %80 = vector.broadcast %cst_45 : f32 to vector<128x128xf32>
    %81 = arith.select %79, %68, %80 : vector<128x128xi1>, vector<128x128xf32>
    %82 = tpu.concatenate %47, %74 in 1 : vector<128x128xf32>, vector<128x128xf32> -> vector<128x256xf32>
    %cst_46 = arith.constant dense<0.000000e+00> : vector<16x256xf32>
    %83 = tpu.matmul %0, %82, %cst_46 {dimension_numbers = #tpu.dot_dimension_numbers<[1], [0], [0], [1], [0, 0, 1, 1], [], []>} : vector<16x128xf32>, vector<128x256xf32>, vector<16x256xf32> -> vector<16x256xf32>
    %84 = vector.extract_strided_slice %83 {offsets = [0, 0], sizes = [16, 128], strides = [1, 1]} : vector<16x256xf32> to vector<16x128xf32>
    %85 = vector.extract_strided_slice %83 {offsets = [0, 128], sizes = [16, 128], strides = [1, 1]} : vector<16x256xf32> to vector<16x128xf32>
    %cst_47 = arith.constant dense<0.000000e+00> : vector<16x128xf32>
    %86 = tpu.matmul %2, %81, %cst_47 {dimension_numbers = #tpu.dot_dimension_numbers<[1], [0], [0], [1], [0, 0, 1, 1], [], []>} : vector<16x128xf32>, vector<128x128xf32>, vector<16x128xf32> -> vector<16x128xf32>
    %cst_48 = arith.constant 1.000000e+00 : f32
    %87 = vector.broadcast %cst_48 : f32 to vector<16x128xf32>
    %88 = arith.select %30, %87, %22 : vector<16x128xi1>, vector<16x128xf32>
    %89 = tpu.reciprocal %88 : vector<16x128xf32> -> vector<16x128xf32>
    %90 = arith.mulf %85, %89 : vector<16x128xf32>
    %91 = arith.select %30, %86, %90 : vector<16x128xi1>, vector<16x128xf32>
    %cst_49 = arith.constant dense<0.000000e+00> : vector<16x128xf32>
    %92 = tpu.matmul %91, %17, %cst_49 {dimension_numbers = #tpu.dot_dimension_numbers<[1], [0], [0], [1], [0, 0, 1, 1], [], []>} : vector<16x128xf32>, vector<128x128xf32>, vector<16x128xf32> -> vector<16x128xf32>
    %93 = arith.addf %92, %84 : vector<16x128xf32>
    %94 = vector.broadcast %6 : vector<16x1xf32> to vector<16x128xf32>
    %95 = arith.mulf %94, %93 : vector<16x128xf32>
    %96 = vector.broadcast %11 : vector<16x1xf32> to vector<16x128xf32>
    %97 = vector.broadcast %18 : vector<1x128xf32> to vector<16x128xf32>
    %98 = arith.mulf %96, %97 : vector<16x128xf32>
    %99 = arith.addf %95, %98 : vector<16x128xf32>
    %cst_50 = arith.constant 0.000000e+00 : f32
    %100 = vector.broadcast %cst_50 : f32 to vector<16x128xf32>
    %101 = arith.maximumf %99, %100 : vector<16x128xf32>
    %c0_51 = arith.constant 0 : index
    %c0_52 = arith.constant 0 : index
    %102 = vector.load %arg15[%c0_51, %c0_52] : memref<128x256xf32, #tpu.memory_space<vmem>>, vector<128x256xf32>
    %c0_53 = arith.constant 0 : index
    %c0_54 = arith.constant 0 : index
    %103 = vector.load %arg16[%c0_53, %c0_54] : memref<1x256xf32, #tpu.memory_space<vmem>>, vector<1x256xf32>
    %c0_55 = arith.constant 0 : index
    %c0_56 = arith.constant 0 : index
    %104 = vector.load %arg17[%c0_55, %c0_56] : memref<128x128xf32, #tpu.memory_space<vmem>>, vector<128x128xf32>
    %c0_57 = arith.constant 0 : index
    %c0_58 = arith.constant 0 : index
    %105 = vector.load %arg18[%c0_57, %c0_58] : memref<1x128xf32, #tpu.memory_space<vmem>>, vector<1x128xf32>
    %c0_59 = arith.constant 0 : index
    %c0_60 = arith.constant 0 : index
    %106 = vector.load %arg19[%c0_59, %c0_60] : memref<128x128xf32, #tpu.memory_space<vmem>>, vector<128x128xf32>
    %c0_61 = arith.constant 0 : index
    %c0_62 = arith.constant 0 : index
    %107 = vector.load %arg20[%c0_61, %c0_62] : memref<1x128xf32, #tpu.memory_space<vmem>>, vector<1x128xf32>
    %cst_63 = arith.constant dense<0.000000e+00> : vector<16x256xf32>
    %108 = tpu.matmul %101, %102, %cst_63 {dimension_numbers = #tpu.dot_dimension_numbers<[1], [0], [0], [1], [0, 0, 1, 1], [], []>} : vector<16x128xf32>, vector<128x256xf32>, vector<16x256xf32> -> vector<16x256xf32>
    %109 = vector.broadcast %103 : vector<1x256xf32> to vector<16x256xf32>
    %110 = arith.addf %108, %109 : vector<16x256xf32>
    %111 = vector.extract_strided_slice %110 {offsets = [0, 0], sizes = [16, 128], strides = [1, 1]} : vector<16x256xf32> to vector<16x128xf32>
    %112 = vector.extract_strided_slice %110 {offsets = [0, 128], sizes = [16, 128], strides = [1, 1]} : vector<16x256xf32> to vector<16x128xf32>
    %cst_64 = arith.constant 0.000000e+00 : f32
    %113 = vector.broadcast %cst_64 : f32 to vector<16x128xf32>
    %114 = arith.maximumf %112, %113 : vector<16x128xf32>
    %cst_65 = arith.constant dense<0.000000e+00> : vector<16x128xf32>
    %115 = tpu.matmul %114, %104, %cst_65 {dimension_numbers = #tpu.dot_dimension_numbers<[1], [0], [0], [1], [0, 0, 1, 1], [], []>} : vector<16x128xf32>, vector<128x128xf32>, vector<16x128xf32> -> vector<16x128xf32>
    %116 = vector.broadcast %105 : vector<1x128xf32> to vector<16x128xf32>
    %117 = arith.addf %115, %116 : vector<16x128xf32>
    %cst_66 = arith.constant 0.000000e+00 : f32
    %118 = vector.broadcast %cst_66 : f32 to vector<16x128xf32>
    %119 = arith.cmpf oeq, %111, %118 : vector<16x128xf32>
    %120 = arith.extui %119 : vector<16x128xi1> to vector<16x128xi32>
    %121 = arith.sitofp %120 : vector<16x128xi32> to vector<16x128xf32>
    %cst_67 = arith.constant 0.000000e+00 : f32
    %122 = vector.broadcast %cst_67 : f32 to vector<16x128xf32>
    %123 = arith.cmpf olt, %111, %122 : vector<16x128xf32>
    %124 = arith.extui %123 : vector<16x128xi1> to vector<16x128xi32>
    %125 = arith.sitofp %124 : vector<16x128xi32> to vector<16x128xf32>
    %126 = math.absf %111 : vector<16x128xf32>
    %cst_68 = arith.constant 1.000000e+00 : f32
    %127 = vector.broadcast %cst_68 : f32 to vector<16x128xf32>
    %128 = arith.select %119, %127, %126 : vector<16x128xi1>, vector<16x128xf32>
    %129 = math.log %128 : vector<16x128xf32>
    %130 = vector.broadcast %7 : vector<16x1xf32> to vector<16x128xf32>
    %131 = arith.mulf %130, %121 : vector<16x128xf32>
    %132 = tpu.concatenate %117, %121, %125, %129, %131 in 1 : vector<16x128xf32>, vector<16x128xf32>, vector<16x128xf32>, vector<16x128xf32>, vector<16x128xf32> -> vector<16x640xf32>
    %cst_69 = arith.constant dense<0.000000e+00> : vector<128x640xf32>
    %133 = tpu.matmul %1, %132, %cst_69 {dimension_numbers = #tpu.dot_dimension_numbers<[1], [0], [0], [1], [0, 0, 1, 1], [], []>} : vector<128x16xf32>, vector<16x640xf32>, vector<128x640xf32> -> vector<128x640xf32>
    %134 = vector.extract_strided_slice %133 {offsets = [0, 0], sizes = [128, 128], strides = [1, 1]} : vector<128x640xf32> to vector<128x128xf32>
    %cst_70 = arith.constant 0.000000e+00 : f32
    %135 = vector.broadcast %cst_70 : f32 to vector<128x128xf32>
    %136 = arith.maximumf %134, %135 : vector<128x128xf32>
    %137 = vector.extract_strided_slice %133 {offsets = [0, 128], sizes = [128, 128], strides = [1, 1]} : vector<128x640xf32> to vector<128x128xf32>
    %138 = vector.extract_strided_slice %133 {offsets = [0, 256], sizes = [128, 128], strides = [1, 1]} : vector<128x640xf32> to vector<128x128xf32>
    %139 = vector.extract_strided_slice %133 {offsets = [0, 384], sizes = [128, 128], strides = [1, 1]} : vector<128x640xf32> to vector<128x128xf32>
    %140 = vector.broadcast %5 : vector<128x1xf32> to vector<128x128xf32>
    %141 = arith.addf %139, %140 : vector<128x128xf32>
    %142 = vector.extract_strided_slice %133 {offsets = [0, 512], sizes = [128, 128], strides = [1, 1]} : vector<128x640xf32> to vector<128x128xf32>
    %143 = vector.broadcast %4 : vector<128x1xf32> to vector<128x128xf32>
    %144 = arith.mulf %143, %142 : vector<128x128xf32>
    %145 = arith.subf %141, %144 : vector<128x128xf32>
    %cst_71 = arith.constant 5.000000e-01 : f32
    %146 = vector.broadcast %cst_71 : f32 to vector<128x128xf32>
    %147 = arith.mulf %146, %138 : vector<128x128xf32>
    %148 = math.floor %147 : vector<128x128xf32>
    %cst_72 = arith.constant 2.000000e+00 : f32
    %149 = vector.broadcast %cst_72 : f32 to vector<128x128xf32>
    %150 = arith.mulf %149, %148 : vector<128x128xf32>
    %151 = arith.subf %138, %150 : vector<128x128xf32>
    %cst_73 = arith.constant 2.000000e+00 : f32
    %152 = vector.broadcast %cst_73 : f32 to vector<128x128xf32>
    %153 = arith.mulf %152, %151 : vector<128x128xf32>
    %cst_74 = arith.constant 1.000000e+00 : f32
    %154 = vector.broadcast %cst_74 : f32 to vector<128x128xf32>
    %155 = arith.subf %154, %153 : vector<128x128xf32>
    %156 = math.exp %145 : vector<128x128xf32>
    %157 = arith.mulf %155, %156 : vector<128x128xf32>
    %cst_75 = arith.constant 5.000000e-01 : f32
    %158 = vector.broadcast %cst_75 : f32 to vector<128x128xf32>
    %159 = arith.cmpf olt, %137, %158 : vector<128x128xf32>
    %cst_76 = arith.constant 0.000000e+00 : f32
    %160 = vector.broadcast %cst_76 : f32 to vector<128x128xf32>
    %161 = arith.select %159, %157, %160 : vector<128x128xi1>, vector<128x128xf32>
    %162 = vector.broadcast %3 : vector<128x1xf32> to vector<128x128xf32>
    %163 = arith.mulf %161, %162 : vector<128x128xf32>
    %cst_77 = arith.constant 5.000000e-01 : f32
    %164 = vector.broadcast %cst_77 : f32 to vector<128x128xf32>
    %165 = arith.cmpf ogt, %137, %164 : vector<128x128xf32>
    %cst_78 = arith.constant 1.500000e+00 : f32
    %166 = vector.broadcast %cst_78 : f32 to vector<128x128xf32>
    %167 = arith.cmpf olt, %137, %166 : vector<128x128xf32>
    %168 = arith.andi %165, %167 : vector<128x128xi1>
    %cst_79 = arith.constant 0.000000e+00 : f32
    %169 = vector.broadcast %cst_79 : f32 to vector<128x128xf32>
    %170 = arith.select %168, %157, %169 : vector<128x128xi1>, vector<128x128xf32>
    %171 = tpu.concatenate %136, %163 in 1 : vector<128x128xf32>, vector<128x128xf32> -> vector<128x256xf32>
    %cst_80 = arith.constant dense<0.000000e+00> : vector<16x256xf32>
    %172 = tpu.matmul %0, %171, %cst_80 {dimension_numbers = #tpu.dot_dimension_numbers<[1], [0], [0], [1], [0, 0, 1, 1], [], []>} : vector<16x128xf32>, vector<128x256xf32>, vector<16x256xf32> -> vector<16x256xf32>
    %173 = vector.extract_strided_slice %172 {offsets = [0, 0], sizes = [16, 128], strides = [1, 1]} : vector<16x256xf32> to vector<16x128xf32>
    %174 = vector.extract_strided_slice %172 {offsets = [0, 128], sizes = [16, 128], strides = [1, 1]} : vector<16x256xf32> to vector<16x128xf32>
    %cst_81 = arith.constant dense<0.000000e+00> : vector<16x128xf32>
    %175 = tpu.matmul %2, %170, %cst_81 {dimension_numbers = #tpu.dot_dimension_numbers<[1], [0], [0], [1], [0, 0, 1, 1], [], []>} : vector<16x128xf32>, vector<128x128xf32>, vector<16x128xf32> -> vector<16x128xf32>
    %cst_82 = arith.constant 1.000000e+00 : f32
    %176 = vector.broadcast %cst_82 : f32 to vector<16x128xf32>
    %177 = arith.select %119, %176, %111 : vector<16x128xi1>, vector<16x128xf32>
    %178 = tpu.reciprocal %177 : vector<16x128xf32> -> vector<16x128xf32>
    %179 = arith.mulf %174, %178 : vector<16x128xf32>
    %180 = arith.select %119, %175, %179 : vector<16x128xi1>, vector<16x128xf32>
    %cst_83 = arith.constant dense<0.000000e+00> : vector<16x128xf32>
    %181 = tpu.matmul %180, %106, %cst_83 {dimension_numbers = #tpu.dot_dimension_numbers<[1], [0], [0], [1], [0, 0, 1, 1], [], []>} : vector<16x128xf32>, vector<128x128xf32>, vector<16x128xf32> -> vector<16x128xf32>
    %182 = arith.addf %181, %173 : vector<16x128xf32>
    %183 = vector.broadcast %6 : vector<16x1xf32> to vector<16x128xf32>
    %184 = arith.mulf %183, %182 : vector<16x128xf32>
    %185 = vector.broadcast %11 : vector<16x1xf32> to vector<16x128xf32>
    %186 = vector.broadcast %107 : vector<1x128xf32> to vector<16x128xf32>
    %187 = arith.mulf %185, %186 : vector<16x128xf32>
    %188 = arith.addf %184, %187 : vector<16x128xf32>
    %cst_84 = arith.constant 0.000000e+00 : f32
    %189 = vector.broadcast %cst_84 : f32 to vector<16x128xf32>
    %190 = arith.maximumf %188, %189 : vector<16x128xf32>
    %c0_85 = arith.constant 0 : index
    %c0_86 = arith.constant 0 : index
    %191 = vector.load %arg21[%c0_85, %c0_86] : memref<128x128xf32, #tpu.memory_space<vmem>>, vector<128x128xf32>
    %cst_87 = arith.constant dense<0.000000e+00> : vector<16x128xf32>
    %192 = tpu.matmul %190, %191, %cst_87 {dimension_numbers = #tpu.dot_dimension_numbers<[1], [0], [0], [1], [0, 0, 1, 1], [], []>} : vector<16x128xf32>, vector<128x128xf32>, vector<16x128xf32> -> vector<16x128xf32>
    %c0_88 = arith.constant 0 : index
    %c0_89 = arith.constant 0 : index
    %193 = vector.load %arg22[%c0_88, %c0_89] : memref<1x128xf32, #tpu.memory_space<vmem>>, vector<1x128xf32>
    %194 = vector.broadcast %193 : vector<1x128xf32> to vector<16x128xf32>
    %195 = arith.addf %192, %194 : vector<16x128xf32>
    %c0_90 = arith.constant 0 : index
    %c0_91 = arith.constant 0 : index
    %196 = vector.load %arg23[%c0_90, %c0_91] : memref<16x128xf32, #tpu.memory_space<vmem>>, vector<16x128xf32>
    tpu.vector_store %arg23[%c0_90, %c0_91], %195 {strides = array<i32>} : memref<16x128xf32, #tpu.memory_space<vmem>>, vector<16x128xf32>,
    return
  }
}

</mosaic_0001>

<llo_original>
// kernel: thnn_ab_forward.1
$region0: #{thnn_ab_forward.1}
  #allocation0 [shape = 'u32[]', space=smem, size = 0x4, offset = 0x4, fixed_abs, tag = 'smem constant byte address 0x4 - core index']
  #allocation1 [shape = 'u32[144,128]{1,0:T(1,128)}', space=vmem, size = 0x12000, scoped, tag = 'internal scratch']
  %s0 = inlined_call_operand.vmem [shape: f32[16,128], index: 0, kind: input, shape index: {}]
  %s1 = inlined_call_operand.vmem [shape: f32[16,128], index: 1, kind: input, shape index: {}]
  %s2 = inlined_call_operand.vmem [shape: f32[128,16], index: 2, kind: input, shape index: {}]
  %s3 = inlined_call_operand.hbm [shape: f32[16,128], index: 3, kind: input, shape index: {}]
  %s4 = inlined_call_operand.vmem [shape: f32[128,1], index: 4, kind: input, shape index: {}]
  %s5 = inlined_call_operand.vmem [shape: f32[128,1], index: 5, kind: input, shape index: {}]
  %s6 = inlined_call_operand.vmem [shape: f32[128,1], index: 6, kind: input, shape index: {}]
  %s7 = inlined_call_operand.vmem [shape: f32[16,1], index: 7, kind: input, shape index: {}]
  %s8 = inlined_call_operand.vmem [shape: f32[16,1], index: 8, kind: input, shape index: {}]
  %s9 = inlined_call_operand.vmem [shape: f32[128,256], index: 9, kind: input, shape index: {}]
  %s10 = inlined_call_operand.vmem [shape: f32[1,256], index: 10, kind: input, shape index: {}]
  %s11 = inlined_call_operand.vmem [shape: f32[128,128], index: 11, kind: input, shape index: {}]
  %s12 = inlined_call_operand.vmem [shape: f32[1,128], index: 12, kind: input, shape index: {}]
  %s13 = inlined_call_operand.hbm [shape: f32[128,128], index: 13, kind: input, shape index: {}]
  %s14 = inlined_call_operand.vmem [shape: f32[1,128], index: 14, kind: input, shape index: {}]
  %s15 = inlined_call_operand.vmem [shape: f32[128,256], index: 15, kind: input, shape index: {}]
  %s16 = inlined_call_operand.vmem [shape: f32[1,256], index: 16, kind: input, shape index: {}]
  %s17 = inlined_call_operand.hbm [shape: f32[128,128], index: 17, kind: input, shape index: {}]
  %s18 = inlined_call_operand.vmem [shape: f32[1,128], index: 18, kind: input, shape index: {}]
  %s19 = inlined_call_operand.hbm [shape: f32[128,128], index: 19, kind: input, shape index: {}]
  %s20 = inlined_call_operand.vmem [shape: f32[1,128], index: 20, kind: input, shape index: {}]
  %s21 = inlined_call_operand.hbm [shape: f32[128,128], index: 21, kind: input, shape index: {}]
  %s22 = inlined_call_operand.vmem [shape: f32[1,128], index: 22, kind: input, shape index: {}]
  %s23 = inlined_call_operand.hbm [shape: f32[16,128], index: 23, kind: output, shape index: {}]
  %s24 = sld [smem:[#allocation0]]
  $region122: #{thnn_ab_forward.1} parent=0
    _
  %s26 = ssub.s32 1, %s24
  %s27 = scalar_select 0, %s26, %s24
  $region1: #{thnn_ab_forward.1} parent=0
    #allocation2 [shape = 'u8[8192]{0}', space=vmem, size = 0x2000, scoped, tag = 'input window, operand 3, single buffered']
    #allocation3 [shape = 's32[1]{0}', space=sflag, size = 0x4, scoped, tag = 'scoped memory for thnn_ab_forward.1']
    #allocation4 [shape = 's32[1]{0}', space=sflag, size = 0x4, scoped, tag = 'scoped memory for thnn_ab_forward.1']
    #allocation5 [shape = 'u8[65536]{0}', space=vmem, size = 0x10000, scoped, tag = 'input window, operand 13, single buffered']
    #allocation6 [shape = 's32[1]{0}', space=sflag, size = 0x4, scoped, tag = 'scoped memory for thnn_ab_forward.1']
    #allocation7 [shape = 'u8[65536]{0}', space=vmem, size = 0x10000, scoped, tag = 'input window, operand 17, single buffered']
    #allocation8 [shape = 'u8[65536]{0}', space=vmem, size = 0x10000, scoped, tag = 'input window, operand 19, single buffered']
    #allocation9 [shape = 's32[1]{0}', space=sflag, size = 0x4, scoped, tag = 'scoped memory for thnn_ab_forward.1']
    #allocation10 [shape = 'u8[65536]{0}', space=vmem, size = 0x10000, scoped, tag = 'input window, operand 21, single buffered']
    #allocation11 [shape = 'u8[8192]{0}', space=vmem, size = 0x2000, scoped, tag = 'output window, operand 0, single buffered']
    %28 = vsyncpa [#allocation3], 0
    %29 = vsyncpa [#allocation6], 0
    %30 = vsyncpa [#allocation9], 0
    %31 = vsyncpa [#allocation4], 0
    // Predicated region
    $region2: #{thnn_ab_forward.1} parent=1 // pred_check
      _
    $region3: #{thnn_ab_forward.1} parent=1 // pred_check_branch
      %33 = sbr.rel (0) target = $region5
    $region4: #{thnn_ab_forward.1} parent=1 // pred_region
      _
    $region5: #{thnn_ab_forward.1} parent=1 // pred_fallthru
      _
    // Predicated region
    $region6: #{thnn_ab_forward.1} parent=1 // pred_check
      _
    $region7: #{thnn_ab_forward.1} parent=1 // pred_check_branch
      %35 = sbr.rel (0) target = $region9
    $region8: #{thnn_ab_forward.1} parent=1 // pred_region
      _
    $region9: #{thnn_ab_forward.1} parent=1 // pred_fallthru
      _
    // Predicated region
    $region10: #{thnn_ab_forward.1} parent=1 // pred_check
      _
    $region11: #{thnn_ab_forward.1} parent=1 // pred_check_branch
      %37 = sbr.rel (0) target = $region13
    $region12: #{thnn_ab_forward.1} parent=1 // pred_region
      _
    $region13: #{thnn_ab_forward.1} parent=1 // pred_fallthru
      _
    // Predicated region
    $region14: #{thnn_ab_forward.1} parent=1 // pred_check
      _
    $region15: #{thnn_ab_forward.1} parent=1 // pred_check_branch
      %39 = sbr.rel (0) target = $region17
    $region16: #{thnn_ab_forward.1} parent=1 // pred_region
      %s41 = ssub.s32 256, 256
      %42 = vsyncadd [#allocation3], %s41
      %s43 = sshll.u32 [#allocation2], 4
      %s44 = int_to_ptr.vmem [resolvable:$true] %s43
      %49 = dma.hbm_to_vmem [thread:$0]  %s3, 256, %s44, [#allocation3], 128, 128, 8
    $region17: #{thnn_ab_forward.1} parent=1 // pred_fallthru
      _
    // Predicated region
    $region18: #{thnn_ab_forward.1} parent=1 // pred_check
      _
    $region19: #{thnn_ab_forward.1} parent=1 // pred_check_branch
      %51 = sbr.rel (0) target = $region21
    $region20: #{thnn_ab_forward.1} parent=1 // pred_region
      _
    $region21: #{thnn_ab_forward.1} parent=1 // pred_fallthru
      _
    // Predicated region
    $region22: #{thnn_ab_forward.1} parent=1 // pred_check
      _
    $region23: #{thnn_ab_forward.1} parent=1 // pred_check_branch
      %53 = sbr.rel (0) target = $region25
    $region24: #{thnn_ab_forward.1} parent=1 // pred_region
      _
    $region25: #{thnn_ab_forward.1} parent=1 // pred_fallthru
      _
    // Predicated region
    $region26: #{thnn_ab_forward.1} parent=1 // pred_check
      _
    $region27: #{thnn_ab_forward.1} parent=1 // pred_check_branch
      %55 = sbr.rel (0) target = $region29
    $region28: #{thnn_ab_forward.1} parent=1 // pred_region
      _
    $region29: #{thnn_ab_forward.1} parent=1 // pred_fallthru
      _
    // Predicated region
    $region30: #{thnn_ab_forward.1} parent=1 // pred_check
      _
    $region31: #{thnn_ab_forward.1} parent=1 // pred_check_branch
      %57 = sbr.rel (0) target = $region33
    $region32: #{thnn_ab_forward.1} parent=1 // pred_region
      _
    $region33: #{thnn_ab_forward.1} parent=1 // pred_fallthru
      _
    // Predicated region
    $region34: #{thnn_ab_forward.1} parent=1 // pred_check
      _
    $region35: #{thnn_ab_forward.1} parent=1 // pred_check_branch
      %59 = sbr.rel (0) target = $region37
    $region36: #{thnn_ab_forward.1} parent=1 // pred_region
      _
    $region37: #{thnn_ab_forward.1} parent=1 // pred_fallthru
      _
    // Predicated region
    $region38: #{thnn_ab_forward.1} parent=1 // pred_check
      _
    $region39: #{thnn_ab_forward.1} parent=1 // pred_check_branch
      %61 = sbr.rel (0) target = $region41
    $region40: #{thnn_ab_forward.1} parent=1 // pred_region
      _
    $region41: #{thnn_ab_forward.1} parent=1 // pred_fallthru
      _
    // Predicated region
    $region42: #{thnn_ab_forward.1} parent=1 // pred_check
      _
    $region43: #{thnn_ab_forward.1} parent=1 // pred_check_branch
      %63 = sbr.rel (0) target = $region45
    $region44: #{thnn_ab_forward.1} parent=1 // pred_region
      _
    $region45: #{thnn_ab_forward.1} parent=1 // pred_fallthru
      _
    // Predicated region
    $region46: #{thnn_ab_forward.1} parent=1 // pred_check
      _
    $region47: #{thnn_ab_forward.1} parent=1 // pred_check_branch
      %65 = sbr.rel (0) target = $region49
    $region48: #{thnn_ab_forward.1} parent=1 // pred_region
      _
    $region49: #{thnn_ab_forward.1} parent=1 // pred_fallthru
      _
    // Predicated region
    $region50: #{thnn_ab_forward.1} parent=1 // pred_check
      _
    $region51: #{thnn_ab_forward.1} parent=1 // pred_check_branch
      %67 = sbr.rel (0) target = $region53
    $region52: #{thnn_ab_forward.1} parent=1 // pred_region
      _
    $region53: #{thnn_ab_forward.1} parent=1 // pred_fallthru
      _
    // Predicated region
    $region54: #{thnn_ab_forward.1} parent=1 // pred_check
      _
    $region55: #{thnn_ab_forward.1} parent=1 // pred_check_branch
      %69 = sbr.rel (0) target = $region57
    $region56: #{thnn_ab_forward.1} parent=1 // pred_region
      %s71 = ssub.s32 2048, 2048
      %72 = vsyncadd [#allocation6], %s71
      %s73 = sshll.u32 [#allocation5], 4
      %s74 = int_to_ptr.vmem [resolvable:$true] %s73
      %79 = dma.hbm_to_vmem [thread:$0]  %s13, 2048, %s74, [#allocation6], 128, 128, 8
    $region57: #{thnn_ab_forward.1} parent=1 // pred_fallthru
      _
    // Predicated region
    $region58: #{thnn_ab_forward.1} parent=1 // pred_check
      _
    $region59: #{thnn_ab_forward.1} parent=1 // pred_check_branch
      %81 = sbr.rel (0) target = $region61
    $region60: #{thnn_ab_forward.1} parent=1 // pred_region
      _
    $region61: #{thnn_ab_forward.1} parent=1 // pred_fallthru
      _
    // Predicated region
    $region62: #{thnn_ab_forward.1} parent=1 // pred_check
      _
    $region63: #{thnn_ab_forward.1} parent=1 // pred_check_branch
      %83 = sbr.rel (0) target = $region65
    $region64: #{thnn_ab_forward.1} parent=1 // pred_region
      _
    $region65: #{thnn_ab_forward.1} parent=1 // pred_fallthru
      _
    // Predicated region
    $region66: #{thnn_ab_forward.1} parent=1 // pred_check
      _
    $region67: #{thnn_ab_forward.1} parent=1 // pred_check_branch
      %85 = sbr.rel (0) target = $region69
    $region68: #{thnn_ab_forward.1} parent=1 // pred_region
      _
    $region69: #{thnn_ab_forward.1} parent=1 // pred_fallthru
      _
    // Predicated region
    $region70: #{thnn_ab_forward.1} parent=1 // pred_check
      _
    $region71: #{thnn_ab_forward.1} parent=1 // pred_check_branch
      %87 = sbr.rel (0) target = $region73
    $region72: #{thnn_ab_forward.1} parent=1 // pred_region
      %s89 = ssub.s32 2048, 2048
      %90 = vsyncadd [#allocation6], %s89
      %s91 = sshll.u32 [#allocation7], 4
      %s92 = int_to_ptr.vmem [resolvable:$true] %s91
      %97 = dma.hbm_to_vmem [thread:$0]  %s17, 2048, %s92, [#allocation6], 128, 128, 8
    $region73: #{thnn_ab_forward.1} parent=1 // pred_fallthru
      _
    // Predicated region
    $region74: #{thnn_ab_forward.1} parent=1 // pred_check
      _
    $region75: #{thnn_ab_forward.1} parent=1 // pred_check_branch
      %99 = sbr.rel (0) target = $region77
    $region76: #{thnn_ab_forward.1} parent=1 // pred_region
      _
    $region77: #{thnn_ab_forward.1} parent=1 // pred_fallthru
      _
    // Predicated region
    $region78: #{thnn_ab_forward.1} parent=1 // pred_check
      _
    $region79: #{thnn_ab_forward.1} parent=1 // pred_check_branch
      %101 = sbr.rel (0) target = $region81
    $region80: #{thnn_ab_forward.1} parent=1 // pred_region
      %s103 = ssub.s32 2048, 2048
      %104 = vsyncadd [#allocation9], %s103
      %s105 = sshll.u32 [#allocation8], 4
      %s106 = int_to_ptr.vmem [resolvable:$true] %s105
      %111 = dma.hbm_to_vmem [thread:$0]  %s19, 2048, %s106, [#allocation9], 128, 128, 8
    $region81: #{thnn_ab_forward.1} parent=1 // pred_fallthru
      _
    // Predicated region
    $region82: #{thnn_ab_forward.1} parent=1 // pred_check
      _
    $region83: #{thnn_ab_forward.1} parent=1 // pred_check_branch
      %113 = sbr.rel (0) target = $region85
    $region84: #{thnn_ab_forward.1} parent=1 // pred_region
      _
    $region85: #{thnn_ab_forward.1} parent=1 // pred_fallthru
      _
    // Predicated region
    $region86: #{thnn_ab_forward.1} parent=1 // pred_check
      _
    $region87: #{thnn_ab_forward.1} parent=1 // pred_check_branch
      %115 = sbr.rel (0) target = $region89
    $region88: #{thnn_ab_forward.1} parent=1 // pred_region
      %s117 = ssub.s32 2048, 2048
      %118 = vsyncadd [#allocation9], %s117
      %s119 = sshll.u32 [#allocation10], 4
      %s120 = int_to_ptr.vmem [resolvable:$true] %s119
      %125 = dma.hbm_to_vmem [thread:$0]  %s21, 2048, %s120, [#allocation9], 128, 128, 8
    $region89: #{thnn_ab_forward.1} parent=1 // pred_fallthru
      _
    // Predicated region
    $region90: #{thnn_ab_forward.1} parent=1 // pred_check
      _
    $region91: #{thnn_ab_forward.1} parent=1 // pred_check_branch
      %127 = sbr.rel (0) target = $region93
    $region92: #{thnn_ab_forward.1} parent=1 // pred_region
      _
    $region93: #{thnn_ab_forward.1} parent=1 // pred_fallthru
      _
    // Predicated region
    $region94: #{thnn_ab_forward.1} parent=1 // pred_check
      _
    $region95: #{thnn_ab_forward.1} parent=1 // pred_check_branch
      %129 = sbr.rel (0) target = $region97
    $region96: #{thnn_ab_forward.1} parent=1 // pred_region
      %130 = dma.done [#allocation3], 256
    $region97: #{thnn_ab_forward.1} parent=1 // pred_fallthru
      _
    // Predicated region
    $region98: #{thnn_ab_forward.1} parent=1 // pred_check
      _
    $region99: #{thnn_ab_forward.1} parent=1 // pred_check_branch
      %132 = sbr.rel (0) target = $region101
    $region100: #{thnn_ab_forward.1} parent=1 // pred_region
      %133 = dma.done [#allocation6], 2048
    $region101: #{thnn_ab_forward.1} parent=1 // pred_fallthru
      _
    // Predicated region
    $region102: #{thnn_ab_forward.1} parent=1 // pred_check
      _
    $region103: #{thnn_ab_forward.1} parent=1 // pred_check_branch
      %135 = sbr.rel (0) target = $region105
    $region104: #{thnn_ab_forward.1} parent=1 // pred_region
      %136 = dma.done [#allocation6], 2048
    $region105: #{thnn_ab_forward.1} parent=1 // pred_fallthru
      _
    // Predicated region
    $region106: #{thnn_ab_forward.1} parent=1 // pred_check
      _
    $region107: #{thnn_ab_forward.1} parent=1 // pred_check_branch
      %138 = sbr.rel (0) target = $region109
    $region108: #{thnn_ab_forward.1} parent=1 // pred_region
      %139 = dma.done [#allocation9], 2048
    $region109: #{thnn_ab_forward.1} parent=1 // pred_fallthru
      _
    // Predicated region
    $region110: #{thnn_ab_forward.1} parent=1 // pred_check
      _
    $region111: #{thnn_ab_forward.1} parent=1 // pred_check_branch
      %141 = sbr.rel (0) target = $region113
    $region112: #{thnn_ab_forward.1} parent=1 // pred_region
      %142 = dma.done [#allocation9], 2048
    $region113: #{thnn_ab_forward.1} parent=1 // pred_fallthru
      _
    %v143 = vld [vmem:[%s1] sm:$0xff]
    %v144 = vld [vmem:[%s1 + $0x8] sm:$0xff]
    %v145 = vld [vmem:[%s2] sm:$0xff]
    %v146 = vld [vmem:[%s2 + $0x8] sm:$0xff]
    %v147 = vld [vmem:[%s2 + $0x10] sm:$0xff]
    %v148 = vld [vmem:[%s2 + $0x18] sm:$0xff]
    %v149 = vld [vmem:[%s2 + $0x20] sm:$0xff]
    %v150 = vld [vmem:[%s2 + $0x28] sm:$0xff]
    %v151 = vld [vmem:[%s2 + $0x30] sm:$0xff]
    %v152 = vld [vmem:[%s2 + $0x38] sm:$0xff]
    %v153 = vld [vmem:[%s2 + $0x40] sm:$0xff]
    %v154 = vld [vmem:[%s2 + $0x48] sm:$0xff]
    %v155 = vld [vmem:[%s2 + $0x50] sm:$0xff]
    %v156 = vld [vmem:[%s2 + $0x58] sm:$0xff]
    %v157 = vld [vmem:[%s2 + $0x60] sm:$0xff]
    %v158 = vld [vmem:[%s2 + $0x68] sm:$0xff]
    %v159 = vld [vmem:[%s2 + $0x70] sm:$0xff]
    %v160 = vld [vmem:[%s2 + $0x78] sm:$0xff]
    %v161 = vld [vmem:[#allocation2] sm:$0xff]
    %v162 = vld [vmem:[#allocation2 + $0x8] sm:$0xff]
    %v163 = vld [vmem:[%s4] sm:$0xff]
    %v164 = vld [vmem:[%s4 + $0x8] sm:$0xff]
    %v165 = vld [vmem:[%s4 + $0x10] sm:$0xff]
    %v166 = vld [vmem:[%s4 + $0x18] sm:$0xff]
    %v167 = vld [vmem:[%s4 + $0x20] sm:$0xff]
    %v168 = vld [vmem:[%s4 + $0x28] sm:$0xff]
    %v169 = vld [vmem:[%s4 + $0x30] sm:$0xff]
    %v170 = vld [vmem:[%s4 + $0x38] sm:$0xff]
    %v171 = vld [vmem:[%s4 + $0x40] sm:$0xff]
    %v172 = vld [vmem:[%s4 + $0x48] sm:$0xff]
    %v173 = vld [vmem:[%s4 + $0x50] sm:$0xff]
    %v174 = vld [vmem:[%s4 + $0x58] sm:$0xff]
    %v175 = vld [vmem:[%s4 + $0x60] sm:$0xff]
    %v176 = vld [vmem:[%s4 + $0x68] sm:$0xff]
    %v177 = vld [vmem:[%s4 + $0x70] sm:$0xff]
    %v178 = vld [vmem:[%s4 + $0x78] sm:$0xff]
    %v179 = vld [vmem:[%s5] sm:$0xff]
    %v180 = vld [vmem:[%s5 + $0x8] sm:$0xff]
    %v181 = vld [vmem:[%s5 + $0x10] sm:$0xff]
    %v182 = vld [vmem:[%s5 + $0x18] sm:$0xff]
    %v183 = vld [vmem:[%s5 + $0x20] sm:$0xff]
    %v184 = vld [vmem:[%s5 + $0x28] sm:$0xff]
    %v185 = vld [vmem:[%s5 + $0x30] sm:$0xff]
    %v186 = vld [vmem:[%s5 + $0x38] sm:$0xff]
    %v187 = vld [vmem:[%s5 + $0x40] sm:$0xff]
    %v188 = vld [vmem:[%s5 + $0x48] sm:$0xff]
    %v189 = vld [vmem:[%s5 + $0x50] sm:$0xff]
    %v190 = vld [vmem:[%s5 + $0x58] sm:$0xff]
    %v191 = vld [vmem:[%s5 + $0x60] sm:$0xff]
    %v192 = vld [vmem:[%s5 + $0x68] sm:$0xff]
    %v193 = vld [vmem:[%s5 + $0x70] sm:$0xff]
    %v194 = vld [vmem:[%s5 + $0x78] sm:$0xff]
    %v195 = vld [vmem:[%s6] sm:$0xff]
    %v196 = vld [vmem:[%s6 + $0x8] sm:$0xff]
    %v197 = vld [vmem:[%s6 + $0x10] sm:$0xff]
    %v198 = vld [vmem:[%s6 + $0x18] sm:$0xff]
    %v199 = vld [vmem:[%s6 + $0x20] sm:$0xff]
    %v200 = vld [vmem:[%s6 + $0x28] sm:$0xff]
    %v201 = vld [vmem:[%s6 + $0x30] sm:$0xff]
    %v202 = vld [vmem:[%s6 + $0x38] sm:$0xff]
    %v203 = vld [vmem:[%s6 + $0x40] sm:$0xff]
    %v204 = vld [vmem:[%s6 + $0x48] sm:$0xff]
    %v205 = vld [vmem:[%s6 + $0x50] sm:$0xff]
    %v206 = vld [vmem:[%s6 + $0x58] sm:$0xff]
    %v207 = vld [vmem:[%s6 + $0x60] sm:$0xff]
    %v208 = vld [vmem:[%s6 + $0x68] sm:$0xff]
    %v209 = vld [vmem:[%s6 + $0x70] sm:$0xff]
    %v210 = vld [vmem:[%s6 + $0x78] sm:$0xff]
    %v211 = vld [vmem:[%s7] sm:$0xff]
    %v212 = vld [vmem:[%s7 + $0x8] sm:$0xff]
    %v213 = vld [vmem:[%s8] sm:$0xff]
    %v214 = vld [vmem:[%s8 + $0x8] sm:$0xff]
    %vm215 = vcmp.gt.f32.partialorder %v211, 0.0
    %vm216 = vcmp.gt.f32.partialorder %v212, 0.0
    %v217 = vsel %vm215, 1, 0
    %v218 = vsel %vm216, 1, 0
    %v219 = vcvt.s32.f32 %v217
    %v220 = vcvt.s32.f32 %v218
    %v221 = vld [vmem:[%s0] sm:$0xff]
    %v222 = vld [vmem:[%s0 + $0x8] sm:$0xff]
    %v223 = vld [vmem:[%s9] sm:$0xff]
    %v224 = vld [vmem:[%s9 + $0x8] sm:$0xff]
    %v225 = vld [vmem:[%s9 + $0x10] sm:$0xff]
    %v226 = vld [vmem:[%s9 + $0x18] sm:$0xff]
    %v227 = vld [vmem:[%s9 + $0x20] sm:$0xff]
    %v228 = vld [vmem:[%s9 + $0x28] sm:$0xff]
    %v229 = vld [vmem:[%s9 + $0x30] sm:$0xff]
    %v230 = vld [vmem:[%s9 + $0x38] sm:$0xff]
    %v231 = vld [vmem:[%s9 + $0x40] sm:$0xff]
    %v232 = vld [vmem:[%s9 + $0x48] sm:$0xff]
    %v233 = vld [vmem:[%s9 + $0x50] sm:$0xff]
    %v234 = vld [vmem:[%s9 + $0x58] sm:$0xff]
    %v235 = vld [vmem:[%s9 + $0x60] sm:$0xff]
    %v236 = vld [vmem:[%s9 + $0x68] sm:$0xff]
    %v237 = vld [vmem:[%s9 + $0x70] sm:$0xff]
    %v238 = vld [vmem:[%s9 + $0x78] sm:$0xff]
    %v239 = vld [vmem:[%s9 + $0x80] sm:$0xff]
    %v240 = vld [vmem:[%s9 + $0x88] sm:$0xff]
    %v241 = vld [vmem:[%s9 + $0x90] sm:$0xff]
    %v242 = vld [vmem:[%s9 + $0x98] sm:$0xff]
    %v243 = vld [vmem:[%s9 + $0xa0] sm:$0xff]
    %v244 = vld [vmem:[%s9 + $0xa8] sm:$0xff]
    %v245 = vld [vmem:[%s9 + $0xb0] sm:$0xff]
    %v246 = vld [vmem:[%s9 + $0xb8] sm:$0xff]
    %v247 = vld [vmem:[%s9 + $0xc0] sm:$0xff]
    %v248 = vld [vmem:[%s9 + $0xc8] sm:$0xff]
    %v249 = vld [vmem:[%s9 + $0xd0] sm:$0xff]
    %v250 = vld [vmem:[%s9 + $0xd8] sm:$0xff]
    %v251 = vld [vmem:[%s9 + $0xe0] sm:$0xff]
    %v252 = vld [vmem:[%s9 + $0xe8] sm:$0xff]
    %v253 = vld [vmem:[%s9 + $0xf0] sm:$0xff]
    %v254 = vld [vmem:[%s9 + $0xf8] sm:$0xff]
    %v255 = vld [vmem:[%s10] sm:$0x3]
    %v256 = vld [vmem:[%s11] sm:$0xff]
    %v257 = vld [vmem:[%s11 + $0x8] sm:$0xff]
    %v258 = vld [vmem:[%s11 + $0x10] sm:$0xff]
    %v259 = vld [vmem:[%s11 + $0x18] sm:$0xff]
    %v260 = vld [vmem:[%s11 + $0x20] sm:$0xff]
    %v261 = vld [vmem:[%s11 + $0x28] sm:$0xff]
    %v262 = vld [vmem:[%s11 + $0x30] sm:$0xff]
    %v263 = vld [vmem:[%s11 + $0x38] sm:$0xff]
    %v264 = vld [vmem:[%s11 + $0x40] sm:$0xff]
    %v265 = vld [vmem:[%s11 + $0x48] sm:$0xff]
    %v266 = vld [vmem:[%s11 + $0x50] sm:$0xff]
    %v267 = vld [vmem:[%s11 + $0x58] sm:$0xff]
    %v268 = vld [vmem:[%s11 + $0x60] sm:$0xff]
    %v269 = vld [vmem:[%s11 + $0x68] sm:$0xff]
    %v270 = vld [vmem:[%s11 + $0x70] sm:$0xff]
    %v271 = vld [vmem:[%s11 + $0x78] sm:$0xff]
    %v272 = vld [vmem:[%s12] sm:$0x1]
    %v273 = vld [vmem:[#allocation5] sm:$0xff]
    %v274 = vld [vmem:[#allocation5 + $0x8] sm:$0xff]
    %v275 = vld [vmem:[#allocation5 + $0x10] sm:$0xff]
    %v276 = vld [vmem:[#allocation5 + $0x18] sm:$0xff]
    %v277 = vld [vmem:[#allocation5 + $0x20] sm:$0xff]
    %v278 = vld [vmem:[#allocation5 + $0x28] sm:$0xff]
    %v279 = vld [vmem:[#allocation5 + $0x30] sm:$0xff]
    %v280 = vld [vmem:[#allocation5 + $0x38] sm:$0xff]
    %v281 = vld [vmem:[#allocation5 + $0x40] sm:$0xff]
    %v282 = vld [vmem:[#allocation5 + $0x48] sm:$0xff]
    %v283 = vld [vmem:[#allocation5 + $0x50] sm:$0xff]
    %v284 = vld [vmem:[#allocation5 + $0x58] sm:$0xff]
    %v285 = vld [vmem:[#allocation5 + $0x60] sm:$0xff]
    %v286 = vld [vmem:[#allocation5 + $0x68] sm:$0xff]
    %v287 = vld [vmem:[#allocation5 + $0x70] sm:$0xff]
    %v288 = vld [vmem:[#allocation5 + $0x78] sm:$0xff]
    %v289 = vld [vmem:[%s14] sm:$0x1]
    %v291 = vlaneseq
    %v292 = vshrl.u32 %v291, 7
    %v293 = vsub.s32 0, %v292
    %v294 = vrot.slane %v255, %v293
    %v295 = vlaneseq
    %v296 = vshrl.u32 %v295, 7
    %v297 = vsub.s32 1, %v296
    %v298 = vrot.slane %v255, %v297
    %301 = vmatprep.subr.mxu0 %v254
    %302 = vmatpush1.msra.mxu0 %v253
    %303 = vmatprep.subr.mxu0 %v252
    %304 = vmatpush1.msra.mxu0 %v251
    %305 = vmatprep.subr.mxu0 %v250
    %306 = vmatpush1.msra.mxu0 %v249
    %307 = vmatprep.subr.mxu0 %v248
    %308 = vmatpush1.msra.mxu0 %v247
    %309 = vmatprep.subr.mxu0 %v246
    %310 = vmatpush1.msra.mxu0 %v245
    %311 = vmatprep.subr.mxu0 %v244
    %312 = vmatpush1.msra.mxu0 %v243
    %313 = vmatprep.subr.mxu0 %v242
    %314 = vmatpush1.msra.mxu0 %v241
    %315 = vmatprep.subr.mxu0 %v240
    %316 = vmatpush1.msra.mxu0 %v239
    %317 = vmatprep.subr.mxu0 %v238
    %318 = vmatpush1.msra.mxu0 %v237
    %319 = vmatprep.subr.mxu0 %v236
    %320 = vmatpush1.msra.mxu0 %v235
    %321 = vmatprep.subr.mxu0 %v234
    %322 = vmatpush1.msra.mxu0 %v233
    %323 = vmatprep.subr.mxu0 %v232
    %324 = vmatpush1.msra.mxu0 %v231
    %325 = vmatprep.subr.mxu0 %v230
    %326 = vmatpush1.msra.mxu0 %v229
    %327 = vmatprep.subr.mxu0 %v228
    %328 = vmatpush1.msra.mxu0 %v227
    %329 = vmatprep.subr.mxu0 %v226
    %330 = vmatpush1.msra.mxu0 %v225
    %331 = vmatprep.subr.mxu0 %v224
    %332 = vmatpush1.msra.mxu0 %v223
    %333 = vmatprep.subr.mxu0 0.0
    %334 = vmatpush2.msra.mxu0 0.0
    %335 = vmatprep.subr.mxu0 0.0
    %336 = vmatpush2.msra.mxu0 0.0
    %337 = vmatprep.subr.mxu0 0.0
    %338 = vmatpush2.msra.mxu0 0.0
    %339 = vmatprep.subr.mxu0 0.0
    %340 = vmatpush2.msra.mxu0 0.0
    %341 = vmatprep.subr.mxu0 0.0
    %342 = vmatpush2.msra.mxu0 0.0
    %343 = vmatprep.subr.mxu0 0.0
    %344 = vmatpush2.msra.mxu0 0.0
    %345 = vmatprep.subr.mxu0 0.0
    %346 = vmatpush2.msra.mxu0 0.0
    %347 = vmatprep.subr.mxu0 0.0
    %348 = vmatpush2.msra.mxu0 0.0
    %349 = vmatprep.subr.mxu0 0.0
    %350 = vmatpush2.msra.mxu0 0.0
    %351 = vmatprep.subr.mxu0 0.0
    %352 = vmatpush2.msra.mxu0 0.0
    %353 = vmatprep.subr.mxu0 0.0
    %354 = vmatpush2.msra.mxu0 0.0
    %355 = vmatprep.subr.mxu0 0.0
    %356 = vmatpush2.msra.mxu0 0.0
    %357 = vmatprep.subr.mxu0 0.0
    %358 = vmatpush2.msra.mxu0 0.0
    %359 = vmatprep.subr.mxu0 0.0
    %360 = vmatpush2.msra.mxu0 0.0
    %361 = vmatprep.subr.mxu0 0.0
    %362 = vmatpush2.msra.mxu0 0.0
    %363 = vmatprep.subr.mxu0 0.0
    %364 = vmatpush2.msra.mxu0 0.0
    %365 = vmatprep.mubr.f32.mxu0 0.0
    %366 = vmatmul.mubr.f32.gmra.mxu0 %v221
    %v367 = vpop.f32.mrf.mxu0
    %v368 = vadd.f32 %v294, %v367
    %v369 = vpop.f32.mrf.mxu0
    %v370 = vadd.f32 %v298, %v369
    %371 = vmatprep.mubr.f32.mxu0 0.0
    %372 = vmatmul.mubr.f32.gmra.mxu0 %v222
    %v373 = vpop.f32.mrf.mxu0
    %v374 = vadd.f32 %v294, %v373
    %v375 = vpop.f32.mrf.mxu0
    %v376 = vadd.f32 %v298, %v375
    %377 = vdwg.mxu0
    %v378 = vmax.f32 %v370, 0.0
    %v379 = vmax.f32 %v376, 0.0
    %v381 = vlaneseq
    %v382 = vshrl.u32 %v381, 7
    %v383 = vsub.s32 0, %v382
    %v384 = vrot.slane %v272, %v383
    %386 = vmatprep.subr.mxu0 0.0
    %387 = vmatpush1.msra.mxu0 %v271
    %388 = vmatprep.subr.mxu0 0.0
    %389 = vmatpush1.msra.mxu0 %v270
    %390 = vmatprep.subr.mxu0 0.0
    %391 = vmatpush1.msra.mxu0 %v269
    %392 = vmatprep.subr.mxu0 0.0
    %393 = vmatpush1.msra.mxu0 %v268
    %394 = vmatprep.subr.mxu0 0.0
    %395 = vmatpush1.msra.mxu0 %v267
    %396 = vmatprep.subr.mxu0 0.0
    %397 = vmatpush1.msra.mxu0 %v266
    %398 = vmatprep.subr.mxu0 0.0
    %399 = vmatpush1.msra.mxu0 %v265
    %400 = vmatprep.subr.mxu0 0.0
    %401 = vmatpush1.msra.mxu0 %v264
    %402 = vmatprep.subr.mxu0 0.0
    %403 = vmatpush1.msra.mxu0 %v263
    %404 = vmatprep.subr.mxu0 0.0
    %405 = vmatpush1.msra.mxu0 %v262
    %406 = vmatprep.subr.mxu0 0.0
    %407 = vmatpush1.msra.mxu0 %v261
    %408 = vmatprep.subr.mxu0 0.0
    %409 = vmatpush1.msra.mxu0 %v260
    %410 = vmatprep.subr.mxu0 0.0
    %411 = vmatpush1.msra.mxu0 %v259
    %412 = vmatprep.subr.mxu0 0.0
    %413 = vmatpush1.msra.mxu0 %v258
    %414 = vmatprep.subr.mxu0 0.0
    %415 = vmatpush1.msra.mxu0 %v257
    %416 = vmatprep.subr.mxu0 0.0
    %417 = vmatpush1.msra.mxu0 %v256
    %418 = vmatprep.subr.mxu0 0.0
    %419 = vmatpush2.msra.mxu0 0.0
    %420 = vmatprep.subr.mxu0 0.0
    %421 = vmatpush2.msra.mxu0 0.0
    %422 = vmatprep.subr.mxu0 0.0
    %423 = vmatpush2.msra.mxu0 0.0
    %424 = vmatprep.subr.mxu0 0.0
    %425 = vmatpush2.msra.mxu0 0.0
    %426 = vmatprep.subr.mxu0 0.0
    %427 = vmatpush2.msra.mxu0 0.0
    %428 = vmatprep.subr.mxu0 0.0
    %429 = vmatpush2.msra.mxu0 0.0
    %430 = vmatprep.subr.mxu0 0.0
    %431 = vmatpush2.msra.mxu0 0.0
    %432 = vmatprep.subr.mxu0 0.0
    %433 = vmatpush2.msra.mxu0 0.0
    %434 = vmatprep.subr.mxu0 0.0
    %435 = vmatpush2.msra.mxu0 0.0
    %436 = vmatprep.subr.mxu0 0.0
    %437 = vmatpush2.msra.mxu0 0.0
    %438 = vmatprep.subr.mxu0 0.0
    %439 = vmatpush2.msra.mxu0 0.0
    %440 = vmatprep.subr.mxu0 0.0
    %441 = vmatpush2.msra.mxu0 0.0
    %442 = vmatprep.subr.mxu0 0.0
    %443 = vmatpush2.msra.mxu0 0.0
    %444 = vmatprep.subr.mxu0 0.0
    %445 = vmatpush2.msra.mxu0 0.0
    %446 = vmatprep.subr.mxu0 0.0
    %447 = vmatpush2.msra.mxu0 0.0
    %448 = vmatprep.subr.mxu0 0.0
    %449 = vmatpush2.msra.mxu0 0.0
    %450 = vmatprep.mubr.f32.mxu0 0.0
    %451 = vmatmul.mubr.f32.gmra.mxu0 %v378
    %v452 = vpop.f32.mrf.mxu0
    %v453 = vadd.f32 %v384, %v452
    %v454 = vpop.f32.mrf.mxu0
    %455 = vmatprep.mubr.f32.mxu0 0.0
    %456 = vmatmul.mubr.f32.gmra.mxu0 %v379
    %v457 = vpop.f32.mrf.mxu0
    %v458 = vadd.f32 %v384, %v457
    %v459 = vpop.f32.mrf.mxu0
    %460 = vdwg.mxu0
    %vm461 = vcmp.eq.f32.partialorder %v368, 0.0
    %vm462 = vcmp.eq.f32.partialorder %v374, 0.0
    %v463 = vsel %vm461, 1, 0
    %v464 = vsel %vm462, 1, 0
    %v465 = vcvt.s32.f32 %v463
    %v466 = vcvt.s32.f32 %v464
    %vm467 = vcmp.lt.f32.partialorder %v368, 0.0
    %vm468 = vcmp.lt.f32.partialorder %v374, 0.0
    %v469 = vsel %vm467, 1, 0
    %v470 = vsel %vm468, 1, 0
    %v471 = vcvt.s32.f32 %v469
    %v472 = vcvt.s32.f32 %v470
    %v473 = vand.u32 2147483647, %v368
    %v474 = vand.u32 2147483647, %v374
    %v475 = vsel %vm461, 1.0, %v473
    %v476 = vsel %vm462, 1.0, %v474
    %v477 = vlog2.pop %v475
    %v478 = vmul.f32 %v477, 0.6931472
    %v479 = vlog2.pop %v476
    %v480 = vmul.f32 %v479, 0.6931472
    %482 = vset.pattern.permute.xlu0 0
    %483 = vperm.xlu0 %482, %v213
    %v484 = vpop.permute.xlu0 %483
    %487 = vset.pattern.permute.xlu0 0
    %488 = vperm.xlu0 %487, %v214
    %v489 = vpop.permute.xlu0 %488
    %v491 = vmul.f32 %v484, %v465
    %v492 = vmul.f32 %v489, %v466
    %vm493 = vcmask 130048
    %v495 = vsel %vm493, %v145, 0
    %v498 = vsel %vm493, %v146, 0
    %v501 = vsel %vm493, %v147, 0
    %v504 = vsel %vm493, %v148, 0
    %v507 = vsel %vm493, %v149, 0
    %v510 = vsel %vm493, %v150, 0
    %v513 = vsel %vm493, %v151, 0
    %v516 = vsel %vm493, %v152, 0
    %v519 = vsel %vm493, %v153, 0
    %v522 = vsel %vm493, %v154, 0
    %v525 = vsel %vm493, %v155, 0
    %v528 = vsel %vm493, %v156, 0
    %v531 = vsel %vm493, %v157, 0
    %v534 = vsel %vm493, %v158, 0
    %v537 = vsel %vm493, %v159, 0
    %v540 = vsel %vm493, %v160, 0
    %542 = vmatprep.subr.mxu0 0.0
    %543 = vmatpush1.msra.mxu0 0.0
    %544 = vmatprep.subr.mxu0 0.0
    %545 = vmatpush1.msra.mxu0 0.0
    %546 = vmatprep.subr.mxu0 0.0
    %547 = vmatpush1.msra.mxu0 0.0
    %548 = vmatprep.subr.mxu0 0.0
    %549 = vmatpush1.msra.mxu0 0.0
    %550 = vmatprep.subr.mxu0 0.0
    %551 = vmatpush1.msra.mxu0 0.0
    %552 = vmatprep.subr.mxu0 0.0
    %553 = vmatpush1.msra.mxu0 0.0
    %554 = vmatprep.subr.mxu0 0.0
    %555 = vmatpush1.msra.mxu0 0.0
    %556 = vmatprep.subr.mxu0 0.0
    %557 = vmatpush1.msra.mxu0 0.0
    %558 = vmatprep.subr.mxu0 0.0
    %559 = vmatpush1.msra.mxu0 0.0
    %560 = vmatprep.subr.mxu0 0.0
    %561 = vmatpush1.msra.mxu0 0.0
    %562 = vmatprep.subr.mxu0 0.0
    %563 = vmatpush1.msra.mxu0 0.0
    %564 = vmatprep.subr.mxu0 0.0
    %565 = vmatpush1.msra.mxu0 0.0
    %566 = vmatprep.subr.mxu0 0.0
    %567 = vmatpush1.msra.mxu0 0.0
    %568 = vmatprep.subr.mxu0 0.0
    %569 = vmatpush1.msra.mxu0 0.0
    %570 = vmatprep.subr.mxu0 %v466
    %571 = vmatpush1.msra.mxu0 %v458
    %572 = vmatprep.subr.mxu0 %v465
    %573 = vmatpush1.msra.mxu0 %v453
    %574 = vmatprep.subr.mxu0 0.0
    %575 = vmatpush2.msra.mxu0 0.0
    %576 = vmatprep.subr.mxu0 0.0
    %577 = vmatpush2.msra.mxu0 0.0
    %578 = vmatprep.subr.mxu0 0.0
    %579 = vmatpush2.msra.mxu0 0.0
    %580 = vmatprep.subr.mxu0 0.0
    %581 = vmatpush2.msra.mxu0 0.0
    %582 = vmatprep.subr.mxu0 0.0
    %583 = vmatpush2.msra.mxu0 0.0
    %584 = vmatprep.subr.mxu0 0.0
    %585 = vmatpush2.msra.mxu0 0.0
    %586 = vmatprep.subr.mxu0 0.0
    %587 = vmatpush2.msra.mxu0 0.0
    %588 = vmatprep.subr.mxu0 0.0
    %589 = vmatpush2.msra.mxu0 0.0
    %590 = vmatprep.subr.mxu0 0.0
    %591 = vmatpush2.msra.mxu0 0.0
    %592 = vmatprep.subr.mxu0 0.0
    %593 = vmatpush2.msra.mxu0 0.0
    %594 = vmatprep.subr.mxu0 0.0
    %595 = vmatpush2.msra.mxu0 0.0
    %596 = vmatprep.subr.mxu0 0.0
    %597 = vmatpush2.msra.mxu0 0.0
    %598 = vmatprep.subr.mxu0 0.0
    %599 = vmatpush2.msra.mxu0 0.0
    %600 = vmatprep.subr.mxu0 0.0
    %601 = vmatpush2.msra.mxu0 0.0
    %602 = vmatprep.subr.mxu0 0.0
    %603 = vmatpush2.msra.mxu0 0.0
    %604 = vmatprep.subr.mxu0 0.0
    %605 = vmatpush2.msra.mxu0 0.0
    %606 = vmatprep.mubr.f32.mxu0 0.0
    %607 = vmatmul.mubr.f32.gmra.mxu0 %v495
    %v608 = vpop.f32.mrf.mxu0
    %v609 = vadd.f32 0.0, %v608
    %v610 = vpop.f32.mrf.mxu0
    %v611 = vadd.f32 0.0, %v610
    %612 = vmatprep.mubr.f32.mxu0 0.0
    %613 = vmatmul.mubr.f32.gmra.mxu0 %v498
    %v614 = vpop.f32.mrf.mxu0
    %v615 = vadd.f32 0.0, %v614
    %v616 = vpop.f32.mrf.mxu0
    %v617 = vadd.f32 0.0, %v616
    %618 = vmatprep.mubr.f32.mxu0 0.0
    %619 = vmatmul.mubr.f32.gmra.mxu0 %v501
    %v620 = vpop.f32.mrf.mxu0
    %v621 = vadd.f32 0.0, %v620
    %v622 = vpop.f32.mrf.mxu0
    %v623 = vadd.f32 0.0, %v622
    %624 = vmatprep.mubr.f32.mxu0 0.0
    %625 = vmatmul.mubr.f32.gmra.mxu0 %v504
    %v626 = vpop.f32.mrf.mxu0
    %v627 = vadd.f32 0.0, %v626
    %v628 = vpop.f32.mrf.mxu0
    %v629 = vadd.f32 0.0, %v628
    %630 = vmatprep.mubr.f32.mxu0 0.0
    %631 = vmatmul.mubr.f32.gmra.mxu0 %v507
    %v632 = vpop.f32.mrf.mxu0
    %v633 = vadd.f32 0.0, %v632
    %v634 = vpop.f32.mrf.mxu0
    %v635 = vadd.f32 0.0, %v634
    %636 = vmatprep.mubr.f32.mxu0 0.0
    %637 = vmatmul.mubr.f32.gmra.mxu0 %v510
    %v638 = vpop.f32.mrf.mxu0
    %v639 = vadd.f32 0.0, %v638
    %v640 = vpop.f32.mrf.mxu0
    %v641 = vadd.f32 0.0, %v640
    %642 = vmatprep.mubr.f32.mxu0 0.0
    %643 = vmatmul.mubr.f32.gmra.mxu0 %v513
    %v644 = vpop.f32.mrf.mxu0
    %v645 = vadd.f32 0.0, %v644
    %v646 = vpop.f32.mrf.mxu0
    %v647 = vadd.f32 0.0, %v646
    %648 = vmatprep.mubr.f32.mxu0 0.0
    %649 = vmatmul.mubr.f32.gmra.mxu0 %v516
    %v650 = vpop.f32.mrf.mxu0
    %v651 = vadd.f32 0.0, %v650
    %v652 = vpop.f32.mrf.mxu0
    %v653 = vadd.f32 0.0, %v652
    %654 = vmatprep.mubr.f32.mxu0 0.0
    %655 = vmatmul.mubr.f32.gmra.mxu0 %v519
    %v656 = vpop.f32.mrf.mxu0
    %v657 = vadd.f32 0.0, %v656
    %v658 = vpop.f32.mrf.mxu0
    %v659 = vadd.f32 0.0, %v658
    %660 = vmatprep.mubr.f32.mxu0 0.0
    %661 = vmatmul.mubr.f32.gmra.mxu0 %v522
    %v662 = vpop.f32.mrf.mxu0
    %v663 = vadd.f32 0.0, %v662
    %v664 = vpop.f32.mrf.mxu0
    %v665 = vadd.f32 0.0, %v664
    %666 = vmatprep.mubr.f32.mxu0 0.0
    %667 = vmatmul.mubr.f32.gmra.mxu0 %v525
    %v668 = vpop.f32.mrf.mxu0
    %v669 = vadd.f32 0.0, %v668
    %v670 = vpop.f32.mrf.mxu0
    %v671 = vadd.f32 0.0, %v670
    %672 = vmatprep.mubr.f32.mxu0 0.0
    %673 = vmatmul.mubr.f32.gmra.mxu0 %v528
    %v674 = vpop.f32.mrf.mxu0
    %v675 = vadd.f32 0.0, %v674
    %v676 = vpop.f32.mrf.mxu0
    %v677 = vadd.f32 0.0, %v676
    %678 = vmatprep.mubr.f32.mxu0 0.0
    %679 = vmatmul.mubr.f32.gmra.mxu0 %v531
    %v680 = vpop.f32.mrf.mxu0
    %v681 = vadd.f32 0.0, %v680
    %v682 = vpop.f32.mrf.mxu0
    %v683 = vadd.f32 0.0, %v682
    %684 = vmatprep.mubr.f32.mxu0 0.0
    %685 = vmatmul.mubr.f32.gmra.mxu0 %v534
    %v686 = vpop.f32.mrf.mxu0
    %v687 = vadd.f32 0.0, %v686
    %v688 = vpop.f32.mrf.mxu0
    %v689 = vadd.f32 0.0, %v688
    %690 = vmatprep.mubr.f32.mxu0 0.0
    %691 = vmatmul.mubr.f32.gmra.mxu0 %v537
    %v692 = vpop.f32.mrf.mxu0
    %v693 = vadd.f32 0.0, %v692
    %v694 = vpop.f32.mrf.mxu0
    %v695 = vadd.f32 0.0, %v694
    %696 = vmatprep.mubr.f32.mxu0 0.0
    %697 = vmatmul.mubr.f32.gmra.mxu0 %v540
    %v698 = vpop.f32.mrf.mxu0
    %v699 = vadd.f32 0.0, %v698
    %v700 = vpop.f32.mrf.mxu0
    %v701 = vadd.f32 0.0, %v700
    %702 = vdwg.mxu0
    %703 = vmatprep.subr.mxu0 0.0
    %704 = vmatpush1.msra.mxu0 0.0
    %705 = vmatprep.subr.mxu0 0.0
    %706 = vmatpush1.msra.mxu0 0.0
    %707 = vmatprep.subr.mxu0 0.0
    %708 = vmatpush1.msra.mxu0 0.0
    %709 = vmatprep.subr.mxu0 0.0
    %710 = vmatpush1.msra.mxu0 0.0
    %711 = vmatprep.subr.mxu0 0.0
    %712 = vmatpush1.msra.mxu0 0.0
    %713 = vmatprep.subr.mxu0 0.0
    %714 = vmatpush1.msra.mxu0 0.0
    %715 = vmatprep.subr.mxu0 0.0
    %716 = vmatpush1.msra.mxu0 0.0
    %717 = vmatprep.subr.mxu0 0.0
    %718 = vmatpush1.msra.mxu0 0.0
    %719 = vmatprep.subr.mxu0 0.0
    %720 = vmatpush1.msra.mxu0 0.0
    %721 = vmatprep.subr.mxu0 0.0
    %722 = vmatpush1.msra.mxu0 0.0
    %723 = vmatprep.subr.mxu0 0.0
    %724 = vmatpush1.msra.mxu0 0.0
    %725 = vmatprep.subr.mxu0 0.0
    %726 = vmatpush1.msra.mxu0 0.0
    %727 = vmatprep.subr.mxu0 0.0
    %728 = vmatpush1.msra.mxu0 0.0
    %729 = vmatprep.subr.mxu0 0.0
    %730 = vmatpush1.msra.mxu0 0.0
    %731 = vmatprep.subr.mxu0 %v480
    %732 = vmatpush1.msra.mxu0 %v472
    %733 = vmatprep.subr.mxu0 %v478
    %734 = vmatpush1.msra.mxu0 %v471
    %735 = vmatprep.subr.mxu0 0.0
    %736 = vmatpush2.msra.mxu0 0.0
    %737 = vmatprep.subr.mxu0 0.0
    %738 = vmatpush2.msra.mxu0 0.0
    %739 = vmatprep.subr.mxu0 0.0
    %740 = vmatpush2.msra.mxu0 0.0
    %741 = vmatprep.subr.mxu0 0.0
    %742 = vmatpush2.msra.mxu0 0.0
    %743 = vmatprep.subr.mxu0 0.0
    %744 = vmatpush2.msra.mxu0 0.0
    %745 = vmatprep.subr.mxu0 0.0
    %746 = vmatpush2.msra.mxu0 0.0
    %747 = vmatprep.subr.mxu0 0.0
    %748 = vmatpush2.msra.mxu0 0.0
    %749 = vmatprep.subr.mxu0 0.0
    %750 = vmatpush2.msra.mxu0 0.0
    %751 = vmatprep.subr.mxu0 0.0
    %752 = vmatpush2.msra.mxu0 0.0
    %753 = vmatprep.subr.mxu0 0.0
    %754 = vmatpush2.msra.mxu0 0.0
    %755 = vmatprep.subr.mxu0 0.0
    %756 = vmatpush2.msra.mxu0 0.0
    %757 = vmatprep.subr.mxu0 0.0
    %758 = vmatpush2.msra.mxu0 0.0
    %759 = vmatprep.subr.mxu0 0.0
    %760 = vmatpush2.msra.mxu0 0.0
    %761 = vmatprep.subr.mxu0 0.0
    %762 = vmatpush2.msra.mxu0 0.0
    %763 = vmatprep.subr.mxu0 0.0
    %764 = vmatpush2.msra.mxu0 0.0
    %765 = vmatprep.subr.mxu0 0.0
    %766 = vmatpush2.msra.mxu0 0.0
    %767 = vmatprep.mubr.f32.mxu0 0.0
    %768 = vmatmul.mubr.f32.gmra.mxu0 %v495
    %v769 = vpop.f32.mrf.mxu0
    %v770 = vadd.f32 0.0, %v769
    %v771 = vpop.f32.mrf.mxu0
    %v772 = vadd.f32 0.0, %v771
    %773 = vmatprep.mubr.f32.mxu0 0.0
    %774 = vmatmul.mubr.f32.gmra.mxu0 %v498
    %v775 = vpop.f32.mrf.mxu0
    %v776 = vadd.f32 0.0, %v775
    %v777 = vpop.f32.mrf.mxu0
    %v778 = vadd.f32 0.0, %v777
    %779 = vmatprep.mubr.f32.mxu0 0.0
    %780 = vmatmul.mubr.f32.gmra.mxu0 %v501
    %v781 = vpop.f32.mrf.mxu0
    %v782 = vadd.f32 0.0, %v781
    %v783 = vpop.f32.mrf.mxu0
    %v784 = vadd.f32 0.0, %v783
    %785 = vmatprep.mubr.f32.mxu0 0.0
    %786 = vmatmul.mubr.f32.gmra.mxu0 %v504
    %v787 = vpop.f32.mrf.mxu0
    %v788 = vadd.f32 0.0, %v787
    %v789 = vpop.f32.mrf.mxu0
    %v790 = vadd.f32 0.0, %v789
    %791 = vmatprep.mubr.f32.mxu0 0.0
    %792 = vmatmul.mubr.f32.gmra.mxu0 %v507
    %v793 = vpop.f32.mrf.mxu0
    %v794 = vadd.f32 0.0, %v793
    %v795 = vpop.f32.mrf.mxu0
    %v796 = vadd.f32 0.0, %v795
    %797 = vmatprep.mubr.f32.mxu0 0.0
    %798 = vmatmul.mubr.f32.gmra.mxu0 %v510
    %v799 = vpop.f32.mrf.mxu0
    %v800 = vadd.f32 0.0, %v799
    %v801 = vpop.f32.mrf.mxu0
    %v802 = vadd.f32 0.0, %v801
    %803 = vmatprep.mubr.f32.mxu0 0.0
    %804 = vmatmul.mubr.f32.gmra.mxu0 %v513
    %v805 = vpop.f32.mrf.mxu0
    %v806 = vadd.f32 0.0, %v805
    %v807 = vpop.f32.mrf.mxu0
    %v808 = vadd.f32 0.0, %v807
    %809 = vmatprep.mubr.f32.mxu0 0.0
    %810 = vmatmul.mubr.f32.gmra.mxu0 %v516
    %v811 = vpop.f32.mrf.mxu0
    %v812 = vadd.f32 0.0, %v811
    %v813 = vpop.f32.mrf.mxu0
    %v814 = vadd.f32 0.0, %v813
    %815 = vmatprep.mubr.f32.mxu0 0.0
    %816 = vmatmul.mubr.f32.gmra.mxu0 %v519
    %v817 = vpop.f32.mrf.mxu0
    %v818 = vadd.f32 0.0, %v817
    %v819 = vpop.f32.mrf.mxu0
    %v820 = vadd.f32 0.0, %v819
    %821 = vmatprep.mubr.f32.mxu0 0.0
    %822 = vmatmul.mubr.f32.gmra.mxu0 %v522
    %v823 = vpop.f32.mrf.mxu0
    %v824 = vadd.f32 0.0, %v823
    %v825 = vpop.f32.mrf.mxu0
    %v826 = vadd.f32 0.0, %v825
    %827 = vmatprep.mubr.f32.mxu0 0.0
    %828 = vmatmul.mubr.f32.gmra.mxu0 %v525
    %v829 = vpop.f32.mrf.mxu0
    %v830 = vadd.f32 0.0, %v829
    %v831 = vpop.f32.mrf.mxu0
    %v832 = vadd.f32 0.0, %v831
    %833 = vmatprep.mubr.f32.mxu0 0.0
    %834 = vmatmul.mubr.f32.gmra.mxu0 %v528
    %v835 = vpop.f32.mrf.mxu0
    %v836 = vadd.f32 0.0, %v835
    %v837 = vpop.f32.mrf.mxu0
    %v838 = vadd.f32 0.0, %v837
    %839 = vmatprep.mubr.f32.mxu0 0.0
    %840 = vmatmul.mubr.f32.gmra.mxu0 %v531
    %v841 = vpop.f32.mrf.mxu0
    %v842 = vadd.f32 0.0, %v841
    %v843 = vpop.f32.mrf.mxu0
    %v844 = vadd.f32 0.0, %v843
    %845 = vmatprep.mubr.f32.mxu0 0.0
    %846 = vmatmul.mubr.f32.gmra.mxu0 %v534
    %v847 = vpop.f32.mrf.mxu0
    %v848 = vadd.f32 0.0, %v847
    %v849 = vpop.f32.mrf.mxu0
    %v850 = vadd.f32 0.0, %v849
    %851 = vmatprep.mubr.f32.mxu0 0.0
    %852 = vmatmul.mubr.f32.gmra.mxu0 %v537
    %v853 = vpop.f32.mrf.mxu0
    %v854 = vadd.f32 0.0, %v853
    %v855 = vpop.f32.mrf.mxu0
    %v856 = vadd.f32 0.0, %v855
    %857 = vmatprep.mubr.f32.mxu0 0.0
    %858 = vmatmul.mubr.f32.gmra.mxu0 %v540
    %v859 = vpop.f32.mrf.mxu0
    %v860 = vadd.f32 0.0, %v859
    %v861 = vpop.f32.mrf.mxu0
    %v862 = vadd.f32 0.0, %v861
    %863 = vdwg.mxu0
    %864 = vmatprep.subr.mxu0 0.0
    %865 = vmatpush1.msra.mxu0 0.0
    %866 = vmatprep.subr.mxu0 0.0
    %867 = vmatpush1.msra.mxu0 0.0
    %868 = vmatprep.subr.mxu0 0.0
    %869 = vmatpush1.msra.mxu0 0.0
    %870 = vmatprep.subr.mxu0 0.0
    %871 = vmatpush1.msra.mxu0 0.0
    %872 = vmatprep.subr.mxu0 0.0
    %873 = vmatpush1.msra.mxu0 0.0
    %874 = vmatprep.subr.mxu0 0.0
    %875 = vmatpush1.msra.mxu0 0.0
    %876 = vmatprep.subr.mxu0 0.0
    %877 = vmatpush1.msra.mxu0 0.0
    %878 = vmatprep.subr.mxu0 0.0
    %879 = vmatpush1.msra.mxu0 0.0
    %880 = vmatprep.subr.mxu0 0.0
    %881 = vmatpush1.msra.mxu0 0.0
    %882 = vmatprep.subr.mxu0 0.0
    %883 = vmatpush1.msra.mxu0 0.0
    %884 = vmatprep.subr.mxu0 0.0
    %885 = vmatpush1.msra.mxu0 0.0
    %886 = vmatprep.subr.mxu0 0.0
    %887 = vmatpush1.msra.mxu0 0.0
    %888 = vmatprep.subr.mxu0 0.0
    %889 = vmatpush1.msra.mxu0 0.0
    %890 = vmatprep.subr.mxu0 0.0
    %891 = vmatpush1.msra.mxu0 0.0
    %892 = vmatprep.subr.mxu0 0.0
    %893 = vmatpush1.msra.mxu0 %v492
    %894 = vmatprep.subr.mxu0 0.0
    %895 = vmatpush1.msra.mxu0 %v491
    %896 = vmatprep.subr.mxu0 0.0
    %897 = vmatpush2.msra.mxu0 0.0
    %898 = vmatprep.subr.mxu0 0.0
    %899 = vmatpush2.msra.mxu0 0.0
    %900 = vmatprep.subr.mxu0 0.0
    %901 = vmatpush2.msra.mxu0 0.0
    %902 = vmatprep.subr.mxu0 0.0
    %903 = vmatpush2.msra.mxu0 0.0
    %904 = vmatprep.subr.mxu0 0.0
    %905 = vmatpush2.msra.mxu0 0.0
    %906 = vmatprep.subr.mxu0 0.0
    %907 = vmatpush2.msra.mxu0 0.0
    %908 = vmatprep.subr.mxu0 0.0
    %909 = vmatpush2.msra.mxu0 0.0
    %910 = vmatprep.subr.mxu0 0.0
    %911 = vmatpush2.msra.mxu0 0.0
    %912 = vmatprep.subr.mxu0 0.0
    %913 = vmatpush2.msra.mxu0 0.0
    %914 = vmatprep.subr.mxu0 0.0
    %915 = vmatpush2.msra.mxu0 0.0
    %916 = vmatprep.subr.mxu0 0.0
    %917 = vmatpush2.msra.mxu0 0.0
    %918 = vmatprep.subr.mxu0 0.0
    %919 = vmatpush2.msra.mxu0 0.0
    %920 = vmatprep.subr.mxu0 0.0
    %921 = vmatpush2.msra.mxu0 0.0
    %922 = vmatprep.subr.mxu0 0.0
    %923 = vmatpush2.msra.mxu0 0.0
    %924 = vmatprep.subr.mxu0 0.0
    %925 = vmatpush2.msra.mxu0 0.0
    %926 = vmatprep.subr.mxu0 0.0
    %927 = vmatpush2.msra.mxu0 0.0
    %928 = vmatprep.mubr.f32.mxu0 0.0
    %929 = vmatmul.mubr.f32.gmra.mxu0 %v495
    %v930 = vpop.f32.mrf.mxu0
    %v931 = vadd.f32 0.0, %v930
    %v932 = vpop.f32.mrf.mxu0
    %933 = vmatprep.mubr.f32.mxu0 0.0
    %934 = vmatmul.mubr.f32.gmra.mxu0 %v498
    %v935 = vpop.f32.mrf.mxu0
    %v936 = vadd.f32 0.0, %v935
    %v937 = vpop.f32.mrf.mxu0
    %938 = vmatprep.mubr.f32.mxu0 0.0
    %939 = vmatmul.mubr.f32.gmra.mxu0 %v501
    %v940 = vpop.f32.mrf.mxu0
    %v941 = vadd.f32 0.0, %v940
    %v942 = vpop.f32.mrf.mxu0
    %943 = vmatprep.mubr.f32.mxu0 0.0
    %944 = vmatmul.mubr.f32.gmra.mxu0 %v504
    %v945 = vpop.f32.mrf.mxu0
    %v946 = vadd.f32 0.0, %v945
    %v947 = vpop.f32.mrf.mxu0
    %948 = vmatprep.mubr.f32.mxu0 0.0
    %949 = vmatmul.mubr.f32.gmra.mxu0 %v507
    %v950 = vpop.f32.mrf.mxu0
    %v951 = vadd.f32 0.0, %v950
    %v952 = vpop.f32.mrf.mxu0
    %953 = vmatprep.mubr.f32.mxu0 0.0
    %954 = vmatmul.mubr.f32.gmra.mxu0 %v510
    %v955 = vpop.f32.mrf.mxu0
    %v956 = vadd.f32 0.0, %v955
    %v957 = vpop.f32.mrf.mxu0
    %958 = vmatprep.mubr.f32.mxu0 0.0
    %959 = vmatmul.mubr.f32.gmra.mxu0 %v513
    %v960 = vpop.f32.mrf.mxu0
    %v961 = vadd.f32 0.0, %v960
    %v962 = vpop.f32.mrf.mxu0
    %963 = vmatprep.mubr.f32.mxu0 0.0
    %964 = vmatmul.mubr.f32.gmra.mxu0 %v516
    %v965 = vpop.f32.mrf.mxu0
    %v966 = vadd.f32 0.0, %v965
    %v967 = vpop.f32.mrf.mxu0
    %968 = vmatprep.mubr.f32.mxu0 0.0
    %969 = vmatmul.mubr.f32.gmra.mxu0 %v519
    %v970 = vpop.f32.mrf.mxu0
    %v971 = vadd.f32 0.0, %v970
    %v972 = vpop.f32.mrf.mxu0
    %973 = vmatprep.mubr.f32.mxu0 0.0
    %974 = vmatmul.mubr.f32.gmra.mxu0 %v522
    %v975 = vpop.f32.mrf.mxu0
    %v976 = vadd.f32 0.0, %v975
    %v977 = vpop.f32.mrf.mxu0
    %978 = vmatprep.mubr.f32.mxu0 0.0
    %979 = vmatmul.mubr.f32.gmra.mxu0 %v525
    %v980 = vpop.f32.mrf.mxu0
    %v981 = vadd.f32 0.0, %v980
    %v982 = vpop.f32.mrf.mxu0
    %983 = vmatprep.mubr.f32.mxu0 0.0
    %984 = vmatmul.mubr.f32.gmra.mxu0 %v528
    %v985 = vpop.f32.mrf.mxu0
    %v986 = vadd.f32 0.0, %v985
    %v987 = vpop.f32.mrf.mxu0
    %988 = vmatprep.mubr.f32.mxu0 0.0
    %989 = vmatmul.mubr.f32.gmra.mxu0 %v531
    %v990 = vpop.f32.mrf.mxu0
    %v991 = vadd.f32 0.0, %v990
    %v992 = vpop.f32.mrf.mxu0
    %993 = vmatprep.mubr.f32.mxu0 0.0
    %994 = vmatmul.mubr.f32.gmra.mxu0 %v534
    %v995 = vpop.f32.mrf.mxu0
    %v996 = vadd.f32 0.0, %v995
    %v997 = vpop.f32.mrf.mxu0
    %998 = vmatprep.mubr.f32.mxu0 0.0
    %999 = vmatmul.mubr.f32.gmra.mxu0 %v537
    %v1000 = vpop.f32.mrf.mxu0
    %v1001 = vadd.f32 0.0, %v1000
    %v1002 = vpop.f32.mrf.mxu0
    %1003 = vmatprep.mubr.f32.mxu0 0.0
    %1004 = vmatmul.mubr.f32.gmra.mxu0 %v540
    %v1005 = vpop.f32.mrf.mxu0
    %v1006 = vadd.f32 0.0, %v1005
    %v1007 = vpop.f32.mrf.mxu0
    %1008 = vdwg.mxu0
    %v1009 = vmax.f32 %v609, 0.0
    %v1010 = vmax.f32 %v615, 0.0
    %v1011 = vmax.f32 %v621, 0.0
    %v1012 = vmax.f32 %v627, 0.0
    %v1013 = vmax.f32 %v633, 0.0
    %v1014 = vmax.f32 %v639, 0.0
    %v1015 = vmax.f32 %v645, 0.0
    %v1016 = vmax.f32 %v651, 0.0
    %v1017 = vmax.f32 %v657, 0.0
    %v1018 = vmax.f32 %v663, 0.0
    %v1019 = vmax.f32 %v669, 0.0
    %v1020 = vmax.f32 %v675, 0.0
    %v1021 = vmax.f32 %v681, 0.0
    %v1022 = vmax.f32 %v687, 0.0
    %v1023 = vmax.f32 %v693, 0.0
    %v1024 = vmax.f32 %v699, 0.0
    %1026 = vset.pattern.permute.xlu0 0
    %1027 = vperm.xlu0 %1026, %v195
    %v1028 = vpop.permute.xlu0 %1027
    %1031 = vset.pattern.permute.xlu0 0
    %1032 = vperm.xlu0 %1031, %v196
    %v1033 = vpop.permute.xlu0 %1032
    %1036 = vset.pattern.permute.xlu0 0
    %1037 = vperm.xlu0 %1036, %v197
    %v1038 = vpop.permute.xlu0 %1037
    %1041 = vset.pattern.permute.xlu0 0
    %1042 = vperm.xlu0 %1041, %v198
    %v1043 = vpop.permute.xlu0 %1042
    %1046 = vset.pattern.permute.xlu0 0
    %1047 = vperm.xlu0 %1046, %v199
    %v1048 = vpop.permute.xlu0 %1047
    %1051 = vset.pattern.permute.xlu0 0
    %1052 = vperm.xlu0 %1051, %v200
    %v1053 = vpop.permute.xlu0 %1052
    %1056 = vset.pattern.permute.xlu0 0
    %1057 = vperm.xlu0 %1056, %v201
    %v1058 = vpop.permute.xlu0 %1057
    %1061 = vset.pattern.permute.xlu0 0
    %1062 = vperm.xlu0 %1061, %v202
    %v1063 = vpop.permute.xlu0 %1062
    %1066 = vset.pattern.permute.xlu0 0
    %1067 = vperm.xlu0 %1066, %v203
    %v1068 = vpop.permute.xlu0 %1067
    %1071 = vset.pattern.permute.xlu0 0
    %1072 = vperm.xlu0 %1071, %v204
    %v1073 = vpop.permute.xlu0 %1072
    %1076 = vset.pattern.permute.xlu0 0
    %1077 = vperm.xlu0 %1076, %v205
    %v1078 = vpop.permute.xlu0 %1077
    %1081 = vset.pattern.permute.xlu0 0
    %1082 = vperm.xlu0 %1081, %v206
    %v1083 = vpop.permute.xlu0 %1082
    %1086 = vset.pattern.permute.xlu0 0
    %1087 = vperm.xlu0 %1086, %v207
    %v1088 = vpop.permute.xlu0 %1087
    %1091 = vset.pattern.permute.xlu0 0
    %1092 = vperm.xlu0 %1091, %v208
    %v1093 = vpop.permute.xlu0 %1092
    %1096 = vset.pattern.permute.xlu0 0
    %1097 = vperm.xlu0 %1096, %v209
    %v1098 = vpop.permute.xlu0 %1097
    %1101 = vset.pattern.permute.xlu0 0
    %1102 = vperm.xlu0 %1101, %v210
    %v1103 = vpop.permute.xlu0 %1102
    %v1105 = vadd.f32 %v772, %v1028
    %v1106 = vadd.f32 %v778, %v1033
    %v1107 = vadd.f32 %v784, %v1038
    %v1108 = vadd.f32 %v790, %v1043
    %v1109 = vadd.f32 %v796, %v1048
    %v1110 = vadd.f32 %v802, %v1053
    %v1111 = vadd.f32 %v808, %v1058
    %v1112 = vadd.f32 %v814, %v1063
    %v1113 = vadd.f32 %v820, %v1068
    %v1114 = vadd.f32 %v826, %v1073
    %v1115 = vadd.f32 %v832, %v1078
    %v1116 = vadd.f32 %v838, %v1083
    %v1117 = vadd.f32 %v844, %v1088
    %v1118 = vadd.f32 %v850, %v1093
    %v1119 = vadd.f32 %v856, %v1098
    %v1120 = vadd.f32 %v862, %v1103
    %1122 = vset.pattern.permute.xlu0 0
    %1123 = vperm.xlu0 %1122, %v179
    %v1124 = vpop.permute.xlu0 %1123
    %1127 = vset.pattern.permute.xlu0 0
    %1128 = vperm.xlu0 %1127, %v180
    %v1129 = vpop.permute.xlu0 %1128
    %1132 = vset.pattern.permute.xlu0 0
    %1133 = vperm.xlu0 %1132, %v181
    %v1134 = vpop.permute.xlu0 %1133
    %1137 = vset.pattern.permute.xlu0 0
    %1138 = vperm.xlu0 %1137, %v182
    %v1139 = vpop.permute.xlu0 %1138
    %1142 = vset.pattern.permute.xlu0 0
    %1143 = vperm.xlu0 %1142, %v183
    %v1144 = vpop.permute.xlu0 %1143
    %1147 = vset.pattern.permute.xlu0 0
    %1148 = vperm.xlu0 %1147, %v184
    %v1149 = vpop.permute.xlu0 %1148
    %1152 = vset.pattern.permute.xlu0 0
    %1153 = vperm.xlu0 %1152, %v185
    %v1154 = vpop.permute.xlu0 %1153
    %1157 = vset.pattern.permute.xlu0 0
    %1158 = vperm.xlu0 %1157, %v186
    %v1159 = vpop.permute.xlu0 %1158
    %1162 = vset.pattern.permute.xlu0 0
    %1163 = vperm.xlu0 %1162, %v187
    %v1164 = vpop.permute.xlu0 %1163
    %1167 = vset.pattern.permute.xlu0 0
    %1168 = vperm.xlu0 %1167, %v188
    %v1169 = vpop.permute.xlu0 %1168
    %1172 = vset.pattern.permute.xlu0 0
    %1173 = vperm.xlu0 %1172, %v189
    %v1174 = vpop.permute.xlu0 %1173
    %1177 = vset.pattern.permute.xlu0 0
    %1178 = vperm.xlu0 %1177, %v190
    %v1179 = vpop.permute.xlu0 %1178
    %1182 = vset.pattern.permute.xlu0 0
    %1183 = vperm.xlu0 %1182, %v191
    %v1184 = vpop.permute.xlu0 %1183
    %1187 = vset.pattern.permute.xlu0 0
    %1188 = vperm.xlu0 %1187, %v192
    %v1189 = vpop.permute.xlu0 %1188
    %1192 = vset.pattern.permute.xlu0 0
    %1193 = vperm.xlu0 %1192, %v193
    %v1194 = vpop.permute.xlu0 %1193
    %1197 = vset.pattern.permute.xlu0 0
    %1198 = vperm.xlu0 %1197, %v194
    %v1199 = vpop.permute.xlu0 %1198
    %v1201 = vmul.f32 %v1124, %v931
    %v1202 = vmul.f32 %v1129, %v936
    %v1203 = vmul.f32 %v1134, %v941
    %v1204 = vmul.f32 %v1139, %v946
    %v1205 = vmul.f32 %v1144, %v951
    %v1206 = vmul.f32 %v1149, %v956
    %v1207 = vmul.f32 %v1154, %v961
    %v1208 = vmul.f32 %v1159, %v966
    %v1209 = vmul.f32 %v1164, %v971
    %v1210 = vmul.f32 %v1169, %v976
    %v1211 = vmul.f32 %v1174, %v981
    %v1212 = vmul.f32 %v1179, %v986
    %v1213 = vmul.f32 %v1184, %v991
    %v1214 = vmul.f32 %v1189, %v996
    %v1215 = vmul.f32 %v1194, %v1001
    %v1216 = vmul.f32 %v1199, %v1006
    %v1217 = vsub.f32 %v1105, %v1201
    %v1218 = vsub.f32 %v1106, %v1202
    %v1219 = vsub.f32 %v1107, %v1203
    %v1220 = vsub.f32 %v1108, %v1204
    %v1221 = vsub.f32 %v1109, %v1205
    %v1222 = vsub.f32 %v1110, %v1206
    %v1223 = vsub.f32 %v1111, %v1207
    %v1224 = vsub.f32 %v1112, %v1208
    %v1225 = vsub.f32 %v1113, %v1209
    %v1226 = vsub.f32 %v1114, %v1210
    %v1227 = vsub.f32 %v1115, %v1211
    %v1228 = vsub.f32 %v1116, %v1212
    %v1229 = vsub.f32 %v1117, %v1213
    %v1230 = vsub.f32 %v1118, %v1214
    %v1231 = vsub.f32 %v1119, %v1215
    %v1232 = vsub.f32 %v1120, %v1216
    %v1233 = vmul.f32 %v770, 0.5
    %v1234 = vmul.f32 %v776, 0.5
    %v1235 = vmul.f32 %v782, 0.5
    %v1236 = vmul.f32 %v788, 0.5
    %v1237 = vmul.f32 %v794, 0.5
    %v1238 = vmul.f32 %v800, 0.5
    %v1239 = vmul.f32 %v806, 0.5
    %v1240 = vmul.f32 %v812, 0.5
    %v1241 = vmul.f32 %v818, 0.5
    %v1242 = vmul.f32 %v824, 0.5
    %v1243 = vmul.f32 %v830, 0.5
    %v1244 = vmul.f32 %v836, 0.5
    %v1245 = vmul.f32 %v842, 0.5
    %v1246 = vmul.f32 %v848, 0.5
    %v1247 = vmul.f32 %v854, 0.5
    %v1248 = vmul.f32 %v860, 0.5
    %v1249 = vfloor.f32 %v1233
    %v1250 = vfloor.f32 %v1234
    %v1251 = vfloor.f32 %v1235
    %v1252 = vfloor.f32 %v1236
    %v1253 = vfloor.f32 %v1237
    %v1254 = vfloor.f32 %v1238
    %v1255 = vfloor.f32 %v1239
    %v1256 = vfloor.f32 %v1240
    %v1257 = vfloor.f32 %v1241
    %v1258 = vfloor.f32 %v1242
    %v1259 = vfloor.f32 %v1243
    %v1260 = vfloor.f32 %v1244
    %v1261 = vfloor.f32 %v1245
    %v1262 = vfloor.f32 %v1246
    %v1263 = vfloor.f32 %v1247
    %v1264 = vfloor.f32 %v1248
    %v1265 = vmul.f32 %v1249, 2.0
    %v1266 = vmul.f32 %v1250, 2.0
    %v1267 = vmul.f32 %v1251, 2.0
    %v1268 = vmul.f32 %v1252, 2.0
    %v1269 = vmul.f32 %v1253, 2.0
    %v1270 = vmul.f32 %v1254, 2.0
    %v1271 = vmul.f32 %v1255, 2.0
    %v1272 = vmul.f32 %v1256, 2.0
    %v1273 = vmul.f32 %v1257, 2.0
    %v1274 = vmul.f32 %v1258, 2.0
    %v1275 = vmul.f32 %v1259, 2.0
    %v1276 = vmul.f32 %v1260, 2.0
    %v1277 = vmul.f32 %v1261, 2.0
    %v1278 = vmul.f32 %v1262, 2.0
    %v1279 = vmul.f32 %v1263, 2.0
    %v1280 = vmul.f32 %v1264, 2.0
    %v1281 = vsub.f32 %v770, %v1265
    %v1282 = vsub.f32 %v776, %v1266
    %v1283 = vsub.f32 %v782, %v1267
    %v1284 = vsub.f32 %v788, %v1268
    %v1285 = vsub.f32 %v794, %v1269
    %v1286 = vsub.f32 %v800, %v1270
    %v1287 = vsub.f32 %v806, %v1271
    %v1288 = vsub.f32 %v812, %v1272
    %v1289 = vsub.f32 %v818, %v1273
    %v1290 = vsub.f32 %v824, %v1274
    %v1291 = vsub.f32 %v830, %v1275
    %v1292 = vsub.f32 %v836, %v1276
    %v1293 = vsub.f32 %v842, %v1277
    %v1294 = vsub.f32 %v848, %v1278
    %v1295 = vsub.f32 %v854, %v1279
    %v1296 = vsub.f32 %v860, %v1280
    %v1297 = vmul.f32 %v1281, 2.0
    %v1298 = vmul.f32 %v1282, 2.0
    %v1299 = vmul.f32 %v1283, 2.0
    %v1300 = vmul.f32 %v1284, 2.0
    %v1301 = vmul.f32 %v1285, 2.0
    %v1302 = vmul.f32 %v1286, 2.0
    %v1303 = vmul.f32 %v1287, 2.0
    %v1304 = vmul.f32 %v1288, 2.0
    %v1305 = vmul.f32 %v1289, 2.0
    %v1306 = vmul.f32 %v1290, 2.0
    %v1307 = vmul.f32 %v1291, 2.0
    %v1308 = vmul.f32 %v1292, 2.0
    %v1309 = vmul.f32 %v1293, 2.0
    %v1310 = vmul.f32 %v1294, 2.0
    %v1311 = vmul.f32 %v1295, 2.0
    %v1312 = vmul.f32 %v1296, 2.0
    %v1313 = vsub.f32 1.0, %v1297
    %v1314 = vsub.f32 1.0, %v1298
    %v1315 = vsub.f32 1.0, %v1299
    %v1316 = vsub.f32 1.0, %v1300
    %v1317 = vsub.f32 1.0, %v1301
    %v1318 = vsub.f32 1.0, %v1302
    %v1319 = vsub.f32 1.0, %v1303
    %v1320 = vsub.f32 1.0, %v1304
    %v1321 = vsub.f32 1.0, %v1305
    %v1322 = vsub.f32 1.0, %v1306
    %v1323 = vsub.f32 1.0, %v1307
    %v1324 = vsub.f32 1.0, %v1308
    %v1325 = vsub.f32 1.0, %v1309
    %v1326 = vsub.f32 1.0, %v1310
    %v1327 = vsub.f32 1.0, %v1311
    %v1328 = vsub.f32 1.0, %v1312
    %v1329 = vmul.f32 %v1217, 1.442695
    %v1330 = vpow.pop %v1329
    %v1331 = vmul.f32 %v1218, 1.442695
    %v1332 = vpow.pop %v1331
    %v1333 = vmul.f32 %v1219, 1.442695
    %v1334 = vpow.pop %v1333
    %v1335 = vmul.f32 %v1220, 1.442695
    %v1336 = vpow.pop %v1335
    %v1337 = vmul.f32 %v1221, 1.442695
    %v1338 = vpow.pop %v1337
    %v1339 = vmul.f32 %v1222, 1.442695
    %v1340 = vpow.pop %v1339
    %v1341 = vmul.f32 %v1223, 1.442695
    %v1342 = vpow.pop %v1341
    %v1343 = vmul.f32 %v1224, 1.442695
    %v1344 = vpow.pop %v1343
    %v1345 = vmul.f32 %v1225, 1.442695
    %v1346 = vpow.pop %v1345
    %v1347 = vmul.f32 %v1226, 1.442695
    %v1348 = vpow.pop %v1347
    %v1349 = vmul.f32 %v1227, 1.442695
    %v1350 = vpow.pop %v1349
    %v1351 = vmul.f32 %v1228, 1.442695
    %v1352 = vpow.pop %v1351
    %v1353 = vmul.f32 %v1229, 1.442695
    %v1354 = vpow.pop %v1353
    %v1355 = vmul.f32 %v1230, 1.442695
    %v1356 = vpow.pop %v1355
    %v1357 = vmul.f32 %v1231, 1.442695
    %v1358 = vpow.pop %v1357
    %v1359 = vmul.f32 %v1232, 1.442695
    %v1360 = vpow.pop %v1359
    %v1361 = vmul.f32 %v1313, %v1330
    %v1362 = vmul.f32 %v1314, %v1332
    %v1363 = vmul.f32 %v1315, %v1334
    %v1364 = vmul.f32 %v1316, %v1336
    %v1365 = vmul.f32 %v1317, %v1338
    %v1366 = vmul.f32 %v1318, %v1340
    %v1367 = vmul.f32 %v1319, %v1342
    %v1368 = vmul.f32 %v1320, %v1344
    %v1369 = vmul.f32 %v1321, %v1346
    %v1370 = vmul.f32 %v1322, %v1348
    %v1371 = vmul.f32 %v1323, %v1350
    %v1372 = vmul.f32 %v1324, %v1352
    %v1373 = vmul.f32 %v1325, %v1354
    %v1374 = vmul.f32 %v1326, %v1356
    %v1375 = vmul.f32 %v1327, %v1358
    %v1376 = vmul.f32 %v1328, %v1360
    %vm1377 = vcmp.lt.f32.partialorder %v611, 0.5
    %vm1378 = vcmp.lt.f32.partialorder %v617, 0.5
    %vm1379 = vcmp.lt.f32.partialorder %v623, 0.5
    %vm1380 = vcmp.lt.f32.partialorder %v629, 0.5
    %vm1381 = vcmp.lt.f32.partialorder %v635, 0.5
    %vm1382 = vcmp.lt.f32.partialorder %v641, 0.5
    %vm1383 = vcmp.lt.f32.partialorder %v647, 0.5
    %vm1384 = vcmp.lt.f32.partialorder %v653, 0.5
    %vm1385 = vcmp.lt.f32.partialorder %v659, 0.5
    %vm1386 = vcmp.lt.f32.partialorder %v665, 0.5
    %vm1387 = vcmp.lt.f32.partialorder %v671, 0.5
    %vm1388 = vcmp.lt.f32.partialorder %v677, 0.5
    %vm1389 = vcmp.lt.f32.partialorder %v683, 0.5
    %vm1390 = vcmp.lt.f32.partialorder %v689, 0.5
    %vm1391 = vcmp.lt.f32.partialorder %v695, 0.5
    %vm1392 = vcmp.lt.f32.partialorder %v701, 0.5
    %v1393 = vsel %vm1377, %v1361, 0.0
    %v1394 = vsel %vm1378, %v1362, 0.0
    %v1395 = vsel %vm1379, %v1363, 0.0
    %v1396 = vsel %vm1380, %v1364, 0.0
    %v1397 = vsel %vm1381, %v1365, 0.0
    %v1398 = vsel %vm1382, %v1366, 0.0
    %v1399 = vsel %vm1383, %v1367, 0.0
    %v1400 = vsel %vm1384, %v1368, 0.0
    %v1401 = vsel %vm1385, %v1369, 0.0
    %v1402 = vsel %vm1386, %v1370, 0.0
    %v1403 = vsel %vm1387, %v1371, 0.0
    %v1404 = vsel %vm1388, %v1372, 0.0
    %v1405 = vsel %vm1389, %v1373, 0.0
    %v1406 = vsel %vm1390, %v1374, 0.0
    %v1407 = vsel %vm1391, %v1375, 0.0
    %v1408 = vsel %vm1392, %v1376, 0.0
    %1410 = vset.pattern.permute.xlu0 0
    %1411 = vperm.xlu0 %1410, %v163
    %v1412 = vpop.permute.xlu0 %1411
    %1415 = vset.pattern.permute.xlu0 0
    %1416 = vperm.xlu0 %1415, %v164
    %v1417 = vpop.permute.xlu0 %1416
    %1420 = vset.pattern.permute.xlu0 0
    %1421 = vperm.xlu0 %1420, %v165
    %v1422 = vpop.permute.xlu0 %1421
    %1425 = vset.pattern.permute.xlu0 0
    %1426 = vperm.xlu0 %1425, %v166
    %v1427 = vpop.permute.xlu0 %1426
    %1430 = vset.pattern.permute.xlu0 0
    %1431 = vperm.xlu0 %1430, %v167
    %v1432 = vpop.permute.xlu0 %1431
    %1435 = vset.pattern.permute.xlu0 0
    %1436 = vperm.xlu0 %1435, %v168
    %v1437 = vpop.permute.xlu0 %1436
    %1440 = vset.pattern.permute.xlu0 0
    %1441 = vperm.xlu0 %1440, %v169
    %v1442 = vpop.permute.xlu0 %1441
    %1445 = vset.pattern.permute.xlu0 0
    %1446 = vperm.xlu0 %1445, %v170
    %v1447 = vpop.permute.xlu0 %1446
    %1450 = vset.pattern.permute.xlu0 0
    %1451 = vperm.xlu0 %1450, %v171
    %v1452 = vpop.permute.xlu0 %1451
    %1455 = vset.pattern.permute.xlu0 0
    %1456 = vperm.xlu0 %1455, %v172
    %v1457 = vpop.permute.xlu0 %1456
    %1460 = vset.pattern.permute.xlu0 0
    %1461 = vperm.xlu0 %1460, %v173
    %v1462 = vpop.permute.xlu0 %1461
    %1465 = vset.pattern.permute.xlu0 0
    %1466 = vperm.xlu0 %1465, %v174
    %v1467 = vpop.permute.xlu0 %1466
    %1470 = vset.pattern.permute.xlu0 0
    %1471 = vperm.xlu0 %1470, %v175
    %v1472 = vpop.permute.xlu0 %1471
    %1475 = vset.pattern.permute.xlu0 0
    %1476 = vperm.xlu0 %1475, %v176
    %v1477 = vpop.permute.xlu0 %1476
    %1480 = vset.pattern.permute.xlu0 0
    %1481 = vperm.xlu0 %1480, %v177
    %v1482 = vpop.permute.xlu0 %1481
    %1485 = vset.pattern.permute.xlu0 0
    %1486 = vperm.xlu0 %1485, %v178
    %v1487 = vpop.permute.xlu0 %1486
    %v1489 = vmul.f32 %v1393, %v1412
    %v1490 = vmul.f32 %v1394, %v1417
    %v1491 = vmul.f32 %v1395, %v1422
    %v1492 = vmul.f32 %v1396, %v1427
    %v1493 = vmul.f32 %v1397, %v1432
    %v1494 = vmul.f32 %v1398, %v1437
    %v1495 = vmul.f32 %v1399, %v1442
    %v1496 = vmul.f32 %v1400, %v1447
    %v1497 = vmul.f32 %v1401, %v1452
    %v1498 = vmul.f32 %v1402, %v1457
    %v1499 = vmul.f32 %v1403, %v1462
    %v1500 = vmul.f32 %v1404, %v1467
    %v1501 = vmul.f32 %v1405, %v1472
    %v1502 = vmul.f32 %v1406, %v1477
    %v1503 = vmul.f32 %v1407, %v1482
    %v1504 = vmul.f32 %v1408, %v1487
    %vm1505 = vcmp.gt.f32.partialorder %v611, 0.5
    %vm1506 = vcmp.gt.f32.partialorder %v617, 0.5
    %vm1507 = vcmp.gt.f32.partialorder %v623, 0.5
    %vm1508 = vcmp.gt.f32.partialorder %v629, 0.5
    %vm1509 = vcmp.gt.f32.partialorder %v635, 0.5
    %vm1510 = vcmp.gt.f32.partialorder %v641, 0.5
    %vm1511 = vcmp.gt.f32.partialorder %v647, 0.5
    %vm1512 = vcmp.gt.f32.partialorder %v653, 0.5
    %vm1513 = vcmp.gt.f32.partialorder %v659, 0.5
    %vm1514 = vcmp.gt.f32.partialorder %v665, 0.5
    %vm1515 = vcmp.gt.f32.partialorder %v671, 0.5
    %vm1516 = vcmp.gt.f32.partialorder %v677, 0.5
    %vm1517 = vcmp.gt.f32.partialorder %v683, 0.5
    %vm1518 = vcmp.gt.f32.partialorder %v689, 0.5
    %vm1519 = vcmp.gt.f32.partialorder %v695, 0.5
    %vm1520 = vcmp.gt.f32.partialorder %v701, 0.5
    %vm1521 = vcmp.lt.f32.partialorder %v611, 1.5
    %vm1522 = vcmp.lt.f32.partialorder %v617, 1.5
    %vm1523 = vcmp.lt.f32.partialorder %v623, 1.5
    %vm1524 = vcmp.lt.f32.partialorder %v629, 1.5
    %vm1525 = vcmp.lt.f32.partialorder %v635, 1.5
    %vm1526 = vcmp.lt.f32.partialorder %v641, 1.5
    %vm1527 = vcmp.lt.f32.partialorder %v647, 1.5
    %vm1528 = vcmp.lt.f32.partialorder %v653, 1.5
    %vm1529 = vcmp.lt.f32.partialorder %v659, 1.5
    %vm1530 = vcmp.lt.f32.partialorder %v665, 1.5
    %vm1531 = vcmp.lt.f32.partialorder %v671, 1.5
    %vm1532 = vcmp.lt.f32.partialorder %v677, 1.5
    %vm1533 = vcmp.lt.f32.partialorder %v683, 1.5
    %vm1534 = vcmp.lt.f32.partialorder %v689, 1.5
    %vm1535 = vcmp.lt.f32.partialorder %v695, 1.5
    %vm1536 = vcmp.lt.f32.partialorder %v701, 1.5
    %vm1537 = vmand %vm1505, %vm1521
    %vm1538 = vmand %vm1506, %vm1522
    %vm1539 = vmand %vm1507, %vm1523
    %vm1540 = vmand %vm1508, %vm1524
    %vm1541 = vmand %vm1509, %vm1525
    %vm1542 = vmand %vm1510, %vm1526
    %vm1543 = vmand %vm1511, %vm1527
    %vm1544 = vmand %vm1512, %vm1528
    %vm1545 = vmand %vm1513, %vm1529
    %vm1546 = vmand %vm1514, %vm1530
    %vm1547 = vmand %vm1515, %vm1531
    %vm1548 = vmand %vm1516, %vm1532
    %vm1549 = vmand %vm1517, %vm1533
    %vm1550 = vmand %vm1518, %vm1534
    %vm1551 = vmand %vm1519, %vm1535
    %vm1552 = vmand %vm1520, %vm1536
    %v1553 = vsel %vm1537, %v1361, 0.0
    %v1554 = vsel %vm1538, %v1362, 0.0
    %v1555 = vsel %vm1539, %v1363, 0.0
    %v1556 = vsel %vm1540, %v1364, 0.0
    %v1557 = vsel %vm1541, %v1365, 0.0
    %v1558 = vsel %vm1542, %v1366, 0.0
    %v1559 = vsel %vm1543, %v1367, 0.0
    %v1560 = vsel %vm1544, %v1368, 0.0
    %v1561 = vsel %vm1545, %v1369, 0.0
    %v1562 = vsel %vm1546, %v1370, 0.0
    %v1563 = vsel %vm1547, %v1371, 0.0
    %v1564 = vsel %vm1548, %v1372, 0.0
    %v1565 = vsel %vm1549, %v1373, 0.0
    %v1566 = vsel %vm1550, %v1374, 0.0
    %v1567 = vsel %vm1551, %v1375, 0.0
    %v1568 = vsel %vm1552, %v1376, 0.0
    %1569 = vmatprep.subr.mxu0 %v1504
    %1570 = vmatpush1.msra.mxu0 %v1024
    %1571 = vmatprep.subr.mxu0 %v1503
    %1572 = vmatpush1.msra.mxu0 %v1023
    %1573 = vmatprep.subr.mxu0 %v1502
    %1574 = vmatpush1.msra.mxu0 %v1022
    %1575 = vmatprep.subr.mxu0 %v1501
    %1576 = vmatpush1.msra.mxu0 %v1021
    %1577 = vmatprep.subr.mxu0 %v1500
    %1578 = vmatpush1.msra.mxu0 %v1020
    %1579 = vmatprep.subr.mxu0 %v1499
    %1580 = vmatpush1.msra.mxu0 %v1019
    %1581 = vmatprep.subr.mxu0 %v1498
    %1582 = vmatpush1.msra.mxu0 %v1018
    %1583 = vmatprep.subr.mxu0 %v1497
    %1584 = vmatpush1.msra.mxu0 %v1017
    %1585 = vmatprep.subr.mxu0 %v1496
    %1586 = vmatpush1.msra.mxu0 %v1016
    %1587 = vmatprep.subr.mxu0 %v1495
    %1588 = vmatpush1.msra.mxu0 %v1015
    %1589 = vmatprep.subr.mxu0 %v1494
    %1590 = vmatpush1.msra.mxu0 %v1014
    %1591 = vmatprep.subr.mxu0 %v1493
    %1592 = vmatpush1.msra.mxu0 %v1013
    %1593 = vmatprep.subr.mxu0 %v1492
    %1594 = vmatpush1.msra.mxu0 %v1012
    %1595 = vmatprep.subr.mxu0 %v1491
    %1596 = vmatpush1.msra.mxu0 %v1011
    %1597 = vmatprep.subr.mxu0 %v1490
    %1598 = vmatpush1.msra.mxu0 %v1010
    %1599 = vmatprep.subr.mxu0 %v1489
    %1600 = vmatpush1.msra.mxu0 %v1009
    %1601 = vmatprep.subr.mxu0 0.0
    %1602 = vmatpush2.msra.mxu0 0.0
    %1603 = vmatprep.subr.mxu0 0.0
    %1604 = vmatpush2.msra.mxu0 0.0
    %1605 = vmatprep.subr.mxu0 0.0
    %1606 = vmatpush2.msra.mxu0 0.0
    %1607 = vmatprep.subr.mxu0 0.0
    %1608 = vmatpush2.msra.mxu0 0.0
    %1609 = vmatprep.subr.mxu0 0.0
    %1610 = vmatpush2.msra.mxu0 0.0
    %1611 = vmatprep.subr.mxu0 0.0
    %1612 = vmatpush2.msra.mxu0 0.0
    %1613 = vmatprep.subr.mxu0 0.0
    %1614 = vmatpush2.msra.mxu0 0.0
    %1615 = vmatprep.subr.mxu0 0.0
    %1616 = vmatpush2.msra.mxu0 0.0
    %1617 = vmatprep.subr.mxu0 0.0
    %1618 = vmatpush2.msra.mxu0 0.0
    %1619 = vmatprep.subr.mxu0 0.0
    %1620 = vmatpush2.msra.mxu0 0.0
    %1621 = vmatprep.subr.mxu0 0.0
    %1622 = vmatpush2.msra.mxu0 0.0
    %1623 = vmatprep.subr.mxu0 0.0
    %1624 = vmatpush2.msra.mxu0 0.0
    %1625 = vmatprep.subr.mxu0 0.0
    %1626 = vmatpush2.msra.mxu0 0.0
    %1627 = vmatprep.subr.mxu0 0.0
    %1628 = vmatpush2.msra.mxu0 0.0
    %1629 = vmatprep.subr.mxu0 0.0
    %1630 = vmatpush2.msra.mxu0 0.0
    %1631 = vmatprep.subr.mxu0 0.0
    %1632 = vmatpush2.msra.mxu0 0.0
    %1633 = vmatprep.mubr.f32.mxu0 0.0
    %1634 = vmatmul.mubr.f32.gmra.mxu0 %v143
    %v1635 = vpop.f32.mrf.mxu0
    %v1636 = vadd.f32 0.0, %v1635
    %v1637 = vpop.f32.mrf.mxu0
    %v1638 = vadd.f32 0.0, %v1637
    %1639 = vmatprep.mubr.f32.mxu0 0.0
    %1640 = vmatmul.mubr.f32.gmra.mxu0 %v144
    %v1641 = vpop.f32.mrf.mxu0
    %v1642 = vadd.f32 0.0, %v1641
    %v1643 = vpop.f32.mrf.mxu0
    %v1644 = vadd.f32 0.0, %v1643
    %1645 = vdwg.mxu0
    %1646 = vmatprep.subr.mxu0 0.0
    %1647 = vmatpush1.msra.mxu0 %v1568
    %1648 = vmatprep.subr.mxu0 0.0
    %1649 = vmatpush1.msra.mxu0 %v1567
    %1650 = vmatprep.subr.mxu0 0.0
    %1651 = vmatpush1.msra.mxu0 %v1566
    %1652 = vmatprep.subr.mxu0 0.0
    %1653 = vmatpush1.msra.mxu0 %v1565
    %1654 = vmatprep.subr.mxu0 0.0
    %1655 = vmatpush1.msra.mxu0 %v1564
    %1656 = vmatprep.subr.mxu0 0.0
    %1657 = vmatpush1.msra.mxu0 %v1563
    %1658 = vmatprep.subr.mxu0 0.0
    %1659 = vmatpush1.msra.mxu0 %v1562
    %1660 = vmatprep.subr.mxu0 0.0
    %1661 = vmatpush1.msra.mxu0 %v1561
    %1662 = vmatprep.subr.mxu0 0.0
    %1663 = vmatpush1.msra.mxu0 %v1560
    %1664 = vmatprep.subr.mxu0 0.0
    %1665 = vmatpush1.msra.mxu0 %v1559
    %1666 = vmatprep.subr.mxu0 0.0
    %1667 = vmatpush1.msra.mxu0 %v1558
    %1668 = vmatprep.subr.mxu0 0.0
    %1669 = vmatpush1.msra.mxu0 %v1557
    %1670 = vmatprep.subr.mxu0 0.0
    %1671 = vmatpush1.msra.mxu0 %v1556
    %1672 = vmatprep.subr.mxu0 0.0
    %1673 = vmatpush1.msra.mxu0 %v1555
    %1674 = vmatprep.subr.mxu0 0.0
    %1675 = vmatpush1.msra.mxu0 %v1554
    %1676 = vmatprep.subr.mxu0 0.0
    %1677 = vmatpush1.msra.mxu0 %v1553
    %1678 = vmatprep.subr.mxu0 0.0
    %1679 = vmatpush2.msra.mxu0 0.0
    %1680 = vmatprep.subr.mxu0 0.0
    %1681 = vmatpush2.msra.mxu0 0.0
    %1682 = vmatprep.subr.mxu0 0.0
    %1683 = vmatpush2.msra.mxu0 0.0
    %1684 = vmatprep.subr.mxu0 0.0
    %1685 = vmatpush2.msra.mxu0 0.0
    %1686 = vmatprep.subr.mxu0 0.0
    %1687 = vmatpush2.msra.mxu0 0.0
    %1688 = vmatprep.subr.mxu0 0.0
    %1689 = vmatpush2.msra.mxu0 0.0
    %1690 = vmatprep.subr.mxu0 0.0
    %1691 = vmatpush2.msra.mxu0 0.0
    %1692 = vmatprep.subr.mxu0 0.0
    %1693 = vmatpush2.msra.mxu0 0.0
    %1694 = vmatprep.subr.mxu0 0.0
    %1695 = vmatpush2.msra.mxu0 0.0
    %1696 = vmatprep.subr.mxu0 0.0
    %1697 = vmatpush2.msra.mxu0 0.0
    %1698 = vmatprep.subr.mxu0 0.0
    %1699 = vmatpush2.msra.mxu0 0.0
    %1700 = vmatprep.subr.mxu0 0.0
    %1701 = vmatpush2.msra.mxu0 0.0
    %1702 = vmatprep.subr.mxu0 0.0
    %1703 = vmatpush2.msra.mxu0 0.0
    %1704 = vmatprep.subr.mxu0 0.0
    %1705 = vmatpush2.msra.mxu0 0.0
    %1706 = vmatprep.subr.mxu0 0.0
    %1707 = vmatpush2.msra.mxu0 0.0
    %1708 = vmatprep.subr.mxu0 0.0
    %1709 = vmatpush2.msra.mxu0 0.0
    %1710 = vmatprep.mubr.f32.mxu0 0.0
    %1711 = vmatmul.mubr.f32.gmra.mxu0 %v161
    %v1712 = vpop.f32.mrf.mxu0
    %v1713 = vadd.f32 0.0, %v1712
    %v1714 = vpop.f32.mrf.mxu0
    %1715 = vmatprep.mubr.f32.mxu0 0.0
    %1716 = vmatmul.mubr.f32.gmra.mxu0 %v162
    %v1717 = vpop.f32.mrf.mxu0
    %v1718 = vadd.f32 0.0, %v1717
    %v1719 = vpop.f32.mrf.mxu0
    %1720 = vdwg.mxu0
    %v1721 = vsel %vm461, 1.0, %v368
    %v1722 = vsel %vm462, 1.0, %v374
    %v1723 = vrcp.pop %v1721
    %v1724 = vrcp.pop %v1722
    %v1725 = vmul.f32 %v1638, %v1723
    %v1726 = vmul.f32 %v1644, %v1724
    %v1727 = vsel %vm461, %v1713, %v1725
    %v1728 = vsel %vm462, %v1718, %v1726
    %1729 = vmatprep.subr.mxu0 0.0
    %1730 = vmatpush1.msra.mxu0 %v288
    %1731 = vmatprep.subr.mxu0 0.0
    %1732 = vmatpush1.msra.mxu0 %v287
    %1733 = vmatprep.subr.mxu0 0.0
    %1734 = vmatpush1.msra.mxu0 %v286
    %1735 = vmatprep.subr.mxu0 0.0
    %1736 = vmatpush1.msra.mxu0 %v285
    %1737 = vmatprep.subr.mxu0 0.0
    %1738 = vmatpush1.msra.mxu0 %v284
    %1739 = vmatprep.subr.mxu0 0.0
    %1740 = vmatpush1.msra.mxu0 %v283
    %1741 = vmatprep.subr.mxu0 0.0
    %1742 = vmatpush1.msra.mxu0 %v282
    %1743 = vmatprep.subr.mxu0 0.0
    %1744 = vmatpush1.msra.mxu0 %v281
    %1745 = vmatprep.subr.mxu0 0.0
    %1746 = vmatpush1.msra.mxu0 %v280
    %1747 = vmatprep.subr.mxu0 0.0
    %1748 = vmatpush1.msra.mxu0 %v279
    %1749 = vmatprep.subr.mxu0 0.0
    %1750 = vmatpush1.msra.mxu0 %v278
    %1751 = vmatprep.subr.mxu0 0.0
    %1752 = vmatpush1.msra.mxu0 %v277
    %1753 = vmatprep.subr.mxu0 0.0
    %1754 = vmatpush1.msra.mxu0 %v276
    %1755 = vmatprep.subr.mxu0 0.0
    %1756 = vmatpush1.msra.mxu0 %v275
    %1757 = vmatprep.subr.mxu0 0.0
    %1758 = vmatpush1.msra.mxu0 %v274
    %1759 = vmatprep.subr.mxu0 0.0
    %1760 = vmatpush1.msra.mxu0 %v273
    %1761 = vmatprep.subr.mxu0 0.0
    %1762 = vmatpush2.msra.mxu0 0.0
    %1763 = vmatprep.subr.mxu0 0.0
    %1764 = vmatpush2.msra.mxu0 0.0
    %1765 = vmatprep.subr.mxu0 0.0
    %1766 = vmatpush2.msra.mxu0 0.0
    %1767 = vmatprep.subr.mxu0 0.0
    %1768 = vmatpush2.msra.mxu0 0.0
    %1769 = vmatprep.subr.mxu0 0.0
    %1770 = vmatpush2.msra.mxu0 0.0
    %1771 = vmatprep.subr.mxu0 0.0
    %1772 = vmatpush2.msra.mxu0 0.0
    %1773 = vmatprep.subr.mxu0 0.0
    %1774 = vmatpush2.msra.mxu0 0.0
    %1775 = vmatprep.subr.mxu0 0.0
    %1776 = vmatpush2.msra.mxu0 0.0
    %1777 = vmatprep.subr.mxu0 0.0
    %1778 = vmatpush2.msra.mxu0 0.0
    %1779 = vmatprep.subr.mxu0 0.0
    %1780 = vmatpush2.msra.mxu0 0.0
    %1781 = vmatprep.subr.mxu0 0.0
    %1782 = vmatpush2.msra.mxu0 0.0
    %1783 = vmatprep.subr.mxu0 0.0
    %1784 = vmatpush2.msra.mxu0 0.0
    %1785 = vmatprep.subr.mxu0 0.0
    %1786 = vmatpush2.msra.mxu0 0.0
    %1787 = vmatprep.subr.mxu0 0.0
    %1788 = vmatpush2.msra.mxu0 0.0
    %1789 = vmatprep.subr.mxu0 0.0
    %1790 = vmatpush2.msra.mxu0 0.0
    %1791 = vmatprep.subr.mxu0 0.0
    %1792 = vmatpush2.msra.mxu0 0.0
    %1793 = vmatprep.mubr.f32.mxu0 0.0
    %1794 = vmatmul.mubr.f32.gmra.mxu0 %v1727
    %v1795 = vpop.f32.mrf.mxu0
    %v1796 = vadd.f32 %v1636, %v1795
    %v1797 = vpop.f32.mrf.mxu0
    %1798 = vmatprep.mubr.f32.mxu0 0.0
    %1799 = vmatmul.mubr.f32.gmra.mxu0 %v1728
    %v1800 = vpop.f32.mrf.mxu0
    %v1801 = vadd.f32 %v1642, %v1800
    %v1802 = vpop.f32.mrf.mxu0
    %1803 = vdwg.mxu0
    %1805 = vset.pattern.permute.xlu0 0
    %1806 = vperm.xlu0 %1805, %v211
    %v1807 = vpop.permute.xlu0 %1806
    %1810 = vset.pattern.permute.xlu0 0
    %1811 = vperm.xlu0 %1810, %v212
    %v1812 = vpop.permute.xlu0 %1811
    %v1814 = vmul.f32 %v1807, %v1796
    %v1815 = vmul.f32 %v1812, %v1801
    %1817 = vset.pattern.permute.xlu0 0
    %1818 = vperm.xlu0 %1817, %v219
    %v1819 = vpop.permute.xlu0 %1818
    %1822 = vset.pattern.permute.xlu0 0
    %1823 = vperm.xlu0 %1822, %v220
    %v1824 = vpop.permute.xlu0 %1823
    %v1827 = vlaneseq
    %v1828 = vshrl.u32 %v1827, 7
    %v1829 = vsub.s32 0, %v1828
    %v1830 = vrot.slane %v289, %v1829
    %v1832 = vmul.f32 %v1819, %v1830
    %v1833 = vmul.f32 %v1824, %v1830
    %v1834 = vadd.f32 %v1814, %v1832
    %v1835 = vadd.f32 %v1815, %v1833
    %v1836 = vmax.f32 %v1834, 0.0
    %v1837 = vmax.f32 %v1835, 0.0
    %v1838 = vld [vmem:[%s15] sm:$0xff]
    %v1839 = vld [vmem:[%s15 + $0x8] sm:$0xff]
    %v1840 = vld [vmem:[%s15 + $0x10] sm:$0xff]
    %v1841 = vld [vmem:[%s15 + $0x18] sm:$0xff]
    %v1842 = vld [vmem:[%s15 + $0x20] sm:$0xff]
    %v1843 = vld [vmem:[%s15 + $0x28] sm:$0xff]
    %v1844 = vld [vmem:[%s15 + $0x30] sm:$0xff]
    %v1845 = vld [vmem:[%s15 + $0x38] sm:$0xff]
    %v1846 = vld [vmem:[%s15 + $0x40] sm:$0xff]
    %v1847 = vld [vmem:[%s15 + $0x48] sm:$0xff]
    %v1848 = vld [vmem:[%s15 + $0x50] sm:$0xff]
    %v1849 = vld [vmem:[%s15 + $0x58] sm:$0xff]
    %v1850 = vld [vmem:[%s15 + $0x60] sm:$0xff]
    %v1851 = vld [vmem:[%s15 + $0x68] sm:$0xff]
    %v1852 = vld [vmem:[%s15 + $0x70] sm:$0xff]
    %v1853 = vld [vmem:[%s15 + $0x78] sm:$0xff]
    %v1854 = vld [vmem:[%s15 + $0x80] sm:$0xff]
    %v1855 = vld [vmem:[%s15 + $0x88] sm:$0xff]
    %v1856 = vld [vmem:[%s15 + $0x90] sm:$0xff]
    %v1857 = vld [vmem:[%s15 + $0x98] sm:$0xff]
    %v1858 = vld [vmem:[%s15 + $0xa0] sm:$0xff]
    %v1859 = vld [vmem:[%s15 + $0xa8] sm:$0xff]
    %v1860 = vld [vmem:[%s15 + $0xb0] sm:$0xff]
    %v1861 = vld [vmem:[%s15 + $0xb8] sm:$0xff]
    %v1862 = vld [vmem:[%s15 + $0xc0] sm:$0xff]
    %v1863 = vld [vmem:[%s15 + $0xc8] sm:$0xff]
    %v1864 = vld [vmem:[%s15 + $0xd0] sm:$0xff]
    %v1865 = vld [vmem:[%s15 + $0xd8] sm:$0xff]
    %v1866 = vld [vmem:[%s15 + $0xe0] sm:$0xff]
    %v1867 = vld [vmem:[%s15 + $0xe8] sm:$0xff]
    %v1868 = vld [vmem:[%s15 + $0xf0] sm:$0xff]
    %v1869 = vld [vmem:[%s15 + $0xf8] sm:$0xff]
    %v1870 = vld [vmem:[%s16] sm:$0x3]
    %v1871 = vld [vmem:[#allocation7] sm:$0xff]
    %v1872 = vld [vmem:[#allocation7 + $0x8] sm:$0xff]
    %v1873 = vld [vmem:[#allocation7 + $0x10] sm:$0xff]
    %v1874 = vld [vmem:[#allocation7 + $0x18] sm:$0xff]
    %v1875 = vld [vmem:[#allocation7 + $0x20] sm:$0xff]
    %v1876 = vld [vmem:[#allocation7 + $0x28] sm:$0xff]
    %v1877 = vld [vmem:[#allocation7 + $0x30] sm:$0xff]
    %v1878 = vld [vmem:[#allocation7 + $0x38] sm:$0xff]
    %v1879 = vld [vmem:[#allocation7 + $0x40] sm:$0xff]
    %v1880 = vld [vmem:[#allocation7 + $0x48] sm:$0xff]
    %v1881 = vld [vmem:[#allocation7 + $0x50] sm:$0xff]
    %v1882 = vld [vmem:[#allocation7 + $0x58] sm:$0xff]
    %v1883 = vld [vmem:[#allocation7 + $0x60] sm:$0xff]
    %v1884 = vld [vmem:[#allocation7 + $0x68] sm:$0xff]
    %v1885 = vld [vmem:[#allocation7 + $0x70] sm:$0xff]
    %v1886 = vld [vmem:[#allocation7 + $0x78] sm:$0xff]
    %v1887 = vld [vmem:[%s18] sm:$0x1]
    %v1888 = vld [vmem:[#allocation8] sm:$0xff]
    %v1889 = vld [vmem:[#allocation8 + $0x8] sm:$0xff]
    %v1890 = vld [vmem:[#allocation8 + $0x10] sm:$0xff]
    %v1891 = vld [vmem:[#allocation8 + $0x18] sm:$0xff]
    %v1892 = vld [vmem:[#allocation8 + $0x20] sm:$0xff]
    %v1893 = vld [vmem:[#allocation8 + $0x28] sm:$0xff]
    %v1894 = vld [vmem:[#allocation8 + $0x30] sm:$0xff]
    %v1895 = vld [vmem:[#allocation8 + $0x38] sm:$0xff]
    %v1896 = vld [vmem:[#allocation8 + $0x40] sm:$0xff]
    %v1897 = vld [vmem:[#allocation8 + $0x48] sm:$0xff]
    %v1898 = vld [vmem:[#allocation8 + $0x50] sm:$0xff]
    %v1899 = vld [vmem:[#allocation8 + $0x58] sm:$0xff]
    %v1900 = vld [vmem:[#allocation8 + $0x60] sm:$0xff]
    %v1901 = vld [vmem:[#allocation8 + $0x68] sm:$0xff]
    %v1902 = vld [vmem:[#allocation8 + $0x70] sm:$0xff]
    %v1903 = vld [vmem:[#allocation8 + $0x78] sm:$0xff]
    %v1904 = vld [vmem:[%s20] sm:$0x1]
    %v1906 = vlaneseq
    %v1907 = vshrl.u32 %v1906, 7
    %v1908 = vsub.s32 0, %v1907
    %v1909 = vrot.slane %v1870, %v1908
    %v1910 = vlaneseq
    %v1911 = vshrl.u32 %v1910, 7
    %v1912 = vsub.s32 1, %v1911
    %v1913 = vrot.slane %v1870, %v1912
    %1916 = vmatprep.subr.mxu0 %v1869
    %1917 = vmatpush1.msra.mxu0 %v1868
    %1918 = vmatprep.subr.mxu0 %v1867
    %1919 = vmatpush1.msra.mxu0 %v1866
    %1920 = vmatprep.subr.mxu0 %v1865
    %1921 = vmatpush1.msra.mxu0 %v1864
    %1922 = vmatprep.subr.mxu0 %v1863
    %1923 = vmatpush1.msra.mxu0 %v1862
    %1924 = vmatprep.subr.mxu0 %v1861
    %1925 = vmatpush1.msra.mxu0 %v1860
    %1926 = vmatprep.subr.mxu0 %v1859
    %1927 = vmatpush1.msra.mxu0 %v1858
    %1928 = vmatprep.subr.mxu0 %v1857
    %1929 = vmatpush1.msra.mxu0 %v1856
    %1930 = vmatprep.subr.mxu0 %v1855
    %1931 = vmatpush1.msra.mxu0 %v1854
    %1932 = vmatprep.subr.mxu0 %v1853
    %1933 = vmatpush1.msra.mxu0 %v1852
    %1934 = vmatprep.subr.mxu0 %v1851
    %1935 = vmatpush1.msra.mxu0 %v1850
    %1936 = vmatprep.subr.mxu0 %v1849
    %1937 = vmatpush1.msra.mxu0 %v1848
    %1938 = vmatprep.subr.mxu0 %v1847
    %1939 = vmatpush1.msra.mxu0 %v1846
    %1940 = vmatprep.subr.mxu0 %v1845
    %1941 = vmatpush1.msra.mxu0 %v1844
    %1942 = vmatprep.subr.mxu0 %v1843
    %1943 = vmatpush1.msra.mxu0 %v1842
    %1944 = vmatprep.subr.mxu0 %v1841
    %1945 = vmatpush1.msra.mxu0 %v1840
    %1946 = vmatprep.subr.mxu0 %v1839
    %1947 = vmatpush1.msra.mxu0 %v1838
    %1948 = vmatprep.subr.mxu0 0.0
    %1949 = vmatpush2.msra.mxu0 0.0
    %1950 = vmatprep.subr.mxu0 0.0
    %1951 = vmatpush2.msra.mxu0 0.0
    %1952 = vmatprep.subr.mxu0 0.0
    %1953 = vmatpush2.msra.mxu0 0.0
    %1954 = vmatprep.subr.mxu0 0.0
    %1955 = vmatpush2.msra.mxu0 0.0
    %1956 = vmatprep.subr.mxu0 0.0
    %1957 = vmatpush2.msra.mxu0 0.0
    %1958 = vmatprep.subr.mxu0 0.0
    %1959 = vmatpush2.msra.mxu0 0.0
    %1960 = vmatprep.subr.mxu0 0.0
    %1961 = vmatpush2.msra.mxu0 0.0
    %1962 = vmatprep.subr.mxu0 0.0
    %1963 = vmatpush2.msra.mxu0 0.0
    %1964 = vmatprep.subr.mxu0 0.0
    %1965 = vmatpush2.msra.mxu0 0.0
    %1966 = vmatprep.subr.mxu0 0.0
    %1967 = vmatpush2.msra.mxu0 0.0
    %1968 = vmatprep.subr.mxu0 0.0
    %1969 = vmatpush2.msra.mxu0 0.0
    %1970 = vmatprep.subr.mxu0 0.0
    %1971 = vmatpush2.msra.mxu0 0.0
    %1972 = vmatprep.subr.mxu0 0.0
    %1973 = vmatpush2.msra.mxu0 0.0
    %1974 = vmatprep.subr.mxu0 0.0
    %1975 = vmatpush2.msra.mxu0 0.0
    %1976 = vmatprep.subr.mxu0 0.0
    %1977 = vmatpush2.msra.mxu0 0.0
    %1978 = vmatprep.subr.mxu0 0.0
    %1979 = vmatpush2.msra.mxu0 0.0
    %1980 = vmatprep.mubr.f32.mxu0 0.0
    %1981 = vmatmul.mubr.f32.gmra.mxu0 %v1836
    %v1982 = vpop.f32.mrf.mxu0
    %v1983 = vadd.f32 %v1909, %v1982
    %v1984 = vpop.f32.mrf.mxu0
    %v1985 = vadd.f32 %v1913, %v1984
    %1986 = vmatprep.mubr.f32.mxu0 0.0
    %1987 = vmatmul.mubr.f32.gmra.mxu0 %v1837
    %v1988 = vpop.f32.mrf.mxu0
    %v1989 = vadd.f32 %v1909, %v1988
    %v1990 = vpop.f32.mrf.mxu0
    %v1991 = vadd.f32 %v1913, %v1990
    %1992 = vdwg.mxu0
    %v1993 = vmax.f32 %v1985, 0.0
    %v1994 = vmax.f32 %v1991, 0.0
    %v1996 = vlaneseq
    %v1997 = vshrl.u32 %v1996, 7
    %v1998 = vsub.s32 0, %v1997
    %v1999 = vrot.slane %v1887, %v1998
    %2001 = vmatprep.subr.mxu0 0.0
    %2002 = vmatpush1.msra.mxu0 %v1886
    %2003 = vmatprep.subr.mxu0 0.0
    %2004 = vmatpush1.msra.mxu0 %v1885
    %2005 = vmatprep.subr.mxu0 0.0
    %2006 = vmatpush1.msra.mxu0 %v1884
    %2007 = vmatprep.subr.mxu0 0.0
    %2008 = vmatpush1.msra.mxu0 %v1883
    %2009 = vmatprep.subr.mxu0 0.0
    %2010 = vmatpush1.msra.mxu0 %v1882
    %2011 = vmatprep.subr.mxu0 0.0
    %2012 = vmatpush1.msra.mxu0 %v1881
    %2013 = vmatprep.subr.mxu0 0.0
    %2014 = vmatpush1.msra.mxu0 %v1880
    %2015 = vmatprep.subr.mxu0 0.0
    %2016 = vmatpush1.msra.mxu0 %v1879
    %2017 = vmatprep.subr.mxu0 0.0
    %2018 = vmatpush1.msra.mxu0 %v1878
    %2019 = vmatprep.subr.mxu0 0.0
    %2020 = vmatpush1.msra.mxu0 %v1877
    %2021 = vmatprep.subr.mxu0 0.0
    %2022 = vmatpush1.msra.mxu0 %v1876
    %2023 = vmatprep.subr.mxu0 0.0
    %2024 = vmatpush1.msra.mxu0 %v1875
    %2025 = vmatprep.subr.mxu0 0.0
    %2026 = vmatpush1.msra.mxu0 %v1874
    %2027 = vmatprep.subr.mxu0 0.0
    %2028 = vmatpush1.msra.mxu0 %v1873
    %2029 = vmatprep.subr.mxu0 0.0
    %2030 = vmatpush1.msra.mxu0 %v1872
    %2031 = vmatprep.subr.mxu0 0.0
    %2032 = vmatpush1.msra.mxu0 %v1871
    %2033 = vmatprep.subr.mxu0 0.0
    %2034 = vmatpush2.msra.mxu0 0.0
    %2035 = vmatprep.subr.mxu0 0.0
    %2036 = vmatpush2.msra.mxu0 0.0
    %2037 = vmatprep.subr.mxu0 0.0
    %2038 = vmatpush2.msra.mxu0 0.0
    %2039 = vmatprep.subr.mxu0 0.0
    %2040 = vmatpush2.msra.mxu0 0.0
    %2041 = vmatprep.subr.mxu0 0.0
    %2042 = vmatpush2.msra.mxu0 0.0
    %2043 = vmatprep.subr.mxu0 0.0
    %2044 = vmatpush2.msra.mxu0 0.0
    %2045 = vmatprep.subr.mxu0 0.0
    %2046 = vmatpush2.msra.mxu0 0.0
    %2047 = vmatprep.subr.mxu0 0.0
    %2048 = vmatpush2.msra.mxu0 0.0
    %2049 = vmatprep.subr.mxu0 0.0
    %2050 = vmatpush2.msra.mxu0 0.0
    %2051 = vmatprep.subr.mxu0 0.0
    %2052 = vmatpush2.msra.mxu0 0.0
    %2053 = vmatprep.subr.mxu0 0.0
    %2054 = vmatpush2.msra.mxu0 0.0
    %2055 = vmatprep.subr.mxu0 0.0
    %2056 = vmatpush2.msra.mxu0 0.0
    %2057 = vmatprep.subr.mxu0 0.0
    %2058 = vmatpush2.msra.mxu0 0.0
    %2059 = vmatprep.subr.mxu0 0.0
    %2060 = vmatpush2.msra.mxu0 0.0
    %2061 = vmatprep.subr.mxu0 0.0
    %2062 = vmatpush2.msra.mxu0 0.0
    %2063 = vmatprep.subr.mxu0 0.0
    %2064 = vmatpush2.msra.mxu0 0.0
    %2065 = vmatprep.mubr.f32.mxu0 0.0
    %2066 = vmatmul.mubr.f32.gmra.mxu0 %v1993
    %v2067 = vpop.f32.mrf.mxu0
    %v2068 = vadd.f32 %v1999, %v2067
    %v2069 = vpop.f32.mrf.mxu0
    %2070 = vmatprep.mubr.f32.mxu0 0.0
    %2071 = vmatmul.mubr.f32.gmra.mxu0 %v1994
    %v2072 = vpop.f32.mrf.mxu0
    %v2073 = vadd.f32 %v1999, %v2072
    %v2074 = vpop.f32.mrf.mxu0
    %2075 = vdwg.mxu0
    %vm2076 = vcmp.eq.f32.partialorder %v1983, 0.0
    %vm2077 = vcmp.eq.f32.partialorder %v1989, 0.0
    %v2078 = vsel %vm2076, 1, 0
    %v2079 = vsel %vm2077, 1, 0
    %v2080 = vcvt.s32.f32 %v2078
    %v2081 = vcvt.s32.f32 %v2079
    %vm2082 = vcmp.lt.f32.partialorder %v1983, 0.0
    %vm2083 = vcmp.lt.f32.partialorder %v1989, 0.0
    %v2084 = vsel %vm2082, 1, 0
    %v2085 = vsel %vm2083, 1, 0
    %v2086 = vcvt.s32.f32 %v2084
    %v2087 = vcvt.s32.f32 %v2085
    %v2088 = vand.u32 2147483647, %v1983
    %v2089 = vand.u32 2147483647, %v1989
    %v2090 = vsel %vm2076, 1.0, %v2088
    %v2091 = vsel %vm2077, 1.0, %v2089
    %v2092 = vlog2.pop %v2090
    %v2093 = vmul.f32 %v2092, 0.6931472
    %v2094 = vlog2.pop %v2091
    %v2095 = vmul.f32 %v2094, 0.6931472
    %v2096 = vmul.f32 %v484, %v2080
    %v2097 = vmul.f32 %v489, %v2081
    %2098 = vmatprep.subr.mxu0 0.0
    %2099 = vmatpush1.msra.mxu0 0.0
    %2100 = vmatprep.subr.mxu0 0.0
    %2101 = vmatpush1.msra.mxu0 0.0
    %2102 = vmatprep.subr.mxu0 0.0
    %2103 = vmatpush1.msra.mxu0 0.0
    %2104 = vmatprep.subr.mxu0 0.0
    %2105 = vmatpush1.msra.mxu0 0.0
    %2106 = vmatprep.subr.mxu0 0.0
    %2107 = vmatpush1.msra.mxu0 0.0
    %2108 = vmatprep.subr.mxu0 0.0
    %2109 = vmatpush1.msra.mxu0 0.0
    %2110 = vmatprep.subr.mxu0 0.0
    %2111 = vmatpush1.msra.mxu0 0.0
    %2112 = vmatprep.subr.mxu0 0.0
    %2113 = vmatpush1.msra.mxu0 0.0
    %2114 = vmatprep.subr.mxu0 0.0
    %2115 = vmatpush1.msra.mxu0 0.0
    %2116 = vmatprep.subr.mxu0 0.0
    %2117 = vmatpush1.msra.mxu0 0.0
    %2118 = vmatprep.subr.mxu0 0.0
    %2119 = vmatpush1.msra.mxu0 0.0
    %2120 = vmatprep.subr.mxu0 0.0
    %2121 = vmatpush1.msra.mxu0 0.0
    %2122 = vmatprep.subr.mxu0 0.0
    %2123 = vmatpush1.msra.mxu0 0.0
    %2124 = vmatprep.subr.mxu0 0.0
    %2125 = vmatpush1.msra.mxu0 0.0
    %2126 = vmatprep.subr.mxu0 %v2081
    %2127 = vmatpush1.msra.mxu0 %v2073
    %2128 = vmatprep.subr.mxu0 %v2080
    %2129 = vmatpush1.msra.mxu0 %v2068
    %2130 = vmatprep.subr.mxu0 0.0
    %2131 = vmatpush2.msra.mxu0 0.0
    %2132 = vmatprep.subr.mxu0 0.0
    %2133 = vmatpush2.msra.mxu0 0.0
    %2134 = vmatprep.subr.mxu0 0.0
    %2135 = vmatpush2.msra.mxu0 0.0
    %2136 = vmatprep.subr.mxu0 0.0
    %2137 = vmatpush2.msra.mxu0 0.0
    %2138 = vmatprep.subr.mxu0 0.0
    %2139 = vmatpush2.msra.mxu0 0.0
    %2140 = vmatprep.subr.mxu0 0.0
    %2141 = vmatpush2.msra.mxu0 0.0
    %2142 = vmatprep.subr.mxu0 0.0
    %2143 = vmatpush2.msra.mxu0 0.0
    %2144 = vmatprep.subr.mxu0 0.0
    %2145 = vmatpush2.msra.mxu0 0.0
    %2146 = vmatprep.subr.mxu0 0.0
    %2147 = vmatpush2.msra.mxu0 0.0
    %2148 = vmatprep.subr.mxu0 0.0
    %2149 = vmatpush2.msra.mxu0 0.0
    %2150 = vmatprep.subr.mxu0 0.0
    %2151 = vmatpush2.msra.mxu0 0.0
    %2152 = vmatprep.subr.mxu0 0.0
    %2153 = vmatpush2.msra.mxu0 0.0
    %2154 = vmatprep.subr.mxu0 0.0
    %2155 = vmatpush2.msra.mxu0 0.0
    %2156 = vmatprep.subr.mxu0 0.0
    %2157 = vmatpush2.msra.mxu0 0.0
    %2158 = vmatprep.subr.mxu0 0.0
    %2159 = vmatpush2.msra.mxu0 0.0
    %2160 = vmatprep.subr.mxu0 0.0
    %2161 = vmatpush2.msra.mxu0 0.0
    %2162 = vmatprep.mubr.f32.mxu0 0.0
    %2163 = vmatmul.mubr.f32.gmra.mxu0 %v495
    %v2164 = vpop.f32.mrf.mxu0
    %v2165 = vadd.f32 0.0, %v2164
    %v2166 = vpop.f32.mrf.mxu0
    %v2167 = vadd.f32 0.0, %v2166
    %2168 = vmatprep.mubr.f32.mxu0 0.0
    %2169 = vmatmul.mubr.f32.gmra.mxu0 %v498
    %v2170 = vpop.f32.mrf.mxu0
    %v2171 = vadd.f32 0.0, %v2170
    %v2172 = vpop.f32.mrf.mxu0
    %v2173 = vadd.f32 0.0, %v2172
    %2174 = vmatprep.mubr.f32.mxu0 0.0
    %2175 = vmatmul.mubr.f32.gmra.mxu0 %v501
    %v2176 = vpop.f32.mrf.mxu0
    %v2177 = vadd.f32 0.0, %v2176
    %v2178 = vpop.f32.mrf.mxu0
    %v2179 = vadd.f32 0.0, %v2178
    %2180 = vmatprep.mubr.f32.mxu0 0.0
    %2181 = vmatmul.mubr.f32.gmra.mxu0 %v504
    %v2182 = vpop.f32.mrf.mxu0
    %v2183 = vadd.f32 0.0, %v2182
    %v2184 = vpop.f32.mrf.mxu0
    %v2185 = vadd.f32 0.0, %v2184
    %2186 = vmatprep.mubr.f32.mxu0 0.0
    %2187 = vmatmul.mubr.f32.gmra.mxu0 %v507
    %v2188 = vpop.f32.mrf.mxu0
    %v2189 = vadd.f32 0.0, %v2188
    %v2190 = vpop.f32.mrf.mxu0
    %v2191 = vadd.f32 0.0, %v2190
    %2192 = vmatprep.mubr.f32.mxu0 0.0
    %2193 = vmatmul.mubr.f32.gmra.mxu0 %v510
    %v2194 = vpop.f32.mrf.mxu0
    %v2195 = vadd.f32 0.0, %v2194
    %v2196 = vpop.f32.mrf.mxu0
    %v2197 = vadd.f32 0.0, %v2196
    %2198 = vmatprep.mubr.f32.mxu0 0.0
    %2199 = vmatmul.mubr.f32.gmra.mxu0 %v513
    %v2200 = vpop.f32.mrf.mxu0
    %v2201 = vadd.f32 0.0, %v2200
    %v2202 = vpop.f32.mrf.mxu0
    %v2203 = vadd.f32 0.0, %v2202
    %2204 = vmatprep.mubr.f32.mxu0 0.0
    %2205 = vmatmul.mubr.f32.gmra.mxu0 %v516
    %v2206 = vpop.f32.mrf.mxu0
    %v2207 = vadd.f32 0.0, %v2206
    %v2208 = vpop.f32.mrf.mxu0
    %v2209 = vadd.f32 0.0, %v2208
    %2210 = vmatprep.mubr.f32.mxu0 0.0
    %2211 = vmatmul.mubr.f32.gmra.mxu0 %v519
    %v2212 = vpop.f32.mrf.mxu0
    %v2213 = vadd.f32 0.0, %v2212
    %v2214 = vpop.f32.mrf.mxu0
    %v2215 = vadd.f32 0.0, %v2214
    %2216 = vmatprep.mubr.f32.mxu0 0.0
    %2217 = vmatmul.mubr.f32.gmra.mxu0 %v522
    %v2218 = vpop.f32.mrf.mxu0
    %v2219 = vadd.f32 0.0, %v2218
    %v2220 = vpop.f32.mrf.mxu0
    %v2221 = vadd.f32 0.0, %v2220
    %2222 = vmatprep.mubr.f32.mxu0 0.0
    %2223 = vmatmul.mubr.f32.gmra.mxu0 %v525
    %v2224 = vpop.f32.mrf.mxu0
    %v2225 = vadd.f32 0.0, %v2224
    %v2226 = vpop.f32.mrf.mxu0
    %v2227 = vadd.f32 0.0, %v2226
    %2228 = vmatprep.mubr.f32.mxu0 0.0
    %2229 = vmatmul.mubr.f32.gmra.mxu0 %v528
    %v2230 = vpop.f32.mrf.mxu0
    %v2231 = vadd.f32 0.0, %v2230
    %v2232 = vpop.f32.mrf.mxu0
    %v2233 = vadd.f32 0.0, %v2232
    %2234 = vmatprep.mubr.f32.mxu0 0.0
    %2235 = vmatmul.mubr.f32.gmra.mxu0 %v531
    %v2236 = vpop.f32.mrf.mxu0
    %v2237 = vadd.f32 0.0, %v2236
    %v2238 = vpop.f32.mrf.mxu0
    %v2239 = vadd.f32 0.0, %v2238
    %2240 = vmatprep.mubr.f32.mxu0 0.0
    %2241 = vmatmul.mubr.f32.gmra.mxu0 %v534
    %v2242 = vpop.f32.mrf.mxu0
    %v2243 = vadd.f32 0.0, %v2242
    %v2244 = vpop.f32.mrf.mxu0
    %v2245 = vadd.f32 0.0, %v2244
    %2246 = vmatprep.mubr.f32.mxu0 0.0
    %2247 = vmatmul.mubr.f32.gmra.mxu0 %v537
    %v2248 = vpop.f32.mrf.mxu0
    %v2249 = vadd.f32 0.0, %v2248
    %v2250 = vpop.f32.mrf.mxu0
    %v2251 = vadd.f32 0.0, %v2250
    %2252 = vmatprep.mubr.f32.mxu0 0.0
    %2253 = vmatmul.mubr.f32.gmra.mxu0 %v540
    %v2254 = vpop.f32.mrf.mxu0
    %v2255 = vadd.f32 0.0, %v2254
    %v2256 = vpop.f32.mrf.mxu0
    %v2257 = vadd.f32 0.0, %v2256
    %2258 = vdwg.mxu0
    %2259 = vmatprep.subr.mxu0 0.0
    %2260 = vmatpush1.msra.mxu0 0.0
    %2261 = vmatprep.subr.mxu0 0.0
    %2262 = vmatpush1.msra.mxu0 0.0
    %2263 = vmatprep.subr.mxu0 0.0
    %2264 = vmatpush1.msra.mxu0 0.0
    %2265 = vmatprep.subr.mxu0 0.0
    %2266 = vmatpush1.msra.mxu0 0.0
    %2267 = vmatprep.subr.mxu0 0.0
    %2268 = vmatpush1.msra.mxu0 0.0
    %2269 = vmatprep.subr.mxu0 0.0
    %2270 = vmatpush1.msra.mxu0 0.0
    %2271 = vmatprep.subr.mxu0 0.0
    %2272 = vmatpush1.msra.mxu0 0.0
    %2273 = vmatprep.subr.mxu0 0.0
    %2274 = vmatpush1.msra.mxu0 0.0
    %2275 = vmatprep.subr.mxu0 0.0
    %2276 = vmatpush1.msra.mxu0 0.0
    %2277 = vmatprep.subr.mxu0 0.0
    %2278 = vmatpush1.msra.mxu0 0.0
    %2279 = vmatprep.subr.mxu0 0.0
    %2280 = vmatpush1.msra.mxu0 0.0
    %2281 = vmatprep.subr.mxu0 0.0
    %2282 = vmatpush1.msra.mxu0 0.0
    %2283 = vmatprep.subr.mxu0 0.0
    %2284 = vmatpush1.msra.mxu0 0.0
    %2285 = vmatprep.subr.mxu0 0.0
    %2286 = vmatpush1.msra.mxu0 0.0
    %2287 = vmatprep.subr.mxu0 %v2095
    %2288 = vmatpush1.msra.mxu0 %v2087
    %2289 = vmatprep.subr.mxu0 %v2093
    %2290 = vmatpush1.msra.mxu0 %v2086
    %2291 = vmatprep.subr.mxu0 0.0
    %2292 = vmatpush2.msra.mxu0 0.0
    %2293 = vmatprep.subr.mxu0 0.0
    %2294 = vmatpush2.msra.mxu0 0.0
    %2295 = vmatprep.subr.mxu0 0.0
    %2296 = vmatpush2.msra.mxu0 0.0
    %2297 = vmatprep.subr.mxu0 0.0
    %2298 = vmatpush2.msra.mxu0 0.0
    %2299 = vmatprep.subr.mxu0 0.0
    %2300 = vmatpush2.msra.mxu0 0.0
    %2301 = vmatprep.subr.mxu0 0.0
    %2302 = vmatpush2.msra.mxu0 0.0
    %2303 = vmatprep.subr.mxu0 0.0
    %2304 = vmatpush2.msra.mxu0 0.0
    %2305 = vmatprep.subr.mxu0 0.0
    %2306 = vmatpush2.msra.mxu0 0.0
    %2307 = vmatprep.subr.mxu0 0.0
    %2308 = vmatpush2.msra.mxu0 0.0
    %2309 = vmatprep.subr.mxu0 0.0
    %2310 = vmatpush2.msra.mxu0 0.0
    %2311 = vmatprep.subr.mxu0 0.0
    %2312 = vmatpush2.msra.mxu0 0.0
    %2313 = vmatprep.subr.mxu0 0.0
    %2314 = vmatpush2.msra.mxu0 0.0
    %2315 = vmatprep.subr.mxu0 0.0
    %2316 = vmatpush2.msra.mxu0 0.0
    %2317 = vmatprep.subr.mxu0 0.0
    %2318 = vmatpush2.msra.mxu0 0.0
    %2319 = vmatprep.subr.mxu0 0.0
    %2320 = vmatpush2.msra.mxu0 0.0
    %2321 = vmatprep.subr.mxu0 0.0
    %2322 = vmatpush2.msra.mxu0 0.0
    %2323 = vmatprep.mubr.f32.mxu0 0.0
    %2324 = vmatmul.mubr.f32.gmra.mxu0 %v495
    %v2325 = vpop.f32.mrf.mxu0
    %v2326 = vadd.f32 0.0, %v2325
    %v2327 = vpop.f32.mrf.mxu0
    %v2328 = vadd.f32 0.0, %v2327
    %2329 = vmatprep.mubr.f32.mxu0 0.0
    %2330 = vmatmul.mubr.f32.gmra.mxu0 %v498
    %v2331 = vpop.f32.mrf.mxu0
    %v2332 = vadd.f32 0.0, %v2331
    %v2333 = vpop.f32.mrf.mxu0
    %v2334 = vadd.f32 0.0, %v2333
    %2335 = vmatprep.mubr.f32.mxu0 0.0
    %2336 = vmatmul.mubr.f32.gmra.mxu0 %v501
    %v2337 = vpop.f32.mrf.mxu0
    %v2338 = vadd.f32 0.0, %v2337
    %v2339 = vpop.f32.mrf.mxu0
    %v2340 = vadd.f32 0.0, %v2339
    %2341 = vmatprep.mubr.f32.mxu0 0.0
    %2342 = vmatmul.mubr.f32.gmra.mxu0 %v504
    %v2343 = vpop.f32.mrf.mxu0
    %v2344 = vadd.f32 0.0, %v2343
    %v2345 = vpop.f32.mrf.mxu0
    %v2346 = vadd.f32 0.0, %v2345
    %2347 = vmatprep.mubr.f32.mxu0 0.0
    %2348 = vmatmul.mubr.f32.gmra.mxu0 %v507
    %v2349 = vpop.f32.mrf.mxu0
    %v2350 = vadd.f32 0.0, %v2349
    %v2351 = vpop.f32.mrf.mxu0
    %v2352 = vadd.f32 0.0, %v2351
    %2353 = vmatprep.mubr.f32.mxu0 0.0
    %2354 = vmatmul.mubr.f32.gmra.mxu0 %v510
    %v2355 = vpop.f32.mrf.mxu0
    %v2356 = vadd.f32 0.0, %v2355
    %v2357 = vpop.f32.mrf.mxu0
    %v2358 = vadd.f32 0.0, %v2357
    %2359 = vmatprep.mubr.f32.mxu0 0.0
    %2360 = vmatmul.mubr.f32.gmra.mxu0 %v513
    %v2361 = vpop.f32.mrf.mxu0
    %v2362 = vadd.f32 0.0, %v2361
    %v2363 = vpop.f32.mrf.mxu0
    %v2364 = vadd.f32 0.0, %v2363
    %2365 = vmatprep.mubr.f32.mxu0 0.0
    %2366 = vmatmul.mubr.f32.gmra.mxu0 %v516
    %v2367 = vpop.f32.mrf.mxu0
    %v2368 = vadd.f32 0.0, %v2367
    %v2369 = vpop.f32.mrf.mxu0
    %v2370 = vadd.f32 0.0, %v2369
    %2371 = vmatprep.mubr.f32.mxu0 0.0
    %2372 = vmatmul.mubr.f32.gmra.mxu0 %v519
    %v2373 = vpop.f32.mrf.mxu0
    %v2374 = vadd.f32 0.0, %v2373
    %v2375 = vpop.f32.mrf.mxu0
    %v2376 = vadd.f32 0.0, %v2375
    %2377 = vmatprep.mubr.f32.mxu0 0.0
    %2378 = vmatmul.mubr.f32.gmra.mxu0 %v522
    %v2379 = vpop.f32.mrf.mxu0
    %v2380 = vadd.f32 0.0, %v2379
    %v2381 = vpop.f32.mrf.mxu0
    %v2382 = vadd.f32 0.0, %v2381
    %2383 = vmatprep.mubr.f32.mxu0 0.0
    %2384 = vmatmul.mubr.f32.gmra.mxu0 %v525
    %v2385 = vpop.f32.mrf.mxu0
    %v2386 = vadd.f32 0.0, %v2385
    %v2387 = vpop.f32.mrf.mxu0
    %v2388 = vadd.f32 0.0, %v2387
    %2389 = vmatprep.mubr.f32.mxu0 0.0
    %2390 = vmatmul.mubr.f32.gmra.mxu0 %v528
    %v2391 = vpop.f32.mrf.mxu0
    %v2392 = vadd.f32 0.0, %v2391
    %v2393 = vpop.f32.mrf.mxu0
    %v2394 = vadd.f32 0.0, %v2393
    %2395 = vmatprep.mubr.f32.mxu0 0.0
    %2396 = vmatmul.mubr.f32.gmra.mxu0 %v531
    %v2397 = vpop.f32.mrf.mxu0
    %v2398 = vadd.f32 0.0, %v2397
    %v2399 = vpop.f32.mrf.mxu0
    %v2400 = vadd.f32 0.0, %v2399
    %2401 = vmatprep.mubr.f32.mxu0 0.0
    %2402 = vmatmul.mubr.f32.gmra.mxu0 %v534
    %v2403 = vpop.f32.mrf.mxu0
    %v2404 = vadd.f32 0.0, %v2403
    %v2405 = vpop.f32.mrf.mxu0
    %v2406 = vadd.f32 0.0, %v2405
    %2407 = vmatprep.mubr.f32.mxu0 0.0
    %2408 = vmatmul.mubr.f32.gmra.mxu0 %v537
    %v2409 = vpop.f32.mrf.mxu0
    %v2410 = vadd.f32 0.0, %v2409
    %v2411 = vpop.f32.mrf.mxu0
    %v2412 = vadd.f32 0.0, %v2411
    %2413 = vmatprep.mubr.f32.mxu0 0.0
    %2414 = vmatmul.mubr.f32.gmra.mxu0 %v540
    %v2415 = vpop.f32.mrf.mxu0
    %v2416 = vadd.f32 0.0, %v2415
    %v2417 = vpop.f32.mrf.mxu0
    %v2418 = vadd.f32 0.0, %v2417
    %2419 = vdwg.mxu0
    %2420 = vmatprep.subr.mxu0 0.0
    %2421 = vmatpush1.msra.mxu0 0.0
    %2422 = vmatprep.subr.mxu0 0.0
    %2423 = vmatpush1.msra.mxu0 0.0
    %2424 = vmatprep.subr.mxu0 0.0
    %2425 = vmatpush1.msra.mxu0 0.0
    %2426 = vmatprep.subr.mxu0 0.0
    %2427 = vmatpush1.msra.mxu0 0.0
    %2428 = vmatprep.subr.mxu0 0.0
    %2429 = vmatpush1.msra.mxu0 0.0
    %2430 = vmatprep.subr.mxu0 0.0
    %2431 = vmatpush1.msra.mxu0 0.0
    %2432 = vmatprep.subr.mxu0 0.0
    %2433 = vmatpush1.msra.mxu0 0.0
    %2434 = vmatprep.subr.mxu0 0.0
    %2435 = vmatpush1.msra.mxu0 0.0
    %2436 = vmatprep.subr.mxu0 0.0
    %2437 = vmatpush1.msra.mxu0 0.0
    %2438 = vmatprep.subr.mxu0 0.0
    %2439 = vmatpush1.msra.mxu0 0.0
    %2440 = vmatprep.subr.mxu0 0.0
    %2441 = vmatpush1.msra.mxu0 0.0
    %2442 = vmatprep.subr.mxu0 0.0
    %2443 = vmatpush1.msra.mxu0 0.0
    %2444 = vmatprep.subr.mxu0 0.0
    %2445 = vmatpush1.msra.mxu0 0.0
    %2446 = vmatprep.subr.mxu0 0.0
    %2447 = vmatpush1.msra.mxu0 0.0
    %2448 = vmatprep.subr.mxu0 0.0
    %2449 = vmatpush1.msra.mxu0 %v2097
    %2450 = vmatprep.subr.mxu0 0.0
    %2451 = vmatpush1.msra.mxu0 %v2096
    %2452 = vmatprep.subr.mxu0 0.0
    %2453 = vmatpush2.msra.mxu0 0.0
    %2454 = vmatprep.subr.mxu0 0.0
    %2455 = vmatpush2.msra.mxu0 0.0
    %2456 = vmatprep.subr.mxu0 0.0
    %2457 = vmatpush2.msra.mxu0 0.0
    %2458 = vmatprep.subr.mxu0 0.0
    %2459 = vmatpush2.msra.mxu0 0.0
    %2460 = vmatprep.subr.mxu0 0.0
    %2461 = vmatpush2.msra.mxu0 0.0
    %2462 = vmatprep.subr.mxu0 0.0
    %2463 = vmatpush2.msra.mxu0 0.0
    %2464 = vmatprep.subr.mxu0 0.0
    %2465 = vmatpush2.msra.mxu0 0.0
    %2466 = vmatprep.subr.mxu0 0.0
    %2467 = vmatpush2.msra.mxu0 0.0
    %2468 = vmatprep.subr.mxu0 0.0
    %2469 = vmatpush2.msra.mxu0 0.0
    %2470 = vmatprep.subr.mxu0 0.0
    %2471 = vmatpush2.msra.mxu0 0.0
    %2472 = vmatprep.subr.mxu0 0.0
    %2473 = vmatpush2.msra.mxu0 0.0
    %2474 = vmatprep.subr.mxu0 0.0
    %2475 = vmatpush2.msra.mxu0 0.0
    %2476 = vmatprep.subr.mxu0 0.0
    %2477 = vmatpush2.msra.mxu0 0.0
    %2478 = vmatprep.subr.mxu0 0.0
    %2479 = vmatpush2.msra.mxu0 0.0
    %2480 = vmatprep.subr.mxu0 0.0
    %2481 = vmatpush2.msra.mxu0 0.0
    %2482 = vmatprep.subr.mxu0 0.0
    %2483 = vmatpush2.msra.mxu0 0.0
    %2484 = vmatprep.mubr.f32.mxu0 0.0
    %2485 = vmatmul.mubr.f32.gmra.mxu0 %v495
    %v2486 = vpop.f32.mrf.mxu0
    %v2487 = vadd.f32 0.0, %v2486
    %v2488 = vpop.f32.mrf.mxu0
    %2489 = vmatprep.mubr.f32.mxu0 0.0
    %2490 = vmatmul.mubr.f32.gmra.mxu0 %v498
    %v2491 = vpop.f32.mrf.mxu0
    %v2492 = vadd.f32 0.0, %v2491
    %v2493 = vpop.f32.mrf.mxu0
    %2494 = vmatprep.mubr.f32.mxu0 0.0
    %2495 = vmatmul.mubr.f32.gmra.mxu0 %v501
    %v2496 = vpop.f32.mrf.mxu0
    %v2497 = vadd.f32 0.0, %v2496
    %v2498 = vpop.f32.mrf.mxu0
    %2499 = vmatprep.mubr.f32.mxu0 0.0
    %2500 = vmatmul.mubr.f32.gmra.mxu0 %v504
    %v2501 = vpop.f32.mrf.mxu0
    %v2502 = vadd.f32 0.0, %v2501
    %v2503 = vpop.f32.mrf.mxu0
    %2504 = vmatprep.mubr.f32.mxu0 0.0
    %2505 = vmatmul.mubr.f32.gmra.mxu0 %v507
    %v2506 = vpop.f32.mrf.mxu0
    %v2507 = vadd.f32 0.0, %v2506
    %v2508 = vpop.f32.mrf.mxu0
    %2509 = vmatprep.mubr.f32.mxu0 0.0
    %2510 = vmatmul.mubr.f32.gmra.mxu0 %v510
    %v2511 = vpop.f32.mrf.mxu0
    %v2512 = vadd.f32 0.0, %v2511
    %v2513 = vpop.f32.mrf.mxu0
    %2514 = vmatprep.mubr.f32.mxu0 0.0
    %2515 = vmatmul.mubr.f32.gmra.mxu0 %v513
    %v2516 = vpop.f32.mrf.mxu0
    %v2517 = vadd.f32 0.0, %v2516
    %v2518 = vpop.f32.mrf.mxu0
    %2519 = vmatprep.mubr.f32.mxu0 0.0
    %2520 = vmatmul.mubr.f32.gmra.mxu0 %v516
    %v2521 = vpop.f32.mrf.mxu0
    %v2522 = vadd.f32 0.0, %v2521
    %v2523 = vpop.f32.mrf.mxu0
    %2524 = vmatprep.mubr.f32.mxu0 0.0
    %2525 = vmatmul.mubr.f32.gmra.mxu0 %v519
    %v2526 = vpop.f32.mrf.mxu0
    %v2527 = vadd.f32 0.0, %v2526
    %v2528 = vpop.f32.mrf.mxu0
    %2529 = vmatprep.mubr.f32.mxu0 0.0
    %2530 = vmatmul.mubr.f32.gmra.mxu0 %v522
    %v2531 = vpop.f32.mrf.mxu0
    %v2532 = vadd.f32 0.0, %v2531
    %v2533 = vpop.f32.mrf.mxu0
    %2534 = vmatprep.mubr.f32.mxu0 0.0
    %2535 = vmatmul.mubr.f32.gmra.mxu0 %v525
    %v2536 = vpop.f32.mrf.mxu0
    %v2537 = vadd.f32 0.0, %v2536
    %v2538 = vpop.f32.mrf.mxu0
    %2539 = vmatprep.mubr.f32.mxu0 0.0
    %2540 = vmatmul.mubr.f32.gmra.mxu0 %v528
    %v2541 = vpop.f32.mrf.mxu0
    %v2542 = vadd.f32 0.0, %v2541
    %v2543 = vpop.f32.mrf.mxu0
    %2544 = vmatprep.mubr.f32.mxu0 0.0
    %2545 = vmatmul.mubr.f32.gmra.mxu0 %v531
    %v2546 = vpop.f32.mrf.mxu0
    %v2547 = vadd.f32 0.0, %v2546
    %v2548 = vpop.f32.mrf.mxu0
    %2549 = vmatprep.mubr.f32.mxu0 0.0
    %2550 = vmatmul.mubr.f32.gmra.mxu0 %v534
    %v2551 = vpop.f32.mrf.mxu0
    %v2552 = vadd.f32 0.0, %v2551
    %v2553 = vpop.f32.mrf.mxu0
    %2554 = vmatprep.mubr.f32.mxu0 0.0
    %2555 = vmatmul.mubr.f32.gmra.mxu0 %v537
    %v2556 = vpop.f32.mrf.mxu0
    %v2557 = vadd.f32 0.0, %v2556
    %v2558 = vpop.f32.mrf.mxu0
    %2559 = vmatprep.mubr.f32.mxu0 0.0
    %2560 = vmatmul.mubr.f32.gmra.mxu0 %v540
    %v2561 = vpop.f32.mrf.mxu0
    %v2562 = vadd.f32 0.0, %v2561
    %v2563 = vpop.f32.mrf.mxu0
    %2564 = vdwg.mxu0
    %v2565 = vmax.f32 %v2165, 0.0
    %v2566 = vmax.f32 %v2171, 0.0
    %v2567 = vmax.f32 %v2177, 0.0
    %v2568 = vmax.f32 %v2183, 0.0
    %v2569 = vmax.f32 %v2189, 0.0
    %v2570 = vmax.f32 %v2195, 0.0
    %v2571 = vmax.f32 %v2201, 0.0
    %v2572 = vmax.f32 %v2207, 0.0
    %v2573 = vmax.f32 %v2213, 0.0
    %v2574 = vmax.f32 %v2219, 0.0
    %v2575 = vmax.f32 %v2225, 0.0
    %v2576 = vmax.f32 %v2231, 0.0
    %v2577 = vmax.f32 %v2237, 0.0
    %v2578 = vmax.f32 %v2243, 0.0
    %v2579 = vmax.f32 %v2249, 0.0
    %v2580 = vmax.f32 %v2255, 0.0
    %v2581 = vadd.f32 %v2328, %v1028
    %v2582 = vadd.f32 %v2334, %v1033
    %v2583 = vadd.f32 %v2340, %v1038
    %v2584 = vadd.f32 %v2346, %v1043
    %v2585 = vadd.f32 %v2352, %v1048
    %v2586 = vadd.f32 %v2358, %v1053
    %v2587 = vadd.f32 %v2364, %v1058
    %v2588 = vadd.f32 %v2370, %v1063
    %v2589 = vadd.f32 %v2376, %v1068
    %v2590 = vadd.f32 %v2382, %v1073
    %v2591 = vadd.f32 %v2388, %v1078
    %v2592 = vadd.f32 %v2394, %v1083
    %v2593 = vadd.f32 %v2400, %v1088
    %v2594 = vadd.f32 %v2406, %v1093
    %v2595 = vadd.f32 %v2412, %v1098
    %v2596 = vadd.f32 %v2418, %v1103
    %v2597 = vmul.f32 %v1124, %v2487
    %v2598 = vmul.f32 %v1129, %v2492
    %v2599 = vmul.f32 %v1134, %v2497
    %v2600 = vmul.f32 %v1139, %v2502
    %v2601 = vmul.f32 %v1144, %v2507
    %v2602 = vmul.f32 %v1149, %v2512
    %v2603 = vmul.f32 %v1154, %v2517
    %v2604 = vmul.f32 %v1159, %v2522
    %v2605 = vmul.f32 %v1164, %v2527
    %v2606 = vmul.f32 %v1169, %v2532
    %v2607 = vmul.f32 %v1174, %v2537
    %v2608 = vmul.f32 %v1179, %v2542
    %v2609 = vmul.f32 %v1184, %v2547
    %v2610 = vmul.f32 %v1189, %v2552
    %v2611 = vmul.f32 %v1194, %v2557
    %v2612 = vmul.f32 %v1199, %v2562
    %v2613 = vsub.f32 %v2581, %v2597
    %v2614 = vsub.f32 %v2582, %v2598
    %v2615 = vsub.f32 %v2583, %v2599
    %v2616 = vsub.f32 %v2584, %v2600
    %v2617 = vsub.f32 %v2585, %v2601
    %v2618 = vsub.f32 %v2586, %v2602
    %v2619 = vsub.f32 %v2587, %v2603
    %v2620 = vsub.f32 %v2588, %v2604
    %v2621 = vsub.f32 %v2589, %v2605
    %v2622 = vsub.f32 %v2590, %v2606
    %v2623 = vsub.f32 %v2591, %v2607
    %v2624 = vsub.f32 %v2592, %v2608
    %v2625 = vsub.f32 %v2593, %v2609
    %v2626 = vsub.f32 %v2594, %v2610
    %v2627 = vsub.f32 %v2595, %v2611
    %v2628 = vsub.f32 %v2596, %v2612
    %v2629 = vmul.f32 %v2326, 0.5
    %v2630 = vmul.f32 %v2332, 0.5
    %v2631 = vmul.f32 %v2338, 0.5
    %v2632 = vmul.f32 %v2344, 0.5
    %v2633 = vmul.f32 %v2350, 0.5
    %v2634 = vmul.f32 %v2356, 0.5
    %v2635 = vmul.f32 %v2362, 0.5
    %v2636 = vmul.f32 %v2368, 0.5
    %v2637 = vmul.f32 %v2374, 0.5
    %v2638 = vmul.f32 %v2380, 0.5
    %v2639 = vmul.f32 %v2386, 0.5
    %v2640 = vmul.f32 %v2392, 0.5
    %v2641 = vmul.f32 %v2398, 0.5
    %v2642 = vmul.f32 %v2404, 0.5
    %v2643 = vmul.f32 %v2410, 0.5
    %v2644 = vmul.f32 %v2416, 0.5
    %v2645 = vfloor.f32 %v2629
    %v2646 = vfloor.f32 %v2630
    %v2647 = vfloor.f32 %v2631
    %v2648 = vfloor.f32 %v2632
    %v2649 = vfloor.f32 %v2633
    %v2650 = vfloor.f32 %v2634
    %v2651 = vfloor.f32 %v2635
    %v2652 = vfloor.f32 %v2636
    %v2653 = vfloor.f32 %v2637
    %v2654 = vfloor.f32 %v2638
    %v2655 = vfloor.f32 %v2639
    %v2656 = vfloor.f32 %v2640
    %v2657 = vfloor.f32 %v2641
    %v2658 = vfloor.f32 %v2642
    %v2659 = vfloor.f32 %v2643
    %v2660 = vfloor.f32 %v2644
    %v2661 = vmul.f32 %v2645, 2.0
    %v2662 = vmul.f32 %v2646, 2.0
    %v2663 = vmul.f32 %v2647, 2.0
    %v2664 = vmul.f32 %v2648, 2.0
    %v2665 = vmul.f32 %v2649, 2.0
    %v2666 = vmul.f32 %v2650, 2.0
    %v2667 = vmul.f32 %v2651, 2.0
    %v2668 = vmul.f32 %v2652, 2.0
    %v2669 = vmul.f32 %v2653, 2.0
    %v2670 = vmul.f32 %v2654, 2.0
    %v2671 = vmul.f32 %v2655, 2.0
    %v2672 = vmul.f32 %v2656, 2.0
    %v2673 = vmul.f32 %v2657, 2.0
    %v2674 = vmul.f32 %v2658, 2.0
    %v2675 = vmul.f32 %v2659, 2.0
    %v2676 = vmul.f32 %v2660, 2.0
    %v2677 = vsub.f32 %v2326, %v2661
    %v2678 = vsub.f32 %v2332, %v2662
    %v2679 = vsub.f32 %v2338, %v2663
    %v2680 = vsub.f32 %v2344, %v2664
    %v2681 = vsub.f32 %v2350, %v2665
    %v2682 = vsub.f32 %v2356, %v2666
    %v2683 = vsub.f32 %v2362, %v2667
    %v2684 = vsub.f32 %v2368, %v2668
    %v2685 = vsub.f32 %v2374, %v2669
    %v2686 = vsub.f32 %v2380, %v2670
    %v2687 = vsub.f32 %v2386, %v2671
    %v2688 = vsub.f32 %v2392, %v2672
    %v2689 = vsub.f32 %v2398, %v2673
    %v2690 = vsub.f32 %v2404, %v2674
    %v2691 = vsub.f32 %v2410, %v2675
    %v2692 = vsub.f32 %v2416, %v2676
    %v2693 = vmul.f32 %v2677, 2.0
    %v2694 = vmul.f32 %v2678, 2.0
    %v2695 = vmul.f32 %v2679, 2.0
    %v2696 = vmul.f32 %v2680, 2.0
    %v2697 = vmul.f32 %v2681, 2.0
    %v2698 = vmul.f32 %v2682, 2.0
    %v2699 = vmul.f32 %v2683, 2.0
    %v2700 = vmul.f32 %v2684, 2.0
    %v2701 = vmul.f32 %v2685, 2.0
    %v2702 = vmul.f32 %v2686, 2.0
    %v2703 = vmul.f32 %v2687, 2.0
    %v2704 = vmul.f32 %v2688, 2.0
    %v2705 = vmul.f32 %v2689, 2.0
    %v2706 = vmul.f32 %v2690, 2.0
    %v2707 = vmul.f32 %v2691, 2.0
    %v2708 = vmul.f32 %v2692, 2.0
    %v2709 = vsub.f32 1.0, %v2693
    %v2710 = vsub.f32 1.0, %v2694
    %v2711 = vsub.f32 1.0, %v2695
    %v2712 = vsub.f32 1.0, %v2696
    %v2713 = vsub.f32 1.0, %v2697
    %v2714 = vsub.f32 1.0, %v2698
    %v2715 = vsub.f32 1.0, %v2699
    %v2716 = vsub.f32 1.0, %v2700
    %v2717 = vsub.f32 1.0, %v2701
    %v2718 = vsub.f32 1.0, %v2702
    %v2719 = vsub.f32 1.0, %v2703
    %v2720 = vsub.f32 1.0, %v2704
    %v2721 = vsub.f32 1.0, %v2705
    %v2722 = vsub.f32 1.0, %v2706
    %v2723 = vsub.f32 1.0, %v2707
    %v2724 = vsub.f32 1.0, %v2708
    %v2725 = vmul.f32 %v2613, 1.442695
    %v2726 = vpow.pop %v2725
    %v2727 = vmul.f32 %v2614, 1.442695
    %v2728 = vpow.pop %v2727
    %v2729 = vmul.f32 %v2615, 1.442695
    %v2730 = vpow.pop %v2729
    %v2731 = vmul.f32 %v2616, 1.442695
    %v2732 = vpow.pop %v2731
    %v2733 = vmul.f32 %v2617, 1.442695
    %v2734 = vpow.pop %v2733
    %v2735 = vmul.f32 %v2618, 1.442695
    %v2736 = vpow.pop %v2735
    %v2737 = vmul.f32 %v2619, 1.442695
    %v2738 = vpow.pop %v2737
    %v2739 = vmul.f32 %v2620, 1.442695
    %v2740 = vpow.pop %v2739
    %v2741 = vmul.f32 %v2621, 1.442695
    %v2742 = vpow.pop %v2741
    %v2743 = vmul.f32 %v2622, 1.442695
    %v2744 = vpow.pop %v2743
    %v2745 = vmul.f32 %v2623, 1.442695
    %v2746 = vpow.pop %v2745
    %v2747 = vmul.f32 %v2624, 1.442695
    %v2748 = vpow.pop %v2747
    %v2749 = vmul.f32 %v2625, 1.442695
    %v2750 = vpow.pop %v2749
    %v2751 = vmul.f32 %v2626, 1.442695
    %v2752 = vpow.pop %v2751
    %v2753 = vmul.f32 %v2627, 1.442695
    %v2754 = vpow.pop %v2753
    %v2755 = vmul.f32 %v2628, 1.442695
    %v2756 = vpow.pop %v2755
    %v2757 = vmul.f32 %v2709, %v2726
    %v2758 = vmul.f32 %v2710, %v2728
    %v2759 = vmul.f32 %v2711, %v2730
    %v2760 = vmul.f32 %v2712, %v2732
    %v2761 = vmul.f32 %v2713, %v2734
    %v2762 = vmul.f32 %v2714, %v2736
    %v2763 = vmul.f32 %v2715, %v2738
    %v2764 = vmul.f32 %v2716, %v2740
    %v2765 = vmul.f32 %v2717, %v2742
    %v2766 = vmul.f32 %v2718, %v2744
    %v2767 = vmul.f32 %v2719, %v2746
    %v2768 = vmul.f32 %v2720, %v2748
    %v2769 = vmul.f32 %v2721, %v2750
    %v2770 = vmul.f32 %v2722, %v2752
    %v2771 = vmul.f32 %v2723, %v2754
    %v2772 = vmul.f32 %v2724, %v2756
    %vm2773 = vcmp.lt.f32.partialorder %v2167, 0.5
    %vm2774 = vcmp.lt.f32.partialorder %v2173, 0.5
    %vm2775 = vcmp.lt.f32.partialorder %v2179, 0.5
    %vm2776 = vcmp.lt.f32.partialorder %v2185, 0.5
    %vm2777 = vcmp.lt.f32.partialorder %v2191, 0.5
    %vm2778 = vcmp.lt.f32.partialorder %v2197, 0.5
    %vm2779 = vcmp.lt.f32.partialorder %v2203, 0.5
    %vm2780 = vcmp.lt.f32.partialorder %v2209, 0.5
    %vm2781 = vcmp.lt.f32.partialorder %v2215, 0.5
    %vm2782 = vcmp.lt.f32.partialorder %v2221, 0.5
    %vm2783 = vcmp.lt.f32.partialorder %v2227, 0.5
    %vm2784 = vcmp.lt.f32.partialorder %v2233, 0.5
    %vm2785 = vcmp.lt.f32.partialorder %v2239, 0.5
    %vm2786 = vcmp.lt.f32.partialorder %v2245, 0.5
    %vm2787 = vcmp.lt.f32.partialorder %v2251, 0.5
    %vm2788 = vcmp.lt.f32.partialorder %v2257, 0.5
    %v2789 = vsel %vm2773, %v2757, 0.0
    %v2790 = vsel %vm2774, %v2758, 0.0
    %v2791 = vsel %vm2775, %v2759, 0.0
    %v2792 = vsel %vm2776, %v2760, 0.0
    %v2793 = vsel %vm2777, %v2761, 0.0
    %v2794 = vsel %vm2778, %v2762, 0.0
    %v2795 = vsel %vm2779, %v2763, 0.0
    %v2796 = vsel %vm2780, %v2764, 0.0
    %v2797 = vsel %vm2781, %v2765, 0.0
    %v2798 = vsel %vm2782, %v2766, 0.0
    %v2799 = vsel %vm2783, %v2767, 0.0
    %v2800 = vsel %vm2784, %v2768, 0.0
    %v2801 = vsel %vm2785, %v2769, 0.0
    %v2802 = vsel %vm2786, %v2770, 0.0
    %v2803 = vsel %vm2787, %v2771, 0.0
    %v2804 = vsel %vm2788, %v2772, 0.0
    %v2805 = vmul.f32 %v2789, %v1412
    %v2806 = vmul.f32 %v2790, %v1417
    %v2807 = vmul.f32 %v2791, %v1422
    %v2808 = vmul.f32 %v2792, %v1427
    %v2809 = vmul.f32 %v2793, %v1432
    %v2810 = vmul.f32 %v2794, %v1437
    %v2811 = vmul.f32 %v2795, %v1442
    %v2812 = vmul.f32 %v2796, %v1447
    %v2813 = vmul.f32 %v2797, %v1452
    %v2814 = vmul.f32 %v2798, %v1457
    %v2815 = vmul.f32 %v2799, %v1462
    %v2816 = vmul.f32 %v2800, %v1467
    %v2817 = vmul.f32 %v2801, %v1472
    %v2818 = vmul.f32 %v2802, %v1477
    %v2819 = vmul.f32 %v2803, %v1482
    %v2820 = vmul.f32 %v2804, %v1487
    %vm2821 = vcmp.gt.f32.partialorder %v2167, 0.5
    %vm2822 = vcmp.gt.f32.partialorder %v2173, 0.5
    %vm2823 = vcmp.gt.f32.partialorder %v2179, 0.5
    %vm2824 = vcmp.gt.f32.partialorder %v2185, 0.5
    %vm2825 = vcmp.gt.f32.partialorder %v2191, 0.5
    %vm2826 = vcmp.gt.f32.partialorder %v2197, 0.5
    %vm2827 = vcmp.gt.f32.partialorder %v2203, 0.5
    %vm2828 = vcmp.gt.f32.partialorder %v2209, 0.5
    %vm2829 = vcmp.gt.f32.partialorder %v2215, 0.5
    %vm2830 = vcmp.gt.f32.partialorder %v2221, 0.5
    %vm2831 = vcmp.gt.f32.partialorder %v2227, 0.5
    %vm2832 = vcmp.gt.f32.partialorder %v2233, 0.5
    %vm2833 = vcmp.gt.f32.partialorder %v2239, 0.5
    %vm2834 = vcmp.gt.f32.partialorder %v2245, 0.5
    %vm2835 = vcmp.gt.f32.partialorder %v2251, 0.5
    %vm2836 = vcmp.gt.f32.partialorder %v2257, 0.5
    %vm2837 = vcmp.lt.f32.partialorder %v2167, 1.5
    %vm2838 = vcmp.lt.f32.partialorder %v2173, 1.5
    %vm2839 = vcmp.lt.f32.partialorder %v2179, 1.5
    %vm2840 = vcmp.lt.f32.partialorder %v2185, 1.5
    %vm2841 = vcmp.lt.f32.partialorder %v2191, 1.5
    %vm2842 = vcmp.lt.f32.partialorder %v2197, 1.5
    %vm2843 = vcmp.lt.f32.partialorder %v2203, 1.5
    %vm2844 = vcmp.lt.f32.partialorder %v2209, 1.5
    %vm2845 = vcmp.lt.f32.partialorder %v2215, 1.5
    %vm2846 = vcmp.lt.f32.partialorder %v2221, 1.5
    %vm2847 = vcmp.lt.f32.partialorder %v2227, 1.5
    %vm2848 = vcmp.lt.f32.partialorder %v2233, 1.5
    %vm2849 = vcmp.lt.f32.partialorder %v2239, 1.5
    %vm2850 = vcmp.lt.f32.partialorder %v2245, 1.5
    %vm2851 = vcmp.lt.f32.partialorder %v2251, 1.5
    %vm2852 = vcmp.lt.f32.partialorder %v2257, 1.5
    %vm2853 = vmand %vm2821, %vm2837
    %vm2854 = vmand %vm2822, %vm2838
    %vm2855 = vmand %vm2823, %vm2839
    %vm2856 = vmand %vm2824, %vm2840
    %vm2857 = vmand %vm2825, %vm2841
    %vm2858 = vmand %vm2826, %vm2842
    %vm2859 = vmand %vm2827, %vm2843
    %vm2860 = vmand %vm2828, %vm2844
    %vm2861 = vmand %vm2829, %vm2845
    %vm2862 = vmand %vm2830, %vm2846
    %vm2863 = vmand %vm2831, %vm2847
    %vm2864 = vmand %vm2832, %vm2848
    %vm2865 = vmand %vm2833, %vm2849
    %vm2866 = vmand %vm2834, %vm2850
    %vm2867 = vmand %vm2835, %vm2851
    %vm2868 = vmand %vm2836, %vm2852
    %v2869 = vsel %vm2853, %v2757, 0.0
    %v2870 = vsel %vm2854, %v2758, 0.0
    %v2871 = vsel %vm2855, %v2759, 0.0
    %v2872 = vsel %vm2856, %v2760, 0.0
    %v2873 = vsel %vm2857, %v2761, 0.0
    %v2874 = vsel %vm2858, %v2762, 0.0
    %v2875 = vsel %vm2859, %v2763, 0.0
    %v2876 = vsel %vm2860, %v2764, 0.0
    %v2877 = vsel %vm2861, %v2765, 0.0
    %v2878 = vsel %vm2862, %v2766, 0.0
    %v2879 = vsel %vm2863, %v2767, 0.0
    %v2880 = vsel %vm2864, %v2768, 0.0
    %v2881 = vsel %vm2865, %v2769, 0.0
    %v2882 = vsel %vm2866, %v2770, 0.0
    %v2883 = vsel %vm2867, %v2771, 0.0
    %v2884 = vsel %vm2868, %v2772, 0.0
    %2885 = vmatprep.subr.mxu0 %v2820
    %2886 = vmatpush1.msra.mxu0 %v2580
    %2887 = vmatprep.subr.mxu0 %v2819
    %2888 = vmatpush1.msra.mxu0 %v2579
    %2889 = vmatprep.subr.mxu0 %v2818
    %2890 = vmatpush1.msra.mxu0 %v2578
    %2891 = vmatprep.subr.mxu0 %v2817
    %2892 = vmatpush1.msra.mxu0 %v2577
    %2893 = vmatprep.subr.mxu0 %v2816
    %2894 = vmatpush1.msra.mxu0 %v2576
    %2895 = vmatprep.subr.mxu0 %v2815
    %2896 = vmatpush1.msra.mxu0 %v2575
    %2897 = vmatprep.subr.mxu0 %v2814
    %2898 = vmatpush1.msra.mxu0 %v2574
    %2899 = vmatprep.subr.mxu0 %v2813
    %2900 = vmatpush1.msra.mxu0 %v2573
    %2901 = vmatprep.subr.mxu0 %v2812
    %2902 = vmatpush1.msra.mxu0 %v2572
    %2903 = vmatprep.subr.mxu0 %v2811
    %2904 = vmatpush1.msra.mxu0 %v2571
    %2905 = vmatprep.subr.mxu0 %v2810
    %2906 = vmatpush1.msra.mxu0 %v2570
    %2907 = vmatprep.subr.mxu0 %v2809
    %2908 = vmatpush1.msra.mxu0 %v2569
    %2909 = vmatprep.subr.mxu0 %v2808
    %2910 = vmatpush1.msra.mxu0 %v2568
    %2911 = vmatprep.subr.mxu0 %v2807
    %2912 = vmatpush1.msra.mxu0 %v2567
    %2913 = vmatprep.subr.mxu0 %v2806
    %2914 = vmatpush1.msra.mxu0 %v2566
    %2915 = vmatprep.subr.mxu0 %v2805
    %2916 = vmatpush1.msra.mxu0 %v2565
    %2917 = vmatprep.subr.mxu0 0.0
    %2918 = vmatpush2.msra.mxu0 0.0
    %2919 = vmatprep.subr.mxu0 0.0
    %2920 = vmatpush2.msra.mxu0 0.0
    %2921 = vmatprep.subr.mxu0 0.0
    %2922 = vmatpush2.msra.mxu0 0.0
    %2923 = vmatprep.subr.mxu0 0.0
    %2924 = vmatpush2.msra.mxu0 0.0
    %2925 = vmatprep.subr.mxu0 0.0
    %2926 = vmatpush2.msra.mxu0 0.0
    %2927 = vmatprep.subr.mxu0 0.0
    %2928 = vmatpush2.msra.mxu0 0.0
    %2929 = vmatprep.subr.mxu0 0.0
    %2930 = vmatpush2.msra.mxu0 0.0
    %2931 = vmatprep.subr.mxu0 0.0
    %2932 = vmatpush2.msra.mxu0 0.0
    %2933 = vmatprep.subr.mxu0 0.0
    %2934 = vmatpush2.msra.mxu0 0.0
    %2935 = vmatprep.subr.mxu0 0.0
    %2936 = vmatpush2.msra.mxu0 0.0
    %2937 = vmatprep.subr.mxu0 0.0
    %2938 = vmatpush2.msra.mxu0 0.0
    %2939 = vmatprep.subr.mxu0 0.0
    %2940 = vmatpush2.msra.mxu0 0.0
    %2941 = vmatprep.subr.mxu0 0.0
    %2942 = vmatpush2.msra.mxu0 0.0
    %2943 = vmatprep.subr.mxu0 0.0
    %2944 = vmatpush2.msra.mxu0 0.0
    %2945 = vmatprep.subr.mxu0 0.0
    %2946 = vmatpush2.msra.mxu0 0.0
    %2947 = vmatprep.subr.mxu0 0.0
    %2948 = vmatpush2.msra.mxu0 0.0
    %2949 = vmatprep.mubr.f32.mxu0 0.0
    %2950 = vmatmul.mubr.f32.gmra.mxu0 %v143
    %v2951 = vpop.f32.mrf.mxu0
    %v2952 = vadd.f32 0.0, %v2951
    %v2953 = vpop.f32.mrf.mxu0
    %v2954 = vadd.f32 0.0, %v2953
    %2955 = vmatprep.mubr.f32.mxu0 0.0
    %2956 = vmatmul.mubr.f32.gmra.mxu0 %v144
    %v2957 = vpop.f32.mrf.mxu0
    %v2958 = vadd.f32 0.0, %v2957
    %v2959 = vpop.f32.mrf.mxu0
    %v2960 = vadd.f32 0.0, %v2959
    %2961 = vdwg.mxu0
    %2962 = vmatprep.subr.mxu0 0.0
    %2963 = vmatpush1.msra.mxu0 %v2884
    %2964 = vmatprep.subr.mxu0 0.0
    %2965 = vmatpush1.msra.mxu0 %v2883
    %2966 = vmatprep.subr.mxu0 0.0
    %2967 = vmatpush1.msra.mxu0 %v2882
    %2968 = vmatprep.subr.mxu0 0.0
    %2969 = vmatpush1.msra.mxu0 %v2881
    %2970 = vmatprep.subr.mxu0 0.0
    %2971 = vmatpush1.msra.mxu0 %v2880
    %2972 = vmatprep.subr.mxu0 0.0
    %2973 = vmatpush1.msra.mxu0 %v2879
    %2974 = vmatprep.subr.mxu0 0.0
    %2975 = vmatpush1.msra.mxu0 %v2878
    %2976 = vmatprep.subr.mxu0 0.0
    %2977 = vmatpush1.msra.mxu0 %v2877
    %2978 = vmatprep.subr.mxu0 0.0
    %2979 = vmatpush1.msra.mxu0 %v2876
    %2980 = vmatprep.subr.mxu0 0.0
    %2981 = vmatpush1.msra.mxu0 %v2875
    %2982 = vmatprep.subr.mxu0 0.0
    %2983 = vmatpush1.msra.mxu0 %v2874
    %2984 = vmatprep.subr.mxu0 0.0
    %2985 = vmatpush1.msra.mxu0 %v2873
    %2986 = vmatprep.subr.mxu0 0.0
    %2987 = vmatpush1.msra.mxu0 %v2872
    %2988 = vmatprep.subr.mxu0 0.0
    %2989 = vmatpush1.msra.mxu0 %v2871
    %2990 = vmatprep.subr.mxu0 0.0
    %2991 = vmatpush1.msra.mxu0 %v2870
    %2992 = vmatprep.subr.mxu0 0.0
    %2993 = vmatpush1.msra.mxu0 %v2869
    %2994 = vmatprep.subr.mxu0 0.0
    %2995 = vmatpush2.msra.mxu0 0.0
    %2996 = vmatprep.subr.mxu0 0.0
    %2997 = vmatpush2.msra.mxu0 0.0
    %2998 = vmatprep.subr.mxu0 0.0
    %2999 = vmatpush2.msra.mxu0 0.0
    %3000 = vmatprep.subr.mxu0 0.0
    %3001 = vmatpush2.msra.mxu0 0.0
    %3002 = vmatprep.subr.mxu0 0.0
    %3003 = vmatpush2.msra.mxu0 0.0
    %3004 = vmatprep.subr.mxu0 0.0
    %3005 = vmatpush2.msra.mxu0 0.0
    %3006 = vmatprep.subr.mxu0 0.0
    %3007 = vmatpush2.msra.mxu0 0.0
    %3008 = vmatprep.subr.mxu0 0.0
    %3009 = vmatpush2.msra.mxu0 0.0
    %3010 = vmatprep.subr.mxu0 0.0
    %3011 = vmatpush2.msra.mxu0 0.0
    %3012 = vmatprep.subr.mxu0 0.0
    %3013 = vmatpush2.msra.mxu0 0.0
    %3014 = vmatprep.subr.mxu0 0.0
    %3015 = vmatpush2.msra.mxu0 0.0
    %3016 = vmatprep.subr.mxu0 0.0
    %3017 = vmatpush2.msra.mxu0 0.0
    %3018 = vmatprep.subr.mxu0 0.0
    %3019 = vmatpush2.msra.mxu0 0.0
    %3020 = vmatprep.subr.mxu0 0.0
    %3021 = vmatpush2.msra.mxu0 0.0
    %3022 = vmatprep.subr.mxu0 0.0
    %3023 = vmatpush2.msra.mxu0 0.0
    %3024 = vmatprep.subr.mxu0 0.0
    %3025 = vmatpush2.msra.mxu0 0.0
    %3026 = vmatprep.mubr.f32.mxu0 0.0
    %3027 = vmatmul.mubr.f32.gmra.mxu0 %v161
    %v3028 = vpop.f32.mrf.mxu0
    %v3029 = vadd.f32 0.0, %v3028
    %v3030 = vpop.f32.mrf.mxu0
    %3031 = vmatprep.mubr.f32.mxu0 0.0
    %3032 = vmatmul.mubr.f32.gmra.mxu0 %v162
    %v3033 = vpop.f32.mrf.mxu0
    %v3034 = vadd.f32 0.0, %v3033
    %v3035 = vpop.f32.mrf.mxu0
    %3036 = vdwg.mxu0
    %v3037 = vsel %vm2076, 1.0, %v1983
    %v3038 = vsel %vm2077, 1.0, %v1989
    %v3039 = vrcp.pop %v3037
    %v3040 = vrcp.pop %v3038
    %v3041 = vmul.f32 %v2954, %v3039
    %v3042 = vmul.f32 %v2960, %v3040
    %v3043 = vsel %vm2076, %v3029, %v3041
    %v3044 = vsel %vm2077, %v3034, %v3042
    %3045 = vmatprep.subr.mxu0 0.0
    %3046 = vmatpush1.msra.mxu0 %v1903
    %3047 = vmatprep.subr.mxu0 0.0
    %3048 = vmatpush1.msra.mxu0 %v1902
    %3049 = vmatprep.subr.mxu0 0.0
    %3050 = vmatpush1.msra.mxu0 %v1901
    %3051 = vmatprep.subr.mxu0 0.0
    %3052 = vmatpush1.msra.mxu0 %v1900
    %3053 = vmatprep.subr.mxu0 0.0
    %3054 = vmatpush1.msra.mxu0 %v1899
    %3055 = vmatprep.subr.mxu0 0.0
    %3056 = vmatpush1.msra.mxu0 %v1898
    %3057 = vmatprep.subr.mxu0 0.0
    %3058 = vmatpush1.msra.mxu0 %v1897
    %3059 = vmatprep.subr.mxu0 0.0
    %3060 = vmatpush1.msra.mxu0 %v1896
    %3061 = vmatprep.subr.mxu0 0.0
    %3062 = vmatpush1.msra.mxu0 %v1895
    %3063 = vmatprep.subr.mxu0 0.0
    %3064 = vmatpush1.msra.mxu0 %v1894
    %3065 = vmatprep.subr.mxu0 0.0
    %3066 = vmatpush1.msra.mxu0 %v1893
    %3067 = vmatprep.subr.mxu0 0.0
    %3068 = vmatpush1.msra.mxu0 %v1892
    %3069 = vmatprep.subr.mxu0 0.0
    %3070 = vmatpush1.msra.mxu0 %v1891
    %3071 = vmatprep.subr.mxu0 0.0
    %3072 = vmatpush1.msra.mxu0 %v1890
    %3073 = vmatprep.subr.mxu0 0.0
    %3074 = vmatpush1.msra.mxu0 %v1889
    %3075 = vmatprep.subr.mxu0 0.0
    %3076 = vmatpush1.msra.mxu0 %v1888
    %3077 = vmatprep.subr.mxu0 0.0
    %3078 = vmatpush2.msra.mxu0 0.0
    %3079 = vmatprep.subr.mxu0 0.0
    %3080 = vmatpush2.msra.mxu0 0.0
    %3081 = vmatprep.subr.mxu0 0.0
    %3082 = vmatpush2.msra.mxu0 0.0
    %3083 = vmatprep.subr.mxu0 0.0
    %3084 = vmatpush2.msra.mxu0 0.0
    %3085 = vmatprep.subr.mxu0 0.0
    %3086 = vmatpush2.msra.mxu0 0.0
    %3087 = vmatprep.subr.mxu0 0.0
    %3088 = vmatpush2.msra.mxu0 0.0
    %3089 = vmatprep.subr.mxu0 0.0
    %3090 = vmatpush2.msra.mxu0 0.0
    %3091 = vmatprep.subr.mxu0 0.0
    %3092 = vmatpush2.msra.mxu0 0.0
    %3093 = vmatprep.subr.mxu0 0.0
    %3094 = vmatpush2.msra.mxu0 0.0
    %3095 = vmatprep.subr.mxu0 0.0
    %3096 = vmatpush2.msra.mxu0 0.0
    %3097 = vmatprep.subr.mxu0 0.0
    %3098 = vmatpush2.msra.mxu0 0.0
    %3099 = vmatprep.subr.mxu0 0.0
    %3100 = vmatpush2.msra.mxu0 0.0
    %3101 = vmatprep.subr.mxu0 0.0
    %3102 = vmatpush2.msra.mxu0 0.0
    %3103 = vmatprep.subr.mxu0 0.0
    %3104 = vmatpush2.msra.mxu0 0.0
    %3105 = vmatprep.subr.mxu0 0.0
    %3106 = vmatpush2.msra.mxu0 0.0
    %3107 = vmatprep.subr.mxu0 0.0
    %3108 = vmatpush2.msra.mxu0 0.0
    %3109 = vmatprep.mubr.f32.mxu0 0.0
    %3110 = vmatmul.mubr.f32.gmra.mxu0 %v3043
    %v3111 = vpop.f32.mrf.mxu0
    %v3112 = vadd.f32 %v2952, %v3111
    %v3113 = vpop.f32.mrf.mxu0
    %3114 = vmatprep.mubr.f32.mxu0 0.0
    %3115 = vmatmul.mubr.f32.gmra.mxu0 %v3044
    %v3116 = vpop.f32.mrf.mxu0
    %v3117 = vadd.f32 %v2958, %v3116
    %v3118 = vpop.f32.mrf.mxu0
    %3119 = vdwg.mxu0
    %v3120 = vmul.f32 %v1807, %v3112
    %v3121 = vmul.f32 %v1812, %v3117
    %v3123 = vlaneseq
    %v3124 = vshrl.u32 %v3123, 7
    %v3125 = vsub.s32 0, %v3124
    %v3126 = vrot.slane %v1904, %v3125
    %v3128 = vmul.f32 %v1819, %v3126
    %v3129 = vmul.f32 %v1824, %v3126
    %v3130 = vadd.f32 %v3120, %v3128
    %v3131 = vadd.f32 %v3121, %v3129
    %v3132 = vmax.f32 %v3130, 0.0
    %v3133 = vmax.f32 %v3131, 0.0
    %v3134 = vld [vmem:[#allocation10] sm:$0xff]
    %v3135 = vld [vmem:[#allocation10 + $0x8] sm:$0xff]
    %v3136 = vld [vmem:[#allocation10 + $0x10] sm:$0xff]
    %v3137 = vld [vmem:[#allocation10 + $0x18] sm:$0xff]
    %v3138 = vld [vmem:[#allocation10 + $0x20] sm:$0xff]
    %v3139 = vld [vmem:[#allocation10 + $0x28] sm:$0xff]
    %v3140 = vld [vmem:[#allocation10 + $0x30] sm:$0xff]
    %v3141 = vld [vmem:[#allocation10 + $0x38] sm:$0xff]
    %v3142 = vld [vmem:[#allocation10 + $0x40] sm:$0xff]
    %v3143 = vld [vmem:[#allocation10 + $0x48] sm:$0xff]
    %v3144 = vld [vmem:[#allocation10 + $0x50] sm:$0xff]
    %v3145 = vld [vmem:[#allocation10 + $0x58] sm:$0xff]
    %v3146 = vld [vmem:[#allocation10 + $0x60] sm:$0xff]
    %v3147 = vld [vmem:[#allocation10 + $0x68] sm:$0xff]
    %v3148 = vld [vmem:[#allocation10 + $0x70] sm:$0xff]
    %v3149 = vld [vmem:[#allocation10 + $0x78] sm:$0xff]
    %v3150 = vld [vmem:[%s22] sm:$0x1]
    %v3152 = vlaneseq
    %v3153 = vshrl.u32 %v3152, 7
    %v3154 = vsub.s32 0, %v3153
    %v3155 = vrot.slane %v3150, %v3154
    %3157 = vmatprep.subr.mxu0 0.0
    %3158 = vmatpush1.msra.mxu0 %v3149
    %3159 = vmatprep.subr.mxu0 0.0
    %3160 = vmatpush1.msra.mxu0 %v3148
    %3161 = vmatprep.subr.mxu0 0.0
    %3162 = vmatpush1.msra.mxu0 %v3147
    %3163 = vmatprep.subr.mxu0 0.0
    %3164 = vmatpush1.msra.mxu0 %v3146
    %3165 = vmatprep.subr.mxu0 0.0
    %3166 = vmatpush1.msra.mxu0 %v3145
    %3167 = vmatprep.subr.mxu0 0.0
    %3168 = vmatpush1.msra.mxu0 %v3144
    %3169 = vmatprep.subr.mxu0 0.0
    %3170 = vmatpush1.msra.mxu0 %v3143
    %3171 = vmatprep.subr.mxu0 0.0
    %3172 = vmatpush1.msra.mxu0 %v3142
    %3173 = vmatprep.subr.mxu0 0.0
    %3174 = vmatpush1.msra.mxu0 %v3141
    %3175 = vmatprep.subr.mxu0 0.0
    %3176 = vmatpush1.msra.mxu0 %v3140
    %3177 = vmatprep.subr.mxu0 0.0
    %3178 = vmatpush1.msra.mxu0 %v3139
    %3179 = vmatprep.subr.mxu0 0.0
    %3180 = vmatpush1.msra.mxu0 %v3138
    %3181 = vmatprep.subr.mxu0 0.0
    %3182 = vmatpush1.msra.mxu0 %v3137
    %3183 = vmatprep.subr.mxu0 0.0
    %3184 = vmatpush1.msra.mxu0 %v3136
    %3185 = vmatprep.subr.mxu0 0.0
    %3186 = vmatpush1.msra.mxu0 %v3135
    %3187 = vmatprep.subr.mxu0 0.0
    %3188 = vmatpush1.msra.mxu0 %v3134
    %3189 = vmatprep.subr.mxu0 0.0
    %3190 = vmatpush2.msra.mxu0 0.0
    %3191 = vmatprep.subr.mxu0 0.0
    %3192 = vmatpush2.msra.mxu0 0.0
    %3193 = vmatprep.subr.mxu0 0.0
    %3194 = vmatpush2.msra.mxu0 0.0
    %3195 = vmatprep.subr.mxu0 0.0
    %3196 = vmatpush2.msra.mxu0 0.0
    %3197 = vmatprep.subr.mxu0 0.0
    %3198 = vmatpush2.msra.mxu0 0.0
    %3199 = vmatprep.subr.mxu0 0.0
    %3200 = vmatpush2.msra.mxu0 0.0
    %3201 = vmatprep.subr.mxu0 0.0
    %3202 = vmatpush2.msra.mxu0 0.0
    %3203 = vmatprep.subr.mxu0 0.0
    %3204 = vmatpush2.msra.mxu0 0.0
    %3205 = vmatprep.subr.mxu0 0.0
    %3206 = vmatpush2.msra.mxu0 0.0
    %3207 = vmatprep.subr.mxu0 0.0
    %3208 = vmatpush2.msra.mxu0 0.0
    %3209 = vmatprep.subr.mxu0 0.0
    %3210 = vmatpush2.msra.mxu0 0.0
    %3211 = vmatprep.subr.mxu0 0.0
    %3212 = vmatpush2.msra.mxu0 0.0
    %3213 = vmatprep.subr.mxu0 0.0
    %3214 = vmatpush2.msra.mxu0 0.0
    %3215 = vmatprep.subr.mxu0 0.0
    %3216 = vmatpush2.msra.mxu0 0.0
    %3217 = vmatprep.subr.mxu0 0.0
    %3218 = vmatpush2.msra.mxu0 0.0
    %3219 = vmatprep.subr.mxu0 0.0
    %3220 = vmatpush2.msra.mxu0 0.0
    %3221 = vmatprep.mubr.f32.mxu0 0.0
    %3222 = vmatmul.mubr.f32.gmra.mxu0 %v3132
    %v3223 = vpop.f32.mrf.mxu0
    %v3224 = vadd.f32 %v3155, %v3223
    %v3225 = vpop.f32.mrf.mxu0
    %3226 = vmatprep.mubr.f32.mxu0 0.0
    %3227 = vmatmul.mubr.f32.gmra.mxu0 %v3133
    %v3228 = vpop.f32.mrf.mxu0
    %v3229 = vadd.f32 %v3155, %v3228
    %v3230 = vpop.f32.mrf.mxu0
    %3231 = vdwg.mxu0
    %3232 = vst [vmem:[#allocation11] sm:$0xff] %v3224
    %3233 = vst [vmem:[#allocation11 + $0x8] sm:$0xff] %v3229
    // Predicated region
    $region114: #{thnn_ab_forward.1} parent=1 // pred_check
      _
    $region115: #{thnn_ab_forward.1} parent=1 // pred_check_branch
      %3235 = sbr.rel (0) target = $region117
    $region116: #{thnn_ab_forward.1} parent=1 // pred_region
      %s3237 = ssub.s32 256, 256
      %3238 = vsyncadd [#allocation4], %s3237
      %s3239 = sshll.u32 [#allocation11], 4
      %s3240 = int_to_ptr.vmem [resolvable:$true] %s3239
      %3245 = dma.vmem_to_hbm [thread:$0]  %s3240, 256, %s23, [#allocation4], 128, 128, 8
    $region117: #{thnn_ab_forward.1} parent=1 // pred_fallthru
      _
    // Predicated region
    $region118: #{thnn_ab_forward.1} parent=1 // pred_check
      _
    $region119: #{thnn_ab_forward.1} parent=1 // pred_check_branch
      %3247 = sbr.rel (0) target = $region121
    $region120: #{thnn_ab_forward.1} parent=1 // pred_region
      %3248 = dma.done [#allocation4], 256
    $region121: #{thnn_ab_forward.1} parent=1 // pred_fallthru
      _
    %3249 = vsyncpa [#allocation3], 1
    %3250 = vsyncpa [#allocation6], 1
    %3251 = vsyncpa [#allocation9], 1
    %3252 = vsyncpa [#allocation4], 1

</llo_original>
